<compile_context>
chip_gen: v7x
topology: tpu7x:2x2x1
jax: 0.10.0
libtpu: 0.0.40
codegen_flags: <defaults>
</compile_context>

<pallas_src>
import functools

import jax
import jax.numpy as jnp
from jax.experimental import pallas as pl
from jax.experimental.pallas import tpu as pltpu

EPS = 1e-5


# ----------------------- TPU-generation-aware sizing -------------------------

def _detect_tpu():
    """Returns (VMEM bytes per core, #TensorCores seen by 'parallel' grid axes)."""
    vmem, cores = 64 * 1024 * 1024, 1            # safe defaults (v7x-sized VMEM)
    try:
        info = pltpu.get_tpu_info()
        vmem = int(getattr(info, "vmem_capacity_bytes", vmem))
        for name in ("num_tensorcores", "tensorcore_count", "num_cores", "core_count"):
            val = getattr(info, name, None)
            if val:
                cores = int(val)
                break
    except Exception:
        pass
    if vmem <= 64 * 1024 * 1024:
        cores = max(cores, 2)                    # v7x: 64 MiB VMEM, 2 TCs / chip
    return vmem, cores


VMEM_BYTES, NUM_CORES = _detect_tpu()
VMEM_LIMIT = (VMEM_BYTES * 3) // 4               # 96 MiB on 128-MiB parts, 48 MiB on v7x
VMEM_BUDGET = (VMEM_BYTES * 5) // 8              # working-set budget incl. temporaries


def _round_up(x, m):
    return pl.cdiv(x, m) * m


def _choose_tm(m, k_total, cout, out_bytes):
    """Largest lane-aligned M tile whose double-buffered working set fits VMEM."""
    def step_bytes(t):
        return (2 * k_total * t * 2              # double-buffered bf16 patch blocks
                + 2 * cout * t * out_bytes       # double-buffered output block
                + 3 * cout * t * 4               # in-kernel f32 acc / y*y temporaries
                + 2 * cout * max(k_total, 1) * 2 # weights
                + 4 * cout * 128 * 4             # stats blocks
                + (1 << 16))
    tm = 4096
    while tm > 128 and step_bytes(tm) > VMEM_BUDGET:
        tm //= 2
    tm = min(tm, _round_up(m, 128))              # don't pad small problems
    if NUM_CORES > 1:
        # only multi-TC chips benefit from forcing >= 2 grid steps
        tm = min(tm, max(128, 128 * pl.cdiv(m, 256)))
    return tm


def _choose_ts(s, cout):
    """Largest power-of-two multiple of 128 dividing s that fits the budget."""
    def step_bytes(t):
        return 2 * cout * t * 2 + 2 * cout * t * 4 + (1 << 15)
    best, t = 128, 256
    while t <= s and s % t == 0 and step_bytes(t) <= VMEM_BUDGET:
        best, t = t, t * 2
    return best


# ------------------------------ Pallas kernels --------------------------------

def _mm_stats_kernel(*refs, ngroups):
    # inputs: ngroups patch blocks (Kg, tm) bf16, ngroups weights (Cout, Kg) bf16
    # outputs: y (Cout, tm), partial BN sums / sums-of-squares in lane 0 of a
    # (Cout, 128) block.  No bias (BN cancels it) and zero patch padding gives
    # zero contribution, so no tail masking is needed.
    xs, ws = refs[:ngroups], refs[ngroups:2 * ngroups]
    y_ref, ps_ref, sq_ref = refs[2 * ngroups:]
    acc = jnp.dot(ws[0][...], xs[0][...], preferred_element_type=jnp.float32)
    for g in range(1, ngroups):
        acc = acc + jnp.dot(ws[g][...], xs[g][...],
                            preferred_element_type=jnp.float32)
    y_ref[...] = acc.astype(y_ref.dtype)
    lane0 = jax.lax.broadcasted_iota(jnp.int32, ps_ref.shape, 1) == 0
    ps_ref[...] = jnp.where(lane0, jnp.sum(acc, axis=1, keepdims=True), 0.0)
    sq_ref[...] = jnp.where(lane0, jnp.sum(acc * acc, axis=1, keepdims=True), 0.0)


def _mm_bias_kernel(x_ref, w_ref, b_ref, y_ref):
    # x: (1, K, tm) bf16, w: (1, Cout, K) bf16, b: (Cout, 1) f32 -> y: (1, Cout, tm)
    acc = jnp.dot(w_ref[0], x_ref[0], preferred_element_type=jnp.float32) + b_ref[...]
    y_ref[0] = acc.astype(y_ref.dtype)


def _bn_relu_kernel(x_ref, s_ref, t_ref, o_ref):
    # x: (Cout, tm) bf16, s/t: (Cout, 1) f32 -> lane-dense elementwise pass
    o_ref[...] = jnp.maximum(
        x_ref[...].astype(jnp.float32) * s_ref[...] + t_ref[...], 0.0
    ).astype(o_ref.dtype)


def _bn_relu_t_kernel(x_ref, s_ref, t_ref, o_ref):
    # fused final epilogue: read (Cout, ts) of y2, write (1, Cout, ts) of (N, C, S)
    o_ref[0] = jnp.maximum(
        x_ref[...].astype(jnp.float32) * s_ref[...] + t_ref[...], 0.0)


# ------------------------------ Pallas wrappers --------------------------------

def conv_matmul_stats(patch_groups, w_groups, out_dtype=jnp.bfloat16):
    """y(Cout, M) = sum_g Wg(Cout, Kg) @ Pg(Kg, M), fused BatchNorm statistics.

    Lane-dense bf16 output + per-channel f32 sum / sum-of-squares (finalised by
    a tiny host reduction over blocks)."""
    ngroups = len(patch_groups)
    m = patch_groups[0].shape[1]
    ks = [p.shape[0] for p in patch_groups]
    cout = w_groups[0].shape[0]
    out_bytes = jnp.dtype(out_dtype).itemsize
    tm = _choose_tm(m, sum(ks), cout, out_bytes)
    m_pad = _round_up(m, tm)
    nblk = m_pad // tm

    xs = [p.astype(jnp.bfloat16) for p in patch_groups]
    if m_pad != m:
        xs = [jnp.pad(x, ((0, 0), (0, m_pad - m))) for x in xs]
    ws = [w.astype(jnp.bfloat16) for w in w_groups]

    in_specs = ([pl.BlockSpec((kg, tm), lambda i: (0, i)) for kg in ks]
                + [pl.BlockSpec((cout, kg), lambda i: (0, 0)) for kg in ks])
    y, ps, sq = pl.pallas_call(
        functools.partial(_mm_stats_kernel, ngroups=ngroups),
        out_shape=(jax.ShapeDtypeStruct((cout, m_pad), out_dtype),
                   jax.ShapeDtypeStruct((cout, nblk * 128), jnp.float32),
                   jax.ShapeDtypeStruct((cout, nblk * 128), jnp.float32)),
        grid=(nblk,),
        in_specs=in_specs,
        out_specs=(pl.BlockSpec((cout, tm), lambda i: (0, i)),
                   pl.BlockSpec((cout, 128), lambda i: (0, i)),
                   pl.BlockSpec((cout, 128), lambda i: (0, i))),
        compiler_params=pltpu.CompilerParams(
            dimension_semantics=("parallel",), vmem_limit_bytes=VMEM_LIMIT),
    )(*xs, *ws)
    return y[:, :m], jnp.sum(ps, axis=1), jnp.sum(sq, axis=1)


def bn_relu(y, scale, shift, out_dtype):
    """Lane-dense per-channel affine + ReLU on a (Cout, M) activation."""
    cout, m = y.shape
    tm = _choose_tm(m, 0, cout, jnp.dtype(out_dtype).itemsize)
    m_pad = _round_up(m, tm)
    if m_pad != m:
        y = jnp.pad(y, ((0, 0), (0, m_pad - m)))
    nblk = m_pad // tm
    out = pl.pallas_call(
        _bn_relu_kernel,
        out_shape=jax.ShapeDtypeStruct((cout, m_pad), out_dtype),
        grid=(nblk,),
        in_specs=[pl.BlockSpec((cout, tm), lambda i: (0, i)),
                  pl.BlockSpec((cout, 1), lambda i: (0, 0)),
                  pl.BlockSpec((cout, 1), lambda i: (0, 0))],
        out_specs=pl.BlockSpec((cout, tm), lambda i: (0, i)),
        compiler_params=pltpu.CompilerParams(
            dimension_semantics=("parallel",), vmem_limit_bytes=VMEM_LIMIT),
    )(y, scale.reshape(cout, 1).astype(jnp.float32),
      shift.reshape(cout, 1).astype(jnp.float32))
    return out[:, :m]


def bn_relu_to_ncs(y, scale, shift, n, s):
    """Final BN+ReLU with the NCDHW transpose fused into the epilogue.

    y: (Cout, n*s) bf16 -> (n, Cout, s) f32; both the read and the write stay
    lane-dense (ts is a multiple of 128 dividing s)."""
    cout = y.shape[0]
    ts = _choose_ts(s, cout)
    spb = s // ts
    return pl.pallas_call(
        _bn_relu_t_kernel,
        out_shape=jax.ShapeDtypeStruct((n, cout, s), jnp.float32),
        grid=(n, spb),
        in_specs=[pl.BlockSpec((cout, ts), lambda b, j: (0, b * spb + j)),
                  pl.BlockSpec((cout, 1), lambda b, j: (0, 0)),
                  pl.BlockSpec((cout, 1), lambda b, j: (0, 0))],
        out_specs=pl.BlockSpec((1, cout, ts), lambda b, j: (b, 0, j)),
        compiler_params=pltpu.CompilerParams(
            dimension_semantics=("parallel", "parallel"),
            vmem_limit_bytes=VMEM_LIMIT),
    )(y, scale.reshape(cout, 1).astype(jnp.float32),
      shift.reshape(cout, 1).astype(jnp.float32))


# ------------------------------- host-side glue --------------------------------

def _patches_dh(x_cf, kd, kh, pad_d, pad_h):
    """Channels-first im2col over (D, H); the W axis has a size-1 kernel.

    x_cf: (C, N, D, H, W) -> (kd*kh*C, N*Do*Ho*W), row index = tap*C + c.
    Built in bf16 so the dominant patch HBM stream is 2 bytes/elem.
    """
    # TODO(synk): move this k*k-tap gather into the conv kernel (haloed
    # BlockSpec reads + shifted in-VMEM dots) to drop the patch HBM stream.
    c, n, d, h, w = x_cf.shape
    xp = jnp.pad(x_cf, ((0, 0), (0, 0), (pad_d[0], pad_d[1]),
                        (pad_h[0], pad_h[1]), (0, 0)))
    do = d + pad_d[0] + pad_d[1] - kd + 1
    ho = h + pad_h[0] + pad_h[1] - kh + 1
    taps = [xp[:, :, a:a + do, b:b + ho, :]
            for a in range(kd) for b in range(kh)]
    p = jnp.stack(taps, axis=0)                      # (kd*kh, C, N, Do, Ho, W)
    return p.reshape(kd * kh * c, n * do * ho * w), (n, do, ho, w)


def _w2d(w_oikk):
    # (Cout, Cin, kd, kh) -> (Cout, kd*kh*Cin), column = (a*kh + b)*Cin + ci
    cout = w_oikk.shape[0]
    return jnp.transpose(w_oikk, (0, 2, 3, 1)).reshape(cout, -1)


def _bn_scale_shift(s, sq, count, gamma, beta):
    mean = s / count
    var = jnp.maximum(sq / count - mean * mean, 0.0)   # biased var, clamped >= 0
    scale = gamma * jax.lax.rsqrt(var + EPS)
    shift = beta - mean * scale
    return scale, shift


_KTAP = ([3, 1], [2, 0])     # sub-kernel tap indices for output parity 0 / 1
_PADP = ((1, 0), (0, 1))     # matching (lo, hi) zero padding of the input


def conv_transpose_up(x_cf, w_t, bias):
    """ConvTranspose3d((4,4,1), stride (2,2,1), pad (1,1,0)) as ONE pallas_call
    over a 4-phase sub-pixel decomposition (phase = leading grid axis): each
    output parity phase is a plain 2x2 conv of the un-dilated input against a
    2x2 sub-kernel -> 4x fewer MACs and no mostly-zero dilated tensor."""
    cin, n, d, h, w = x_cf.shape
    cout = w_t.shape[1]
    patches, w2ds = [], []
    for rd in range(2):
        for rh in range(2):
            kd_idx = jnp.array(_KTAP[rd])
            kh_idx = jnp.array(_KTAP[rh])
            sub = w_t[:, :, kd_idx, :][:, :, :, kh_idx]          # (Cin, Cout, 2, 2)
            w2ds.append(_w2d(jnp.transpose(sub, (1, 0, 2, 3))))  # (Cout, 4*Cin)
            ptch, _ = _patches_dh(x_cf, 2, 2, _PADP[rd], _PADP[rh])
            patches.append(ptch)
    m = n * d * h * w
    k = 4 * cin
    xs = jnp.stack(patches).astype(jnp.bfloat16)                 # (4, K, M)
    ws = jnp.stack(w2ds).astype(jnp.bfloat16)                    # (4, Cout, K)
    b = bias.reshape(cout, 1).astype(jnp.float32)

    tm = _choose_tm(m, k, cout, 2)
    m_pad = _round_up(m, tm)
    if m_pad != m:
        xs = jnp.pad(xs, ((0, 0), (0, 0), (0, m_pad - m)))
    nblk = m_pad // tm

    y = pl.pallas_call(
        _mm_bias_kernel,
        out_shape=jax.ShapeDtypeStruct((4, cout, m_pad), jnp.bfloat16),
        grid=(4, nblk),
        in_specs=[pl.BlockSpec((1, k, tm), lambda p, i: (p, 0, i)),
                  pl.BlockSpec((1, cout, k), lambda p, i: (p, 0, 0)),
                  pl.BlockSpec((cout, 1), lambda p, i: (0, 0))],
        out_specs=pl.BlockSpec((1, cout, tm), lambda p, i: (p, 0, i)),
        compiler_params=pltpu.CompilerParams(
            dimension_semantics=("parallel", "parallel"),
            vmem_limit_bytes=VMEM_LIMIT),
    )(xs, ws, b)

    y = y[:, :, :m].reshape(2, 2, cout, n, d, h, w)
    out = jnp.transpose(y, (2, 3, 4, 0, 5, 1, 6))                # (Co,N,D,rd,H,rh,W)
    return out.reshape(cout, n, 2 * d, 2 * h, w)                 # phase interleave


# --------------------------------- UnetUp3 -------------------------------------

def unet_up3_forward(inputs1, inputs2, params):
    bf = jnp.bfloat16
    # channels-first bf16 working layout (MXU operands are bf16 anyway, so
    # keeping activations/patches in bf16 halves every HBM stream on the path)
    x2_cf = jnp.transpose(inputs2.astype(bf), (1, 0, 2, 3, 4))    # (Cin,N,D,H,W)

    # self.up(inputs2)
    outputs2_cf = conv_transpose_up(x2_cf, params["w_up"], params["b_up"])

    # offset / F.pad exactly as the PyTorch code: pad-list order
    # (W_l, W_r), (H_l, H_r), (D_l, D_r) = (o2, o2), (0, o2), (o2, 0)
    offset = outputs2_cf.shape[2] - inputs1.shape[2]
    o2 = offset // 2
    outputs1 = jnp.pad(inputs1.astype(bf),
                       ((0, 0), (0, 0), (o2, 0), (0, o2), (o2, o2)))
    outputs1_cf = jnp.transpose(outputs1, (1, 0, 2, 3, 4))

    # conv1 over torch.cat([outputs1, outputs2], 1): the concat is never
    # materialised -- the kernel sums dot(w1,p1) + dot(w2,p2) over two groups.
    # conv1/conv2 biases are omitted: training-mode BN's mean subtraction
    # cancels a per-channel conv bias exactly.
    cs = outputs1_cf.shape[0]
    p1, shp = _patches_dh(outputs1_cf, 3, 3, (1, 1), (1, 1))
    p2, _ = _patches_dh(outputs2_cf, 3, 3, (1, 1), (1, 1))
    w1 = _w2d(params["w_c1"][:, :cs])
    w2 = _w2d(params["w_c1"][:, cs:])
    y1, s1, q1 = conv_matmul_stats([p1, p2], [w1, w2])
    n, do, ho, w = shp
    m = n * do * ho * w
    cout = y1.shape[0]
    sc1, sh1 = _bn_scale_shift(s1, q1, float(m), params["g1"], params["be1"])

    # BN+ReLU between conv1 and conv2: lane-dense Pallas pass, bf16 in / out
    y1_act = bn_relu(y1, sc1, sh1, bf).reshape(cout, n, do, ho, w)

    # conv2 + fused BN stats
    p3, _ = _patches_dh(y1_act, 3, 3, (1, 1), (1, 1))
    y2, s2, q2 = conv_matmul_stats([p3], [_w2d(params["w_c2"])])
    sc2, sh2 = _bn_scale_shift(s2, q2, float(m), params["g2"], params["be2"])

    # final BN+ReLU with the channels-first -> NCDHW transpose fused into the
    # epilogue whenever the per-image spatial size is lane-aligned.
    s_spatial = do * ho * w
    if s_spatial % 128 == 0:
        out = bn_relu_to_ncs(y2, sc2, sh2, n, s_spatial)          # (N, C, S) f32
        return out.reshape(n, cout, do, ho, w)
    out = bn_relu(y2, sc2, sh2, jnp.float32).reshape(cout, n, do, ho, w)
    return jnp.transpose(out, (1, 0, 2, 3, 4))                    # fallback path


def init_params(key, in_size, out_size):
    ks = jax.random.split(key, 8)

    def kaiming(k, shape, fan_in):
        return jax.random.normal(k, shape, jnp.float32) * jnp.sqrt(2.0 / fan_in)

    # ConvTranspose3d weight (in, out, 4, 4, 1) -> stored (in, out, 4, 4)
    w_up = kaiming(ks[0], (in_size, out_size, 4, 4), out_size * 16)
    b_up = jax.random.normal(ks[1], (out_size,), jnp.float32) * 0.01
    # conv1 weight (out, in, 3, 3, 1) -> (out, in, 3, 3)
    w_c1 = kaiming(ks[2], (out_size, in_size, 3, 3), in_size * 9)
    # conv biases exist in the torch module but cancel exactly under
    # training-mode BatchNorm, so the forward never reads them.
    b_c1 = jax.random.normal(ks[3], (out_size,), jnp.float32) * 0.01
    g1 = 1.0 + 0.02 * jax.random.normal(ks[4], (out_size,), jnp.float32)
    be1 = jnp.zeros((out_size,), jnp.float32)
    # conv2 weight (out, out, 3, 3)
    w_c2 = kaiming(ks[5], (out_size, out_size, 3, 3), out_size * 9)
    b_c2 = jax.random.normal(ks[6], (out_size,), jnp.float32) * 0.01
    g2 = 1.0 + 0.02 * jax.random.normal(ks[7], (out_size,), jnp.float32)
    be2 = jnp.zeros((out_size,), jnp.float32)
    return dict(w_up=w_up, b_up=b_up, w_c1=w_c1, b_c1=b_c1, g1=g1, be1=be1,
                w_c2=w_c2, b_c2=b_c2, g2=g2, be2=be2)


if __name__ == "__main__":
    key = jax.random.PRNGKey(0)
    k1, k2, kp = jax.random.split(key, 3)
    in_size, out_size = 8, 4          # is_deconv=True: in_size == 2 * out_size
    N, W = 2, 4
    # inputs1: skip connection (N, out_size, D, H, W); inputs2: coarse feature
    inputs1 = jax.random.normal(k1, (N, out_size, 16, 16, W), jnp.float32)
    inputs2 = jax.random.normal(k2, (N, in_size, 8, 8, W), jnp.float32)
    params = init_params(kp, in_size, out_size)

    out = jax.jit(unet_up3_forward)(inputs1, inputs2, params)
    out = jax.block_until_ready(out)
    assert out.shape == (N, out_size, 16, 16, W), out.shape
    assert bool(jnp.all(jnp.isfinite(out)))
    print("KERNEL_OK")
</pallas_src>

<mosaic_0001>
module attributes {stable_mosaic.version = 11 : i64} {
  func.func @_mm_bias_kernel(%arg0: i32, %arg1: i32, %arg2: memref<1x32x256xbf16, #tpu.memory_space<vmem>>, %arg3: memref<1x4x32xbf16, #tpu.memory_space<vmem>>, %arg4: memref<4x1xf32, #tpu.memory_space<vmem>>, %arg5: memref<1x4x256xbf16, #tpu.memory_space<vmem>>) attributes {dimension_semantics = [#tpu.dimension_semantics<parallel>, #tpu.dimension_semantics<parallel>], iteration_bounds = array<i64: 4, 2>, scalar_prefetch = 0 : i64, scratch_operands = 0 : i64, tpu.core_type = #tpu.core_type<tc>, window_params = [{transform_indices = @transform_0, window_bounds = array<i64: 1, 32, 256>}, {transform_indices = @transform_1, window_bounds = array<i64: 1, 4, 32>}, {pipeline_mode = #tpu.pipeline_mode<synchronous>, transform_indices = @transform_2, window_bounds = array<i64: 4, 1>}, {transform_indices = @transform_3, window_bounds = array<i64: 1, 4, 256>}]} {
    %c0 = arith.constant 0 : index
    %c0_0 = arith.constant 0 : index
    %c0_1 = arith.constant 0 : index
    %0 = vector.load %arg3[%c0, %c0_0, %c0_1] : memref<1x4x32xbf16, #tpu.memory_space<vmem>>, vector<1x4x32xbf16>
    %1 = vector.shape_cast %0 : vector<1x4x32xbf16> to vector<4x32xbf16>
    %c0_2 = arith.constant 0 : index
    %c0_3 = arith.constant 0 : index
    %c0_4 = arith.constant 0 : index
    %2 = vector.load %arg2[%c0_2, %c0_3, %c0_4] : memref<1x32x256xbf16, #tpu.memory_space<vmem>>, vector<1x32x256xbf16>
    %3 = vector.shape_cast %2 : vector<1x32x256xbf16> to vector<32x256xbf16>
    %cst = arith.constant dense<0.000000e+00> : vector<4x256xf32>
    %4 = tpu.matmul %1, %3, %cst {dimension_numbers = #tpu.dot_dimension_numbers<[1], [0], [0], [1], [0, 0, 1, 1], [], []>} : vector<4x32xbf16>, vector<32x256xbf16>, vector<4x256xf32> -> vector<4x256xf32>
    %c0_5 = arith.constant 0 : index
    %c0_6 = arith.constant 0 : index
    %5 = vector.load %arg4[%c0_5, %c0_6] : memref<4x1xf32, #tpu.memory_space<vmem>>, vector<4x1xf32>
    %6 = vector.broadcast %5 : vector<4x1xf32> to vector<4x256xf32>
    %7 = arith.addf %4, %6 : vector<4x256xf32>
    %8 = arith.truncf %7 : vector<4x256xf32> to vector<4x256xbf16>
    %c0_7 = arith.constant 0 : index
    %c0_8 = arith.constant 0 : index
    %c0_9 = arith.constant 0 : index
    %9 = vector.load %arg5[%c0_7, %c0_8, %c0_9] : memref<1x4x256xbf16, #tpu.memory_space<vmem>>, vector<1x4x256xbf16>
    %10 = vector.shape_cast %9 : vector<1x4x256xbf16> to vector<4x256xbf16>
    %11 = vector.shape_cast %8 : vector<4x256xbf16> to vector<1x4x256xbf16>
    tpu.vector_store %arg5[%c0_7, %c0_8, %c0_9], %11 {strides = array<i32>} : memref<1x4x256xbf16, #tpu.memory_space<vmem>>, vector<1x4x256xbf16>,
    return
  }
  func.func @transform_0(%arg0: i32, %arg1: i32) -> (i32, i32, i32) {
    %c0_i32 = arith.constant 0 : i32
    %c0_i32_0 = arith.constant 0 : i32
    return %arg0, %c0_i32, %arg1 : i32, i32, i32
  }
  func.func @transform_1(%arg0: i32, %arg1: i32) -> (i32, i32, i32) {
    %c0_i32 = arith.constant 0 : i32
    %c0_i32_0 = arith.constant 0 : i32
    %c0_i32_1 = arith.constant 0 : i32
    return %arg0, %c0_i32, %c0_i32_0 : i32, i32, i32
  }
  func.func @transform_2(%arg0: i32, %arg1: i32) -> (i32, i32) {
    %c0_i32 = arith.constant 0 : i32
    %c0_i32_0 = arith.constant 0 : i32
    %c0_i32_1 = arith.constant 0 : i32
    return %c0_i32, %c0_i32_0 : i32, i32
  }
  func.func @transform_3(%arg0: i32, %arg1: i32) -> (i32, i32, i32) {
    %c0_i32 = arith.constant 0 : i32
    %c0_i32_0 = arith.constant 0 : i32
    return %arg0, %c0_i32, %arg1 : i32, i32, i32
  }
}

module attributes {stable_mosaic.version = 11 : i64} {
  func.func @_mm_stats_kernel(%arg0: i32, %arg1: memref<36x1024xbf16, #tpu.memory_space<vmem>>, %arg2: memref<36x1024xbf16, #tpu.memory_space<vmem>>, %arg3: memref<4x36xbf16, #tpu.memory_space<vmem>>, %arg4: memref<4x36xbf16, #tpu.memory_space<vmem>>, %arg5: memref<4x1024xbf16, #tpu.memory_space<vmem>>, %arg6: memref<4x128xf32, #tpu.memory_space<vmem>>, %arg7: memref<4x128xf32, #tpu.memory_space<vmem>>) attributes {dimension_semantics = [#tpu.dimension_semantics<parallel>], iteration_bounds = array<i64: 2>, scalar_prefetch = 0 : i64, scratch_operands = 0 : i64, tpu.core_type = #tpu.core_type<tc>, window_params = [{transform_indices = @transform_0, window_bounds = array<i64: 36, 1024>}, {transform_indices = @transform_1, window_bounds = array<i64: 36, 1024>}, {pipeline_mode = #tpu.pipeline_mode<synchronous>, transform_indices = @transform_2, window_bounds = array<i64: 4, 36>}, {pipeline_mode = #tpu.pipeline_mode<synchronous>, transform_indices = @transform_3, window_bounds = array<i64: 4, 36>}, {transform_indices = @transform_4, window_bounds = array<i64: 4, 1024>}, {transform_indices = @transform_5, window_bounds = array<i64: 4, 128>}, {transform_indices = @transform_6, window_bounds = array<i64: 4, 128>}]} {
    %c0 = arith.constant 0 : index
    %c0_0 = arith.constant 0 : index
    %0 = vector.load %arg3[%c0, %c0_0] : memref<4x36xbf16, #tpu.memory_space<vmem>>, vector<4x36xbf16>
    %c0_1 = arith.constant 0 : index
    %c0_2 = arith.constant 0 : index
    %1 = vector.load %arg1[%c0_1, %c0_2] : memref<36x1024xbf16, #tpu.memory_space<vmem>>, vector<36x1024xbf16>
    %cst = arith.constant dense<0.000000e+00> : vector<4x1024xf32>
    %2 = tpu.matmul %0, %1, %cst {dimension_numbers = #tpu.dot_dimension_numbers<[1], [0], [0], [1], [0, 0, 1, 1], [], []>} : vector<4x36xbf16>, vector<36x1024xbf16>, vector<4x1024xf32> -> vector<4x1024xf32>
    %c0_3 = arith.constant 0 : index
    %c0_4 = arith.constant 0 : index
    %3 = vector.load %arg4[%c0_3, %c0_4] : memref<4x36xbf16, #tpu.memory_space<vmem>>, vector<4x36xbf16>
    %c0_5 = arith.constant 0 : index
    %c0_6 = arith.constant 0 : index
    %4 = vector.load %arg2[%c0_5, %c0_6] : memref<36x1024xbf16, #tpu.memory_space<vmem>>, vector<36x1024xbf16>
    %cst_7 = arith.constant dense<0.000000e+00> : vector<4x1024xf32>
    %5 = tpu.matmul %3, %4, %cst_7 {dimension_numbers = #tpu.dot_dimension_numbers<[1], [0], [0], [1], [0, 0, 1, 1], [], []>} : vector<4x36xbf16>, vector<36x1024xbf16>, vector<4x1024xf32> -> vector<4x1024xf32>
    %6 = arith.addf %2, %5 : vector<4x1024xf32>
    %7 = arith.truncf %6 : vector<4x1024xf32> to vector<4x1024xbf16>
    %c0_8 = arith.constant 0 : index
    %c0_9 = arith.constant 0 : index
    %8 = vector.load %arg5[%c0_8, %c0_9] : memref<4x1024xbf16, #tpu.memory_space<vmem>>, vector<4x1024xbf16>
    tpu.vector_store %arg5[%c0_8, %c0_9], %7 {strides = array<i32>} : memref<4x1024xbf16, #tpu.memory_space<vmem>>, vector<4x1024xbf16>,
    %9 = tpu.iota {dimensions = array<i32: 1>} : vector<4x128xi32>
    %c0_i32 = arith.constant 0 : i32
    %10 = vector.broadcast %c0_i32 : i32 to vector<4x128xi32>
    %11 = arith.cmpi eq, %9, %10 : vector<4x128xi32>
    %cst_10 = arith.constant dense<0.000000e+00> : vector<4xf32>
    %12 = vector.multi_reduction <add>, %6, %cst_10 [1] : vector<4x1024xf32> to vector<4xf32>
    %13 = vector.shape_cast %12 : vector<4xf32> to vector<4x1xf32>
    %cst_11 = arith.constant 0.000000e+00 : f32
    %14 = vector.shape_cast %13 : vector<4x1xf32> to vector<4x1xf32>
    %15 = vector.broadcast %14 : vector<4x1xf32> to vector<4x128xf32>
    %16 = vector.broadcast %cst_11 : f32 to vector<4x128xf32>
    %17 = arith.select %11, %15, %16 : vector<4x128xi1>, vector<4x128xf32>
    %c0_12 = arith.constant 0 : index
    %c0_13 = arith.constant 0 : index
    %18 = vector.load %arg6[%c0_12, %c0_13] : memref<4x128xf32, #tpu.memory_space<vmem>>, vector<4x128xf32>
    tpu.vector_store %arg6[%c0_12, %c0_13], %17 {strides = array<i32>} : memref<4x128xf32, #tpu.memory_space<vmem>>, vector<4x128xf32>,
    %19 = arith.mulf %6, %6 : vector<4x1024xf32>
    %cst_14 = arith.constant dense<0.000000e+00> : vector<4xf32>
    %20 = vector.multi_reduction <add>, %19, %cst_14 [1] : vector<4x1024xf32> to vector<4xf32>
    %21 = vector.shape_cast %20 : vector<4xf32> to vector<4x1xf32>
    %cst_15 = arith.constant 0.000000e+00 : f32
    %22 = vector.shape_cast %21 : vector<4x1xf32> to vector<4x1xf32>
    %23 = vector.broadcast %22 : vector<4x1xf32> to vector<4x128xf32>
    %24 = vector.broadcast %cst_15 : f32 to vector<4x128xf32>
    %25 = arith.select %11, %23, %24 : vector<4x128xi1>, vector<4x128xf32>
    %c0_16 = arith.constant 0 : index
    %c0_17 = arith.constant 0 : index
    %26 = vector.load %arg7[%c0_16, %c0_17] : memref<4x128xf32, #tpu.memory_space<vmem>>, vector<4x128xf32>
    tpu.vector_store %arg7[%c0_16, %c0_17], %25 {strides = array<i32>} : memref<4x128xf32, #tpu.memory_space<vmem>>, vector<4x128xf32>,
    return
  }
  func.func @transform_0(%arg0: i32) -> (i32, i32) {
    %c0_i32 = arith.constant 0 : i32
    %c0_i32_0 = arith.constant 0 : i32
    return %c0_i32, %arg0 : i32, i32
  }
  func.func @transform_1(%arg0: i32) -> (i32, i32) {
    %c0_i32 = arith.constant 0 : i32
    %c0_i32_0 = arith.constant 0 : i32
    return %c0_i32, %arg0 : i32, i32
  }
  func.func @transform_2(%arg0: i32) -> (i32, i32) {
    %c0_i32 = arith.constant 0 : i32
    %c0_i32_0 = arith.constant 0 : i32
    %c0_i32_1 = arith.constant 0 : i32
    return %c0_i32, %c0_i32_0 : i32, i32
  }
  func.func @transform_3(%arg0: i32) -> (i32, i32) {
    %c0_i32 = arith.constant 0 : i32
    %c0_i32_0 = arith.constant 0 : i32
    %c0_i32_1 = arith.constant 0 : i32
    return %c0_i32, %c0_i32_0 : i32, i32
  }
  func.func @transform_4(%arg0: i32) -> (i32, i32) {
    %c0_i32 = arith.constant 0 : i32
    %c0_i32_0 = arith.constant 0 : i32
    return %c0_i32, %arg0 : i32, i32
  }
  func.func @transform_5(%arg0: i32) -> (i32, i32) {
    %c0_i32 = arith.constant 0 : i32
    %c0_i32_0 = arith.constant 0 : i32
    return %c0_i32, %arg0 : i32, i32
  }
  func.func @transform_6(%arg0: i32) -> (i32, i32) {
    %c0_i32 = arith.constant 0 : i32
    %c0_i32_0 = arith.constant 0 : i32
    return %c0_i32, %arg0 : i32, i32
  }
}

module attributes {stable_mosaic.version = 11 : i64} {
  func.func @_bn_relu_kernel(%arg0: i32, %arg1: memref<4x1024xbf16, #tpu.memory_space<vmem>>, %arg2: memref<4x1xf32, #tpu.memory_space<vmem>>, %arg3: memref<4x1xf32, #tpu.memory_space<vmem>>, %arg4: memref<4x1024xbf16, #tpu.memory_space<vmem>>) attributes {dimension_semantics = [#tpu.dimension_semantics<parallel>], iteration_bounds = array<i64: 2>, scalar_prefetch = 0 : i64, scratch_operands = 0 : i64, tpu.core_type = #tpu.core_type<tc>, window_params = [{transform_indices = @transform_0, window_bounds = array<i64: 4, 1024>}, {pipeline_mode = #tpu.pipeline_mode<synchronous>, transform_indices = @transform_1, window_bounds = array<i64: 4, 1>}, {pipeline_mode = #tpu.pipeline_mode<synchronous>, transform_indices = @transform_2, window_bounds = array<i64: 4, 1>}, {transform_indices = @transform_3, window_bounds = array<i64: 4, 1024>}]} {
    %c0 = arith.constant 0 : index
    %c0_0 = arith.constant 0 : index
    %0 = vector.load %arg1[%c0, %c0_0] : memref<4x1024xbf16, #tpu.memory_space<vmem>>, vector<4x1024xbf16>
    %1 = arith.extf %0 : vector<4x1024xbf16> to vector<4x1024xf32>
    %c0_1 = arith.constant 0 : index
    %c0_2 = arith.constant 0 : index
    %2 = vector.load %arg2[%c0_1, %c0_2] : memref<4x1xf32, #tpu.memory_space<vmem>>, vector<4x1xf32>
    %3 = vector.broadcast %2 : vector<4x1xf32> to vector<4x1024xf32>
    %4 = arith.mulf %1, %3 : vector<4x1024xf32>
    %c0_3 = arith.constant 0 : index
    %c0_4 = arith.constant 0 : index
    %5 = vector.load %arg3[%c0_3, %c0_4] : memref<4x1xf32, #tpu.memory_space<vmem>>, vector<4x1xf32>
    %6 = vector.broadcast %5 : vector<4x1xf32> to vector<4x1024xf32>
    %7 = arith.addf %4, %6 : vector<4x1024xf32>
    %cst = arith.constant 0.000000e+00 : f32
    %8 = vector.broadcast %cst : f32 to vector<4x1024xf32>
    %9 = arith.maximumf %7, %8 : vector<4x1024xf32>
    %10 = arith.truncf %9 : vector<4x1024xf32> to vector<4x1024xbf16>
    %c0_5 = arith.constant 0 : index
    %c0_6 = arith.constant 0 : index
    %11 = vector.load %arg4[%c0_5, %c0_6] : memref<4x1024xbf16, #tpu.memory_space<vmem>>, vector<4x1024xbf16>
    tpu.vector_store %arg4[%c0_5, %c0_6], %10 {strides = array<i32>} : memref<4x1024xbf16, #tpu.memory_space<vmem>>, vector<4x1024xbf16>,
    return
  }
  func.func @transform_0(%arg0: i32) -> (i32, i32) {
    %c0_i32 = arith.constant 0 : i32
    %c0_i32_0 = arith.constant 0 : i32
    return %c0_i32, %arg0 : i32, i32
  }
  func.func @transform_1(%arg0: i32) -> (i32, i32) {
    %c0_i32 = arith.constant 0 : i32
    %c0_i32_0 = arith.constant 0 : i32
    %c0_i32_1 = arith.constant 0 : i32
    return %c0_i32, %c0_i32_0 : i32, i32
  }
  func.func @transform_2(%arg0: i32) -> (i32, i32) {
    %c0_i32 = arith.constant 0 : i32
    %c0_i32_0 = arith.constant 0 : i32
    %c0_i32_1 = arith.constant 0 : i32
    return %c0_i32, %c0_i32_0 : i32, i32
  }
  func.func @transform_3(%arg0: i32) -> (i32, i32) {
    %c0_i32 = arith.constant 0 : i32
    %c0_i32_0 = arith.constant 0 : i32
    return %c0_i32, %arg0 : i32, i32
  }
}

module attributes {stable_mosaic.version = 11 : i64} {
  func.func @_mm_stats_kernel(%arg0: i32, %arg1: memref<36x1024xbf16, #tpu.memory_space<vmem>>, %arg2: memref<4x36xbf16, #tpu.memory_space<vmem>>, %arg3: memref<4x1024xbf16, #tpu.memory_space<vmem>>, %arg4: memref<4x128xf32, #tpu.memory_space<vmem>>, %arg5: memref<4x128xf32, #tpu.memory_space<vmem>>) attributes {dimension_semantics = [#tpu.dimension_semantics<parallel>], iteration_bounds = array<i64: 2>, scalar_prefetch = 0 : i64, scratch_operands = 0 : i64, tpu.core_type = #tpu.core_type<tc>, window_params = [{transform_indices = @transform_0, window_bounds = array<i64: 36, 1024>}, {pipeline_mode = #tpu.pipeline_mode<synchronous>, transform_indices = @transform_1, window_bounds = array<i64: 4, 36>}, {transform_indices = @transform_2, window_bounds = array<i64: 4, 1024>}, {transform_indices = @transform_3, window_bounds = array<i64: 4, 128>}, {transform_indices = @transform_4, window_bounds = array<i64: 4, 128>}]} {
    %c0 = arith.constant 0 : index
    %c0_0 = arith.constant 0 : index
    %0 = vector.load %arg2[%c0, %c0_0] : memref<4x36xbf16, #tpu.memory_space<vmem>>, vector<4x36xbf16>
    %c0_1 = arith.constant 0 : index
    %c0_2 = arith.constant 0 : index
    %1 = vector.load %arg1[%c0_1, %c0_2] : memref<36x1024xbf16, #tpu.memory_space<vmem>>, vector<36x1024xbf16>
    %cst = arith.constant dense<0.000000e+00> : vector<4x1024xf32>
    %2 = tpu.matmul %0, %1, %cst {dimension_numbers = #tpu.dot_dimension_numbers<[1], [0], [0], [1], [0, 0, 1, 1], [], []>} : vector<4x36xbf16>, vector<36x1024xbf16>, vector<4x1024xf32> -> vector<4x1024xf32>
    %3 = arith.truncf %2 : vector<4x1024xf32> to vector<4x1024xbf16>
    %c0_3 = arith.constant 0 : index
    %c0_4 = arith.constant 0 : index
    %4 = vector.load %arg3[%c0_3, %c0_4] : memref<4x1024xbf16, #tpu.memory_space<vmem>>, vector<4x1024xbf16>
    tpu.vector_store %arg3[%c0_3, %c0_4], %3 {strides = array<i32>} : memref<4x1024xbf16, #tpu.memory_space<vmem>>, vector<4x1024xbf16>,
    %5 = tpu.iota {dimensions = array<i32: 1>} : vector<4x128xi32>
    %c0_i32 = arith.constant 0 : i32
    %6 = vector.broadcast %c0_i32 : i32 to vector<4x128xi32>
    %7 = arith.cmpi eq, %5, %6 : vector<4x128xi32>
    %cst_5 = arith.constant dense<0.000000e+00> : vector<4xf32>
    %8 = vector.multi_reduction <add>, %2, %cst_5 [1] : vector<4x1024xf32> to vector<4xf32>
    %9 = vector.shape_cast %8 : vector<4xf32> to vector<4x1xf32>
    %cst_6 = arith.constant 0.000000e+00 : f32
    %10 = vector.shape_cast %9 : vector<4x1xf32> to vector<4x1xf32>
    %11 = vector.broadcast %10 : vector<4x1xf32> to vector<4x128xf32>
    %12 = vector.broadcast %cst_6 : f32 to vector<4x128xf32>
    %13 = arith.select %7, %11, %12 : vector<4x128xi1>, vector<4x128xf32>
    %c0_7 = arith.constant 0 : index
    %c0_8 = arith.constant 0 : index
    %14 = vector.load %arg4[%c0_7, %c0_8] : memref<4x128xf32, #tpu.memory_space<vmem>>, vector<4x128xf32>
    tpu.vector_store %arg4[%c0_7, %c0_8], %13 {strides = array<i32>} : memref<4x128xf32, #tpu.memory_space<vmem>>, vector<4x128xf32>,
    %15 = arith.mulf %2, %2 : vector<4x1024xf32>
    %cst_9 = arith.constant dense<0.000000e+00> : vector<4xf32>
    %16 = vector.multi_reduction <add>, %15, %cst_9 [1] : vector<4x1024xf32> to vector<4xf32>
    %17 = vector.shape_cast %16 : vector<4xf32> to vector<4x1xf32>
    %cst_10 = arith.constant 0.000000e+00 : f32
    %18 = vector.shape_cast %17 : vector<4x1xf32> to vector<4x1xf32>
    %19 = vector.broadcast %18 : vector<4x1xf32> to vector<4x128xf32>
    %20 = vector.broadcast %cst_10 : f32 to vector<4x128xf32>
    %21 = arith.select %7, %19, %20 : vector<4x128xi1>, vector<4x128xf32>
    %c0_11 = arith.constant 0 : index
    %c0_12 = arith.constant 0 : index
    %22 = vector.load %arg5[%c0_11, %c0_12] : memref<4x128xf32, #tpu.memory_space<vmem>>, vector<4x128xf32>
    tpu.vector_store %arg5[%c0_11, %c0_12], %21 {strides = array<i32>} : memref<4x128xf32, #tpu.memory_space<vmem>>, vector<4x128xf32>,
    return
  }
  func.func @transform_0(%arg0: i32) -> (i32, i32) {
    %c0_i32 = arith.constant 0 : i32
    %c0_i32_0 = arith.constant 0 : i32
    return %c0_i32, %arg0 : i32, i32
  }
  func.func @transform_1(%arg0: i32) -> (i32, i32) {
    %c0_i32 = arith.constant 0 : i32
    %c0_i32_0 = arith.constant 0 : i32
    %c0_i32_1 = arith.constant 0 : i32
    return %c0_i32, %c0_i32_0 : i32, i32
  }
  func.func @transform_2(%arg0: i32) -> (i32, i32) {
    %c0_i32 = arith.constant 0 : i32
    %c0_i32_0 = arith.constant 0 : i32
    return %c0_i32, %arg0 : i32, i32
  }
  func.func @transform_3(%arg0: i32) -> (i32, i32) {
    %c0_i32 = arith.constant 0 : i32
    %c0_i32_0 = arith.constant 0 : i32
    return %c0_i32, %arg0 : i32, i32
  }
  func.func @transform_4(%arg0: i32) -> (i32, i32) {
    %c0_i32 = arith.constant 0 : i32
    %c0_i32_0 = arith.constant 0 : i32
    return %c0_i32, %arg0 : i32, i32
  }
}

module attributes {stable_mosaic.version = 11 : i64} {
  func.func @_bn_relu_t_kernel(%arg0: i32, %arg1: i32, %arg2: memref<4x1024xbf16, #tpu.memory_space<vmem>>, %arg3: memref<4x1xf32, #tpu.memory_space<vmem>>, %arg4: memref<4x1xf32, #tpu.memory_space<vmem>>, %arg5: memref<1x4x1024xf32, #tpu.memory_space<vmem>>) attributes {dimension_semantics = [#tpu.dimension_semantics<parallel>, #tpu.dimension_semantics<parallel>], iteration_bounds = array<i64: 2, 1>, scalar_prefetch = 0 : i64, scratch_operands = 0 : i64, tpu.core_type = #tpu.core_type<tc>, window_params = [{transform_indices = @transform_0, window_bounds = array<i64: 4, 1024>}, {pipeline_mode = #tpu.pipeline_mode<synchronous>, transform_indices = @transform_1, window_bounds = array<i64: 4, 1>}, {pipeline_mode = #tpu.pipeline_mode<synchronous>, transform_indices = @transform_2, window_bounds = array<i64: 4, 1>}, {transform_indices = @transform_3, window_bounds = array<i64: 1, 4, 1024>}]} {
    %c0 = arith.constant 0 : index
    %c0_0 = arith.constant 0 : index
    %0 = vector.load %arg2[%c0, %c0_0] : memref<4x1024xbf16, #tpu.memory_space<vmem>>, vector<4x1024xbf16>
    %1 = arith.extf %0 : vector<4x1024xbf16> to vector<4x1024xf32>
    %c0_1 = arith.constant 0 : index
    %c0_2 = arith.constant 0 : index
    %2 = vector.load %arg3[%c0_1, %c0_2] : memref<4x1xf32, #tpu.memory_space<vmem>>, vector<4x1xf32>
    %3 = vector.broadcast %2 : vector<4x1xf32> to vector<4x1024xf32>
    %4 = arith.mulf %1, %3 : vector<4x1024xf32>
    %c0_3 = arith.constant 0 : index
    %c0_4 = arith.constant 0 : index
    %5 = vector.load %arg4[%c0_3, %c0_4] : memref<4x1xf32, #tpu.memory_space<vmem>>, vector<4x1xf32>
    %6 = vector.broadcast %5 : vector<4x1xf32> to vector<4x1024xf32>
    %7 = arith.addf %4, %6 : vector<4x1024xf32>
    %cst = arith.constant 0.000000e+00 : f32
    %8 = vector.broadcast %cst : f32 to vector<4x1024xf32>
    %9 = arith.maximumf %7, %8 : vector<4x1024xf32>
    %c0_5 = arith.constant 0 : index
    %c0_6 = arith.constant 0 : index
    %c0_7 = arith.constant 0 : index
    %10 = vector.load %arg5[%c0_5, %c0_6, %c0_7] : memref<1x4x1024xf32, #tpu.memory_space<vmem>>, vector<1x4x1024xf32>
    %11 = vector.shape_cast %10 : vector<1x4x1024xf32> to vector<4x1024xf32>
    %12 = vector.shape_cast %9 : vector<4x1024xf32> to vector<1x4x1024xf32>
    tpu.vector_store %arg5[%c0_5, %c0_6, %c0_7], %12 {strides = array<i32>} : memref<1x4x1024xf32, #tpu.memory_space<vmem>>, vector<1x4x1024xf32>,
    return
  }
  func.func @transform_0(%arg0: i32, %arg1: i32) -> (i32, i32) {
    %c1_i32 = arith.constant 1 : i32
    %0 = arith.muli %arg0, %c1_i32 : i32
    %1 = arith.addi %0, %arg1 : i32
    %c0_i32 = arith.constant 0 : i32
    %c0_i32_0 = arith.constant 0 : i32
    return %c0_i32, %1 : i32, i32
  }
  func.func @transform_1(%arg0: i32, %arg1: i32) -> (i32, i32) {
    %c0_i32 = arith.constant 0 : i32
    %c0_i32_0 = arith.constant 0 : i32
    %c0_i32_1 = arith.constant 0 : i32
    return %c0_i32, %c0_i32_0 : i32, i32
  }
  func.func @transform_2(%arg0: i32, %arg1: i32) -> (i32, i32) {
    %c0_i32 = arith.constant 0 : i32
    %c0_i32_0 = arith.constant 0 : i32
    %c0_i32_1 = arith.constant 0 : i32
    return %c0_i32, %c0_i32_0 : i32, i32
  }
  func.func @transform_3(%arg0: i32, %arg1: i32) -> (i32, i32, i32) {
    %c0_i32 = arith.constant 0 : i32
    %c0_i32_0 = arith.constant 0 : i32
    return %arg0, %c0_i32, %arg1 : i32, i32, i32
  }
}

</mosaic_0001>

<llo_original>
// kernel: unet_up3_forward.5
$region0: #{unet_up3_forward.5}
  #allocation0 [shape = 'u32[]', space=smem, size = 0x4, offset = 0x4, fixed_abs, tag = 'smem constant byte address 0x4 - core index']
  #allocation1 [shape = 'u32[144,128]{1,0:T(1,128)}', space=vmem, size = 0x12000, scoped, tag = 'internal scratch']
  %s0 = inlined_call_operand.vmem [shape: bf16[4,32,512], index: 0, kind: input, shape index: {}]
  %s1 = inlined_call_operand.vmem [shape: bf16[4,4,32], index: 1, kind: input, shape index: {}]
  %s2 = inlined_call_operand.vmem [shape: f32[4,1], index: 2, kind: input, shape index: {}]
  %s3 = inlined_call_operand.vmem [shape: bf16[4,4,512], index: 3, kind: output, shape index: {}]
  %s4 = sld [smem:[#allocation0]]
  $region83: #{unet_up3_forward.5} parent=0
    _
  %s6 = ssub.s32 1, %s4
  %s7 = scalar_select 0, %s6, %s4
  $region1: #{unet_up3_forward.5} parent=0
    #allocation2 [shape = 'u8[32768]{0}', space=vmem, size = 0x8000, scoped, tag = 'input window, operand 0']
    loop: start=0, step=1, limit=10
    $region2: #{unet_up3_forward.5} parent=1 // loop_pre_header
      _
    $region3: #{unet_up3_forward.5} parent=1 // loop_header
      %s9 = sphi 0, %s13
      %p10 = scmp.ge.s32.totalorder %s9, 10
      %s16 = sphi 0, %s28
      %s17 = sphi 0, %s24
      %s18 = sphi 0, %s16
      %s19 = sphi 0, %s17
      %s20 = sphi 0, %s18
      %s21 = sphi 0, %s19
      %s33 = sphi 0, %s35
      %s36 = sphi 0, %s33
      %s37 = sphi 0, %s36
      %s53 = sphi 0, %s37
      %s59 = sphi 0, %s61
      %s62 = sphi 0, %s59
      %s63 = sphi 0, %s62
      %s79 = sphi 0, %s63
      %s83 = sphi 0, %s83
      %s85 = sphi 0, %s83
      %s86 = sphi 0, %s85
      %s100 = sphi 0, %s86
      %s108 = sphi 0, %s110
      %s111 = sphi 0, %s108
      %s112 = sphi 0, %s111
      %s128 = sphi 0, %s112
    $region4: #{unet_up3_forward.5} parent=1 // loop_header_branch
      %12 = sbr.rel (%p10) target = $region8
    $region5: #{unet_up3_forward.5} parent=1 // loop_body
      %s14 = ssub.s32 %s9, 1
      %s15 = ssub.s32 %s9, 2
      %s22 = sadd.s32 1, %s17
      %p23 = scmp.ge.s32.totalorder %s22, 2
      %s24 = scalar_select %p23, 0, %s22
      %s25 = sadd.s32 1, %s16
      %s26 = scalar_select %p23, %s25, %s16
      %p27 = scmp.ge.s32.totalorder %s26, 4
      %s28 = scalar_select %p27, 0, %s26
      %s29 = ssub.s32 %s16, %s28
      %s30 = ssub.s32 %s17, %s24
      %s31 = sor.u32 %s29, %s30
      %p32 = scmp.eq.s32.totalorder %s31, 0
      %s34 = sadd.s32 %s33, 1
      %s35 = scalar_select %p32, %s33, %s34
      %p38 = pneg %p32
      %p39 = scmp.eq.s32.totalorder %s9, 7
      %p40 = por %p38, %p39
      %p41 = scmp.ne.s32.totalorder %s33, %s36
      %p42 = scmp.eq.s32.totalorder %s9, 0
      %p43 = por %p41, %p42
      %p44 = scmp.ne.s32.totalorder %s33, %s36
      %p45 = scmp.eq.s32.totalorder %s14, 7
      %p46 = por %p44, %p45
      %p47 = scmp.ne.s32.totalorder %s36, %s37
      %p48 = scmp.eq.s32.totalorder %s14, 0
      %p49 = por %p47, %p48
      %p50 = scmp.ne.s32.totalorder %s36, %s37
      %p51 = scmp.eq.s32.totalorder %s15, 7
      %p52 = por %p50, %p51
      %p54 = scmp.ne.s32.totalorder %s37, %s53
      %p55 = scmp.eq.s32.totalorder %s15, 0
      %p56 = por %p54, %p55
      %s57 = ssub.s32 %s16, %s28
      %p58 = scmp.eq.s32.totalorder %s57, 0
      %s60 = sadd.s32 %s59, 1
      %s61 = scalar_select %p58, %s59, %s60
      %p64 = pneg %p58
      %p65 = scmp.eq.s32.totalorder %s9, 7
      %p66 = por %p64, %p65
      %p67 = scmp.ne.s32.totalorder %s59, %s62
      %p68 = scmp.eq.s32.totalorder %s9, 0
      %p69 = por %p67, %p68
      %p70 = scmp.ne.s32.totalorder %s59, %s62
      %p71 = scmp.eq.s32.totalorder %s14, 7
      %p72 = por %p70, %p71
      %p73 = scmp.ne.s32.totalorder %s62, %s63
      %p74 = scmp.eq.s32.totalorder %s14, 0
      %p75 = por %p73, %p74
      %p76 = scmp.ne.s32.totalorder %s62, %s63
      %p77 = scmp.eq.s32.totalorder %s15, 7
      %p78 = por %p76, %p77
      %p80 = scmp.ne.s32.totalorder %s63, %s79
      %p81 = scmp.eq.s32.totalorder %s15, 0
      %p82 = por %p80, %p81
      %s84 = sadd.s32 %s83, 1
      %p87 = scmp.eq.s32.totalorder %s9, 7
      %p88 = scmp.ne.s32.totalorder %s83, %s85
      %p89 = scmp.eq.s32.totalorder %s9, 0
      %p90 = por %p88, %p89
      %p91 = scmp.ne.s32.totalorder %s83, %s85
      %p92 = scmp.eq.s32.totalorder %s14, 7
      %p93 = por %p91, %p92
      %p94 = scmp.ne.s32.totalorder %s85, %s86
      %p95 = scmp.eq.s32.totalorder %s14, 0
      %p96 = por %p94, %p95
      %p97 = scmp.ne.s32.totalorder %s85, %s86
      %p98 = scmp.eq.s32.totalorder %s15, 7
      %p99 = por %p97, %p98
      %p101 = scmp.ne.s32.totalorder %s86, %s100
      %p102 = scmp.eq.s32.totalorder %s15, 0
      %p103 = por %p101, %p102
      %s104 = ssub.s32 %s16, %s28
      %s105 = ssub.s32 %s17, %s24
      %s106 = sor.u32 %s104, %s105
      %p107 = scmp.eq.s32.totalorder %s106, 0
      %s109 = sadd.s32 %s108, 1
      %s110 = scalar_select %p107, %s108, %s109
      %p113 = pneg %p107
      %p114 = scmp.eq.s32.totalorder %s9, 7
      %p115 = por %p113, %p114
      %p116 = scmp.ne.s32.totalorder %s108, %s111
      %p117 = scmp.eq.s32.totalorder %s9, 0
      %p118 = por %p116, %p117
      %p119 = scmp.ne.s32.totalorder %s108, %s111
      %p120 = scmp.eq.s32.totalorder %s14, 7
      %p121 = por %p119, %p120
      %p122 = scmp.ne.s32.totalorder %s111, %s112
      %p123 = scmp.eq.s32.totalorder %s14, 0
      %p124 = por %p122, %p123
      %p125 = scmp.ne.s32.totalorder %s111, %s112
      %p126 = scmp.eq.s32.totalorder %s15, 7
      %p127 = por %p125, %p126
      %p129 = scmp.ne.s32.totalorder %s112, %s128
      %p130 = scmp.eq.s32.totalorder %s15, 0
      %p131 = por %p129, %p130
      %p132 = scmp.le.s32.totalorder 1, %s9
      %p133 = scmp.lt.s32.totalorder %s9, 9
      %p134 = pnand %p132, %p133
      %p135 = pneg %p134
      // Predicated region
      $region9: #{unet_up3_forward.5} parent=5 // pred_check
        _
      $region10: #{unet_up3_forward.5} parent=5 // pred_check_branch
        %137 = sbr.rel (%p134) target = $region12
      $region11: #{unet_up3_forward.5} parent=5 // pred_region
        %s138 = ssub.s32 %s9, 1
        // Predicated region
        $region13: #{unet_up3_forward.5} parent=11 // pred_check
          %p139 = pneg %p96
        $region14: #{unet_up3_forward.5} parent=11 // pred_check_branch
          %141 = sbr.rel (%p139) target = $region16
        $region15: #{unet_up3_forward.5} parent=11 // pred_region
          _
        $region16: #{unet_up3_forward.5} parent=11 // pred_fallthru
          _
      $region12: #{unet_up3_forward.5} parent=5 // pred_fallthru
        _
      %p142 = scmp.lt.s32.totalorder %s9, 8
      // Predicated region
      $region17: #{unet_up3_forward.5} parent=5 // pred_check
        %p143 = pneg %p142
      $region18: #{unet_up3_forward.5} parent=5 // pred_check_branch
        %145 = sbr.rel (%p143) target = $region20
      $region19: #{unet_up3_forward.5} parent=5 // pred_region
        // Predicated region
        $region21: #{unet_up3_forward.5} parent=19 // pred_check
          %p146 = pneg %p43
        $region22: #{unet_up3_forward.5} parent=19 // pred_check_branch
          %148 = sbr.rel (%p146) target = $region24
        $region23: #{unet_up3_forward.5} parent=19 // pred_region
          %s149 = sand.u32 %s33, 1
          %s150 = sand.u32 %s33, 1
          %s151 = smul.addr %s150, 32
          %s152 = scalar_lea.vmem [#allocation2], %s151
          %s153 = smul.u32 2, %s17
          %s154 = smul.addr %s16, 16
          %s155 = sadd.s32 %s153, %s154
          %s156 = smul.addr %s155, 4
          %s157 = scalar_lea.vmem %s0, %s156
          // Predicated region
          $region25: #{unet_up3_forward.5} parent=23 // pred_check
            _
          $region26: #{unet_up3_forward.5} parent=23 // pred_check_branch
            %159 = sbr.rel (0) target = $region28
          $region27: #{unet_up3_forward.5} parent=23 // pred_region
            // Predicated region
            $region29: #{unet_up3_forward.5} parent=27 // pred_check
              _
            $region30: #{unet_up3_forward.5} parent=27 // pred_check_branch
              %161 = sbr.rel (0) target = $region32
            $region31: #{unet_up3_forward.5} parent=27 // pred_region
              // Predicated region
              $region44: #{unet_up3_forward.5} parent=31 // pred_check
                _
              $region45: #{unet_up3_forward.5} parent=31 // pred_check_branch
                %182 = sbr.rel (0) target = $region47
              $region46: #{unet_up3_forward.5} parent=31 // pred_region
                loop: start=0, step=1, limit=1
                $region48: #{unet_up3_forward.5} parent=46 // loop_pre_header
                  _
                $region49: #{unet_up3_forward.5} parent=46 // loop_header
                  %s184 = sphi 0, %s188
                  %p185 = scmp.ge.s32.totalorder %s184, 1
                  %s189 = sphi %s157, %s157
                  %s190 = sphi %s152, %s152
                $region50: #{unet_up3_forward.5} parent=46 // loop_header_branch
                  %187 = sbr.rel (%p185) target = $region54
                $region51: #{unet_up3_forward.5} parent=46 // loop_body
                  %v191 = vld [vmem:[%s189] sm:$0xff]
                  %192 = vst [vmem:[%s190] sm:$0xff] %v191
                  %v193 = vld [vmem:[%s189 + $0x10] sm:$0xff]
                  %194 = vst [vmem:[%s190 + $0x8] sm:$0xff] %v193
                  %v195 = vld [vmem:[%s189 + $0x20] sm:$0xff]
                  %196 = vst [vmem:[%s190 + $0x10] sm:$0xff] %v195
                  %v197 = vld [vmem:[%s189 + $0x30] sm:$0xff]
                  %198 = vst [vmem:[%s190 + $0x18] sm:$0xff] %v197
                $region52: #{unet_up3_forward.5} parent=46 // loop_footer
                  %s188 = sadd.s32 1, %s184
                $region53: #{unet_up3_forward.5} parent=46 // loop_footer_branch
                  %183 = sbr.rel target = $region49
                $region54: #{unet_up3_forward.5} parent=46 // loop_exit
                  _
              $region47: #{unet_up3_forward.5} parent=31 // pred_fallthru
                _
              // Predicated region
              $region55: #{unet_up3_forward.5} parent=31 // pred_check
                _
              $region56: #{unet_up3_forward.5} parent=31 // pred_check_branch
                %200 = sbr.rel target = $region58
              $region57: #{unet_up3_forward.5} parent=31 // pred_region
                _
              $region58: #{unet_up3_forward.5} parent=31 // pred_fallthru
                _
            $region32: #{unet_up3_forward.5} parent=27 // pred_fallthru
              _
            // Predicated region
            $region33: #{unet_up3_forward.5} parent=27 // pred_check
              _
            $region34: #{unet_up3_forward.5} parent=27 // pred_check_branch
              %163 = sbr.rel target = $region36
            $region35: #{unet_up3_forward.5} parent=27 // pred_region
              loop: start=0, step=1, limit=1
              $region37: #{unet_up3_forward.5} parent=35 // loop_pre_header
                _
              $region38: #{unet_up3_forward.5} parent=35 // loop_header
                %s166 = sphi 0, %s170
                %p167 = scmp.ge.s32.totalorder %s166, 1
                %s171 = sphi %s157, %s157
                %s172 = sphi %s152, %s152
              $region39: #{unet_up3_forward.5} parent=35 // loop_header_branch
                %169 = sbr.rel (%p167) target = $region43
              $region40: #{unet_up3_forward.5} parent=35 // loop_body
                %v173 = vld [vmem:[%s171] sm:$0xff]
                %174 = vst [vmem:[%s172] sm:$0xff] %v173
                %v175 = vld [vmem:[%s171 + $0x10] sm:$0xff]
                %176 = vst [vmem:[%s172 + $0x8] sm:$0xff] %v175
                %v177 = vld [vmem:[%s171 + $0x20] sm:$0xff]
                %178 = vst [vmem:[%s172 + $0x10] sm:$0xff] %v177
                %v179 = vld [vmem:[%s171 + $0x30] sm:$0xff]
                %180 = vst [vmem:[%s172 + $0x18] sm:$0xff] %v179
              $region41: #{unet_up3_forward.5} parent=35 // loop_footer
                %s170 = sadd.s32 1, %s166
              $region42: #{unet_up3_forward.5} parent=35 // loop_footer_branch
                %165 = sbr.rel target = $region38
              $region43: #{unet_up3_forward.5} parent=35 // loop_exit
                _
            $region36: #{unet_up3_forward.5} parent=27 // pred_fallthru
              _
          $region28: #{unet_up3_forward.5} parent=23 // pred_fallthru
            _
          %201 = vnop
        $region24: #{unet_up3_forward.5} parent=19 // pred_fallthru
          _
        // Predicated region
        $region59: #{unet_up3_forward.5} parent=19 // pred_check
          %p202 = pneg %p69
        $region60: #{unet_up3_forward.5} parent=19 // pred_check_branch
          %204 = sbr.rel (%p202) target = $region62
        $region61: #{unet_up3_forward.5} parent=19 // pred_region
          %p205 = scmp.lt.s32.totalorder %s16, 3
          %s206 = scalar_select %p205, %s16, 3
          %s207 = smul.addr %s206, 2
          %s208 = scalar_lea.vmem %s1, %s207
        $region62: #{unet_up3_forward.5} parent=19 // pred_fallthru
          _
      $region20: #{unet_up3_forward.5} parent=5 // pred_fallthru
        _
      %p209 = scmp.le.s32.totalorder 1, %s9
      %p210 = scmp.lt.s32.totalorder %s9, 9
      %p211 = pnand %p209, %p210
      %p212 = pneg %p211
      // Predicated region
      $region63: #{unet_up3_forward.5} parent=5 // pred_check
        _
      $region64: #{unet_up3_forward.5} parent=5 // pred_check_branch
        %214 = sbr.rel (%p211) target = $region66
      $region65: #{unet_up3_forward.5} parent=5 // pred_region
        %s215 = ssub.s32 %s9, 1
        %s216 = sand.u32 %s36, 1
        %s217 = sand.u32 %s36, 1
        %s218 = smul.addr %s217, 32
        %s219 = scalar_lea.vmem [#allocation2], %s218
        // Predicated region
        $region67: #{unet_up3_forward.5} parent=65 // pred_check
          %p220 = pneg %p49
        $region68: #{unet_up3_forward.5} parent=65 // pred_check_branch
          %222 = sbr.rel (%p220) target = $region70
        $region69: #{unet_up3_forward.5} parent=65 // pred_region
          _
        $region70: #{unet_up3_forward.5} parent=65 // pred_fallthru
          _
        %s223 = sand.u32 %s36, 1
        %s224 = sand.u32 %s36, 1
        %s225 = smul.addr %s224, 32
        %s226 = scalar_lea.vmem [#allocation2], %s225
        %p227 = pneg %p49
        %p228 = pneg %p46
        %p229 = scmp.lt.s32.totalorder %s18, 3
        %s230 = scalar_select %p229, %s18, 3
        %s231 = smul.addr %s230, 2
        %s232 = scalar_lea.vmem %s1, %s231
        %p233 = pneg %p75
        %p234 = pneg %p72
        %p235 = pneg %p96
        %p236 = pneg %p93
        %p237 = pneg %p124
        %p238 = pneg %p121
        %s239 = smul.u32 2, %s19
        %p240 = scmp.lt.s32.totalorder %s18, 3
        %s241 = scalar_select %p240, %s18, 3
        %p242 = scmp.lt.s32.totalorder %s239, 3
        %s243 = scalar_select %p242, %s239, 3
        %s244 = smul.addr %s241, 4
        %s245 = sadd.s32 %s243, %s244
        %s246 = smul.addr %s245, 2
        %s247 = scalar_lea.vmem %s3, %s246
        %s248 = smul.u32 2, %s19
        %p249 = scmp.lt.s32.totalorder %s18, 3
        %s250 = scalar_select %p249, %s18, 3
        %s251 = smul.addr %s250, 2
        %s252 = scalar_lea.vmem %s1, %s251
        %s253 = smul.u32 2, %s19
        %p254 = scmp.lt.s32.totalorder %s18, 3
        %s255 = scalar_select %p254, %s18, 3
        %p256 = scmp.lt.s32.totalorder %s253, 3
        %s257 = scalar_select %p256, %s253, 3
        %s258 = smul.addr %s255, 4
        %s259 = sadd.s32 %s257, %s258
        %s260 = smul.addr %s259, 2
        %s261 = scalar_lea.vmem %s3, %s260
        %s262 = smul.u32 2, %s19
        %v264 = vld [vmem:[%s252] sm:$0x3]
        %v265 = vld [vmem:[%s219] sm:$0xff]
        %v266 = vld [vmem:[%s219 + $0x8] sm:$0xff]
        %v267 = vld [vmem:[%s219 + $0x10] sm:$0xff]
        %v268 = vld [vmem:[%s219 + $0x18] sm:$0xff]
        %v269 = vld [vmem:[%s2] sm:$0xf]
        %271 = vset.pattern.permute.xlu0 0
        %272 = vperm.xlu0 %271, %v269
        %v273 = vpop.permute.xlu0 %272
        %v279 = vunpack.c.l.b16 %v265
        %v280 = vunpack.c.h.b16 %v265
        %v281 = vunpack.c.l.b16 %v266
        %v282 = vunpack.c.h.b16 %v266
        %v283 = vunpack.c.l.b16 %v267
        %v284 = vunpack.c.h.b16 %v267
        %v285 = vunpack.c.l.b16 %v268
        %v286 = vunpack.c.h.b16 %v268
        %v287 = vpack.c.b16 %v281, %v279
        %v288 = vpack.c.b16 %v282, %v280
        %v289 = vpack.c.b16 %v285, %v283
        %v290 = vpack.c.b16 %v286, %v284
        %vm295 = vcmask 261120
        %v297 = vsel %vm295, %v264, 0
        %299 = vmatprep.subr.bf16.mxu0 %v288
        %300 = vmatpush1.bf16.msra.mxu0 %v287
        %301 = vmatprep.subr.bf16.mxu0 %v290
        %302 = vmatpush1.bf16.msra.mxu0 %v289
        %303 = vmatprep.subr.bf16.mxu0 0
        %304 = vmatpush1.bf16.msra.mxu0 0
        %305 = vmatprep.subr.bf16.mxu0 0
        %306 = vmatpush1.bf16.msra.mxu0 0
        %307 = vmatprep.subr.bf16.mxu0 0
        %308 = vmatpush1.bf16.msra.mxu0 0
        %309 = vmatprep.subr.bf16.mxu0 0
        %310 = vmatpush1.bf16.msra.mxu0 0
        %311 = vmatprep.subr.bf16.mxu0 0
        %312 = vmatpush1.bf16.msra.mxu0 0
        %313 = vmatprep.subr.bf16.mxu0 0
        %314 = vmatpush1.bf16.msra.mxu0 0
        %315 = vmatprep.subr.bf16.mxu0 0
        %316 = vmatpush1.bf16.msra.mxu0 0
        %317 = vmatprep.subr.bf16.mxu0 0
        %318 = vmatpush1.bf16.msra.mxu0 0
        %319 = vmatprep.subr.bf16.mxu0 0
        %320 = vmatpush1.bf16.msra.mxu0 0
        %321 = vmatprep.subr.bf16.mxu0 0
        %322 = vmatpush1.bf16.msra.mxu0 0
        %323 = vmatprep.subr.bf16.mxu0 0
        %324 = vmatpush1.bf16.msra.mxu0 0
        %325 = vmatprep.subr.bf16.mxu0 0
        %326 = vmatpush1.bf16.msra.mxu0 0
        %327 = vmatprep.subr.bf16.mxu0 0
        %328 = vmatpush1.bf16.msra.mxu0 0
        %329 = vmatprep.subr.bf16.mxu0 0
        %330 = vmatpush1.bf16.msra.mxu0 0
        %331 = vmatprep.mubr.bf16.mxu0 0
        %332 = vmatmul.mubr.bf16.gmra.mrb[0].mxu0 %v297
        %v333 = vpop.f32.mrb[0].mxu0
        %v334 = vadd.f32 %v273, %v333
        %v335 = vpop.f32.mrb[0].mxu0
        %v336 = vadd.f32 %v273, %v335
        %v337 = vpop.f32.mrb[0].mxu0
        %v338 = vpop.f32.mrb[0].mxu0
        %339 = vdwg.mxu0
        %v340 = vpack.c.bf16 %v334, %v334
        %v341 = vpack.c.bf16 %v336, %v336
        %v344 = vcombine.low %v340, %v341
        %v346 = vunpack.c.l.s4 1983009808
        %v347 = vunpack.c.0.s8 %v346
        %v348 = vlaneseq
        %v349 = vshrl.u32 %v348, 7
        %v350 = vsub.s32 %v347, %v349
        %v351 = vrot.slane %v344, %v350
        %353 = vst [vmem:[%s261] sm:$0xf] %v351
        %s354 = smul.u32 2, %s19
        %p355 = scmp.lt.s32.totalorder %s18, 3
        %s356 = scalar_select %p355, %s18, 3
        %p357 = scmp.lt.s32.totalorder %s354, 3
        %s358 = scalar_select %p357, %s354, 3
        %s359 = smul.addr %s356, 4
        %s360 = sadd.s32 %s358, %s359
        %s361 = smul.addr %s360, 2
        %s362 = scalar_lea.vmem %s3, %s361
        // Predicated region
        $region71: #{unet_up3_forward.5} parent=65 // pred_check
          %p363 = pneg %p121
        $region72: #{unet_up3_forward.5} parent=65 // pred_check_branch
          %365 = sbr.rel (%p363) target = $region74
        $region73: #{unet_up3_forward.5} parent=65 // pred_region
          %s366 = smul.u32 2, %s19
        $region74: #{unet_up3_forward.5} parent=65 // pred_fallthru
          _
      $region66: #{unet_up3_forward.5} parent=5 // pred_fallthru
        _
      %p367 = scmp.le.s32.totalorder 2, %s9
      // Predicated region
      $region75: #{unet_up3_forward.5} parent=5 // pred_check
        %p368 = pneg %p367
      $region76: #{unet_up3_forward.5} parent=5 // pred_check_branch
        %370 = sbr.rel (%p368) target = $region78
      $region77: #{unet_up3_forward.5} parent=5 // pred_region
        %s371 = ssub.s32 %s9, 2
        // Predicated region
        $region79: #{unet_up3_forward.5} parent=77 // pred_check
          %p372 = pneg %p127
        $region80: #{unet_up3_forward.5} parent=77 // pred_check_branch
          %374 = sbr.rel (%p372) target = $region82
        $region81: #{unet_up3_forward.5} parent=77 // pred_region
          %s375 = smul.u32 2, %s21
          %p376 = scmp.lt.s32.totalorder %s20, 3
          %s377 = scalar_select %p376, %s20, 3
          %p378 = scmp.lt.s32.totalorder %s375, 3
          %s379 = scalar_select %p378, %s375, 3
          %s380 = smul.addr %s377, 4
          %s381 = sadd.s32 %s379, %s380
          %s382 = smul.addr %s381, 2
          %s383 = scalar_lea.vmem %s3, %s382
        $region82: #{unet_up3_forward.5} parent=77 // pred_fallthru
          _
      $region78: #{unet_up3_forward.5} parent=5 // pred_fallthru
        _
    $region6: #{unet_up3_forward.5} parent=1 // loop_footer
      %s13 = sadd.s32 1, %s9
    $region7: #{unet_up3_forward.5} parent=1 // loop_footer_branch
      %8 = sbr.rel target = $region3
    $region8: #{unet_up3_forward.5} parent=1 // loop_exit
      _

// kernel: unet_up3_forward.6
$region0: #{unet_up3_forward.6}
  #allocation0 [shape = 'u32[]', space=smem, size = 0x4, offset = 0x4, fixed_abs, tag = 'smem constant byte address 0x4 - core index']
  #allocation1 [shape = 'u32[144,128]{1,0:T(1,128)}', space=vmem, size = 0x12000, scoped, tag = 'internal scratch']
  %s0 = inlined_call_operand.vmem [shape: bf16[36,2048], index: 0, kind: input, shape index: {}]
  %s1 = inlined_call_operand.vmem [shape: bf16[36,2048], index: 1, kind: input, shape index: {}]
  %s2 = inlined_call_operand.vmem [shape: bf16[4,36], index: 2, kind: input, shape index: {}]
  %s3 = inlined_call_operand.vmem [shape: bf16[4,36], index: 3, kind: input, shape index: {}]
  %s4 = inlined_call_operand.vmem [shape: bf16[4,2048], index: 4, kind: output, shape index: {0}]
  %s5 = inlined_call_operand.vmem [shape: f32[4,256], index: 5, kind: output, shape index: {1}]
  %s6 = inlined_call_operand.vmem [shape: f32[4,256], index: 6, kind: output, shape index: {2}]
  %7 = xla_tuple %s4, %s5, %s6
  %s8 = sld [smem:[#allocation0]]
  $region111: #{unet_up3_forward.6} parent=0
    _
  %s10 = ssub.s32 1, %s8
  %s11 = scalar_select 0, %s10, %s8
  $region1: #{unet_up3_forward.6} parent=0
    #allocation2 [shape = 'u8[163840]{0}', space=vmem, size = 0x28000, scoped, tag = 'input window, operand 0']
    #allocation3 [shape = 'u8[163840]{0}', space=vmem, size = 0x28000, scoped, tag = 'input window, operand 1']
    loop: start=0, step=1, limit=4
    $region2: #{unet_up3_forward.6} parent=1 // loop_pre_header
      _
    $region3: #{unet_up3_forward.6} parent=1 // loop_header
      %s13 = sphi 0, %s17
      %p14 = scmp.ge.s32.totalorder %s13, 4
      %s23 = sphi 0, %s25
      %s26 = sphi 0, %s23
      %s27 = sphi 0, %s26
      %s43 = sphi 0, %s27
      %s49 = sphi 0, %s51
      %s52 = sphi 0, %s49
      %s53 = sphi 0, %s52
      %s69 = sphi 0, %s53
      %s73 = sphi 0, %s73
      %s75 = sphi 0, %s73
      %s76 = sphi 0, %s75
      %s90 = sphi 0, %s76
      %s94 = sphi 0, %s94
      %s96 = sphi 0, %s94
      %s97 = sphi 0, %s96
      %s111 = sphi 0, %s97
      %s117 = sphi 0, %s119
      %s120 = sphi 0, %s117
      %s121 = sphi 0, %s120
      %s137 = sphi 0, %s121
      %s143 = sphi 0, %s145
      %s146 = sphi 0, %s143
      %s147 = sphi 0, %s146
      %s163 = sphi 0, %s147
      %s169 = sphi 0, %s171
      %s172 = sphi 0, %s169
      %s173 = sphi 0, %s172
      %s189 = sphi 0, %s173
    $region4: #{unet_up3_forward.6} parent=1 // loop_header_branch
      %16 = sbr.rel (%p14) target = $region8
    $region5: #{unet_up3_forward.6} parent=1 // loop_body
      %s18 = ssub.s32 %s13, 1
      %s19 = ssub.s32 %s13, 2
      %s20 = sadd.s32 %s13, 1
      %s21 = ssub.s32 %s13, %s20
      %p22 = scmp.eq.s32.totalorder %s21, 0
      %s24 = sadd.s32 %s23, 1
      %s25 = scalar_select %p22, %s23, %s24
      %p28 = pneg %p22
      %p29 = scmp.eq.s32.totalorder %s13, 1
      %p30 = por %p28, %p29
      %p31 = scmp.ne.s32.totalorder %s23, %s26
      %p32 = scmp.eq.s32.totalorder %s13, 0
      %p33 = por %p31, %p32
      %p34 = scmp.ne.s32.totalorder %s23, %s26
      %p35 = scmp.eq.s32.totalorder %s18, 1
      %p36 = por %p34, %p35
      %p37 = scmp.ne.s32.totalorder %s26, %s27
      %p38 = scmp.eq.s32.totalorder %s18, 0
      %p39 = por %p37, %p38
      %p40 = scmp.ne.s32.totalorder %s26, %s27
      %p41 = scmp.eq.s32.totalorder %s19, 1
      %p42 = por %p40, %p41
      %p44 = scmp.ne.s32.totalorder %s27, %s43
      %p45 = scmp.eq.s32.totalorder %s19, 0
      %p46 = por %p44, %p45
      %s47 = ssub.s32 %s13, %s20
      %p48 = scmp.eq.s32.totalorder %s47, 0
      %s50 = sadd.s32 %s49, 1
      %s51 = scalar_select %p48, %s49, %s50
      %p54 = pneg %p48
      %p55 = scmp.eq.s32.totalorder %s13, 1
      %p56 = por %p54, %p55
      %p57 = scmp.ne.s32.totalorder %s49, %s52
      %p58 = scmp.eq.s32.totalorder %s13, 0
      %p59 = por %p57, %p58
      %p60 = scmp.ne.s32.totalorder %s49, %s52
      %p61 = scmp.eq.s32.totalorder %s18, 1
      %p62 = por %p60, %p61
      %p63 = scmp.ne.s32.totalorder %s52, %s53
      %p64 = scmp.eq.s32.totalorder %s18, 0
      %p65 = por %p63, %p64
      %p66 = scmp.ne.s32.totalorder %s52, %s53
      %p67 = scmp.eq.s32.totalorder %s19, 1
      %p68 = por %p66, %p67
      %p70 = scmp.ne.s32.totalorder %s53, %s69
      %p71 = scmp.eq.s32.totalorder %s19, 0
      %p72 = por %p70, %p71
      %s74 = sadd.s32 %s73, 1
      %p77 = scmp.eq.s32.totalorder %s13, 1
      %p78 = scmp.ne.s32.totalorder %s73, %s75
      %p79 = scmp.eq.s32.totalorder %s13, 0
      %p80 = por %p78, %p79
      %p81 = scmp.ne.s32.totalorder %s73, %s75
      %p82 = scmp.eq.s32.totalorder %s18, 1
      %p83 = por %p81, %p82
      %p84 = scmp.ne.s32.totalorder %s75, %s76
      %p85 = scmp.eq.s32.totalorder %s18, 0
      %p86 = por %p84, %p85
      %p87 = scmp.ne.s32.totalorder %s75, %s76
      %p88 = scmp.eq.s32.totalorder %s19, 1
      %p89 = por %p87, %p88
      %p91 = scmp.ne.s32.totalorder %s76, %s90
      %p92 = scmp.eq.s32.totalorder %s19, 0
      %p93 = por %p91, %p92
      %s95 = sadd.s32 %s94, 1
      %p98 = scmp.eq.s32.totalorder %s13, 1
      %p99 = scmp.ne.s32.totalorder %s94, %s96
      %p100 = scmp.eq.s32.totalorder %s13, 0
      %p101 = por %p99, %p100
      %p102 = scmp.ne.s32.totalorder %s94, %s96
      %p103 = scmp.eq.s32.totalorder %s18, 1
      %p104 = por %p102, %p103
      %p105 = scmp.ne.s32.totalorder %s96, %s97
      %p106 = scmp.eq.s32.totalorder %s18, 0
      %p107 = por %p105, %p106
      %p108 = scmp.ne.s32.totalorder %s96, %s97
      %p109 = scmp.eq.s32.totalorder %s19, 1
      %p110 = por %p108, %p109
      %p112 = scmp.ne.s32.totalorder %s97, %s111
      %p113 = scmp.eq.s32.totalorder %s19, 0
      %p114 = por %p112, %p113
      %s115 = ssub.s32 %s13, %s20
      %p116 = scmp.eq.s32.totalorder %s115, 0
      %s118 = sadd.s32 %s117, 1
      %s119 = scalar_select %p116, %s117, %s118
      %p122 = pneg %p116
      %p123 = scmp.eq.s32.totalorder %s13, 1
      %p124 = por %p122, %p123
      %p125 = scmp.ne.s32.totalorder %s117, %s120
      %p126 = scmp.eq.s32.totalorder %s13, 0
      %p127 = por %p125, %p126
      %p128 = scmp.ne.s32.totalorder %s117, %s120
      %p129 = scmp.eq.s32.totalorder %s18, 1
      %p130 = por %p128, %p129
      %p131 = scmp.ne.s32.totalorder %s120, %s121
      %p132 = scmp.eq.s32.totalorder %s18, 0
      %p133 = por %p131, %p132
      %p134 = scmp.ne.s32.totalorder %s120, %s121
      %p135 = scmp.eq.s32.totalorder %s19, 1
      %p136 = por %p134, %p135
      %p138 = scmp.ne.s32.totalorder %s121, %s137
      %p139 = scmp.eq.s32.totalorder %s19, 0
      %p140 = por %p138, %p139
      %s141 = ssub.s32 %s13, %s20
      %p142 = scmp.eq.s32.totalorder %s141, 0
      %s144 = sadd.s32 %s143, 1
      %s145 = scalar_select %p142, %s143, %s144
      %p148 = pneg %p142
      %p149 = scmp.eq.s32.totalorder %s13, 1
      %p150 = por %p148, %p149
      %p151 = scmp.ne.s32.totalorder %s143, %s146
      %p152 = scmp.eq.s32.totalorder %s13, 0
      %p153 = por %p151, %p152
      %p154 = scmp.ne.s32.totalorder %s143, %s146
      %p155 = scmp.eq.s32.totalorder %s18, 1
      %p156 = por %p154, %p155
      %p157 = scmp.ne.s32.totalorder %s146, %s147
      %p158 = scmp.eq.s32.totalorder %s18, 0
      %p159 = por %p157, %p158
      %p160 = scmp.ne.s32.totalorder %s146, %s147
      %p161 = scmp.eq.s32.totalorder %s19, 1
      %p162 = por %p160, %p161
      %p164 = scmp.ne.s32.totalorder %s147, %s163
      %p165 = scmp.eq.s32.totalorder %s19, 0
      %p166 = por %p164, %p165
      %s167 = ssub.s32 %s13, %s20
      %p168 = scmp.eq.s32.totalorder %s167, 0
      %s170 = sadd.s32 %s169, 1
      %s171 = scalar_select %p168, %s169, %s170
      %p174 = pneg %p168
      %p175 = scmp.eq.s32.totalorder %s13, 1
      %p176 = por %p174, %p175
      %p177 = scmp.ne.s32.totalorder %s169, %s172
      %p178 = scmp.eq.s32.totalorder %s13, 0
      %p179 = por %p177, %p178
      %p180 = scmp.ne.s32.totalorder %s169, %s172
      %p181 = scmp.eq.s32.totalorder %s18, 1
      %p182 = por %p180, %p181
      %p183 = scmp.ne.s32.totalorder %s172, %s173
      %p184 = scmp.eq.s32.totalorder %s18, 0
      %p185 = por %p183, %p184
      %p186 = scmp.ne.s32.totalorder %s172, %s173
      %p187 = scmp.eq.s32.totalorder %s19, 1
      %p188 = por %p186, %p187
      %p190 = scmp.ne.s32.totalorder %s173, %s189
      %p191 = scmp.eq.s32.totalorder %s19, 0
      %p192 = por %p190, %p191
      %p193 = scmp.le.s32.totalorder 1, %s13
      %p194 = scmp.lt.s32.totalorder %s13, 3
      %p195 = pnand %p193, %p194
      %p196 = pneg %p195
      // Predicated region
      $region9: #{unet_up3_forward.6} parent=5 // pred_check
        _
      $region10: #{unet_up3_forward.6} parent=5 // pred_check_branch
        %198 = sbr.rel (%p195) target = $region12
      $region11: #{unet_up3_forward.6} parent=5 // pred_region
        %s199 = ssub.s32 %s13, 1
        // Predicated region
        $region13: #{unet_up3_forward.6} parent=11 // pred_check
          %p200 = pneg %p86
        $region14: #{unet_up3_forward.6} parent=11 // pred_check_branch
          %202 = sbr.rel (%p200) target = $region16
        $region15: #{unet_up3_forward.6} parent=11 // pred_region
          _
        $region16: #{unet_up3_forward.6} parent=11 // pred_fallthru
          _
        // Predicated region
        $region17: #{unet_up3_forward.6} parent=11 // pred_check
          %p203 = pneg %p107
        $region18: #{unet_up3_forward.6} parent=11 // pred_check_branch
          %205 = sbr.rel (%p203) target = $region20
        $region19: #{unet_up3_forward.6} parent=11 // pred_region
          _
        $region20: #{unet_up3_forward.6} parent=11 // pred_fallthru
          _
      $region12: #{unet_up3_forward.6} parent=5 // pred_fallthru
        _
      %p206 = scmp.lt.s32.totalorder %s13, 2
      // Predicated region
      $region21: #{unet_up3_forward.6} parent=5 // pred_check
        %p207 = pneg %p206
      $region22: #{unet_up3_forward.6} parent=5 // pred_check_branch
        %209 = sbr.rel (%p207) target = $region24
      $region23: #{unet_up3_forward.6} parent=5 // pred_region
        // Predicated region
        $region25: #{unet_up3_forward.6} parent=23 // pred_check
          %p210 = pneg %p33
        $region26: #{unet_up3_forward.6} parent=23 // pred_check_branch
          %212 = sbr.rel (%p210) target = $region28
        $region27: #{unet_up3_forward.6} parent=23 // pred_region
          %s213 = sand.u32 %s23, 1
          %s214 = sand.u32 %s23, 1
          %s215 = smul.addr %s214, 160
          %s216 = scalar_lea.vmem [#allocation2], %s215
          %s217 = smul.u32 8, %s13
          %s218 = smul.addr %s217, 4
          %s219 = scalar_lea.vmem %s0, %s218
          // Predicated region
          $region29: #{unet_up3_forward.6} parent=27 // pred_check
            _
          $region30: #{unet_up3_forward.6} parent=27 // pred_check_branch
            %221 = sbr.rel (0) target = $region32
          $region31: #{unet_up3_forward.6} parent=27 // pred_region
            // Predicated region
            $region33: #{unet_up3_forward.6} parent=31 // pred_check
              _
            $region34: #{unet_up3_forward.6} parent=31 // pred_check_branch
              %223 = sbr.rel (0) target = $region36
            $region35: #{unet_up3_forward.6} parent=31 // pred_region
              loop: start=0, step=1, limit=1
              $region37: #{unet_up3_forward.6} parent=35 // loop_pre_header
                _
              $region38: #{unet_up3_forward.6} parent=35 // loop_header
                %s225 = sphi 0, %s229
                %p226 = scmp.ge.s32.totalorder %s225, 1
                %s230 = sphi %s219, %s219
                %s231 = sphi %s216, %s216
              $region39: #{unet_up3_forward.6} parent=35 // loop_header_branch
                %228 = sbr.rel (%p226) target = $region43
              $region40: #{unet_up3_forward.6} parent=35 // loop_body
                %v232 = vld [vmem:[%s230] sm:$0xff]
                %233 = vst [vmem:[%s231] sm:$0xff] %v232
                %v234 = vld [vmem:[%s230 + $0x8] sm:$0xff]
                %235 = vst [vmem:[%s231 + $0x8] sm:$0xff] %v234
                %v236 = vld [vmem:[%s230 + $0x10] sm:$0xff]
                %237 = vst [vmem:[%s231 + $0x10] sm:$0xff] %v236
                %v238 = vld [vmem:[%s230 + $0x18] sm:$0xff]
                %239 = vst [vmem:[%s231 + $0x18] sm:$0xff] %v238
                %v240 = vld [vmem:[%s230 + $0x40] sm:$0xff]
                %241 = vst [vmem:[%s231 + $0x20] sm:$0xff] %v240
                %v242 = vld [vmem:[%s230 + $0x48] sm:$0xff]
                %243 = vst [vmem:[%s231 + $0x28] sm:$0xff] %v242
                %v244 = vld [vmem:[%s230 + $0x50] sm:$0xff]
                %245 = vst [vmem:[%s231 + $0x30] sm:$0xff] %v244
                %v246 = vld [vmem:[%s230 + $0x58] sm:$0xff]
                %247 = vst [vmem:[%s231 + $0x38] sm:$0xff] %v246
                %v248 = vld [vmem:[%s230 + $0x80] sm:$0xff]
                %249 = vst [vmem:[%s231 + $0x40] sm:$0xff] %v248
                %v250 = vld [vmem:[%s230 + $0x88] sm:$0xff]
                %251 = vst [vmem:[%s231 + $0x48] sm:$0xff] %v250
                %v252 = vld [vmem:[%s230 + $0x90] sm:$0xff]
                %253 = vst [vmem:[%s231 + $0x50] sm:$0xff] %v252
                %v254 = vld [vmem:[%s230 + $0x98] sm:$0xff]
                %255 = vst [vmem:[%s231 + $0x58] sm:$0xff] %v254
                %v256 = vld [vmem:[%s230 + $0xc0] sm:$0xff]
                %257 = vst [vmem:[%s231 + $0x60] sm:$0xff] %v256
                %v258 = vld [vmem:[%s230 + $0xc8] sm:$0xff]
                %259 = vst [vmem:[%s231 + $0x68] sm:$0xff] %v258
                %v260 = vld [vmem:[%s230 + $0xd0] sm:$0xff]
                %261 = vst [vmem:[%s231 + $0x70] sm:$0xff] %v260
                %v262 = vld [vmem:[%s230 + $0xd8] sm:$0xff]
                %263 = vst [vmem:[%s231 + $0x78] sm:$0xff] %v262
                %v264 = vld [vmem:[%s230 + $0x100] sm:$0xff]
                %265 = vst [vmem:[%s231 + $0x80] sm:$0xff] %v264
                %v266 = vld [vmem:[%s230 + $0x108] sm:$0xff]
                %267 = vst [vmem:[%s231 + $0x88] sm:$0xff] %v266
                %v268 = vld [vmem:[%s230 + $0x110] sm:$0xff]
                %269 = vst [vmem:[%s231 + $0x90] sm:$0xff] %v268
                %v270 = vld [vmem:[%s230 + $0x118] sm:$0xff]
                %271 = vst [vmem:[%s231 + $0x98] sm:$0xff] %v270
              $region41: #{unet_up3_forward.6} parent=35 // loop_footer
                %s229 = sadd.s32 1, %s225
              $region42: #{unet_up3_forward.6} parent=35 // loop_footer_branch
                %224 = sbr.rel target = $region38
              $region43: #{unet_up3_forward.6} parent=35 // loop_exit
                _
            $region36: #{unet_up3_forward.6} parent=31 // pred_fallthru
              _
            // Predicated region
            $region44: #{unet_up3_forward.6} parent=31 // pred_check
              _
            $region45: #{unet_up3_forward.6} parent=31 // pred_check_branch
              %273 = sbr.rel target = $region47
            $region46: #{unet_up3_forward.6} parent=31 // pred_region
              _
            $region47: #{unet_up3_forward.6} parent=31 // pred_fallthru
              _
          $region32: #{unet_up3_forward.6} parent=27 // pred_fallthru
            _
          %274 = vnop
        $region28: #{unet_up3_forward.6} parent=23 // pred_fallthru
          _
        // Predicated region
        $region48: #{unet_up3_forward.6} parent=23 // pred_check
          %p275 = pneg %p59
        $region49: #{unet_up3_forward.6} parent=23 // pred_check_branch
          %277 = sbr.rel (%p275) target = $region51
        $region50: #{unet_up3_forward.6} parent=23 // pred_region
          %s278 = sand.u32 %s49, 1
          %s279 = sand.u32 %s49, 1
          %s280 = smul.addr %s279, 160
          %s281 = scalar_lea.vmem [#allocation3], %s280
          %s282 = smul.u32 8, %s13
          %s283 = smul.addr %s282, 4
          %s284 = scalar_lea.vmem %s1, %s283
          // Predicated region
          $region52: #{unet_up3_forward.6} parent=50 // pred_check
            _
          $region53: #{unet_up3_forward.6} parent=50 // pred_check_branch
            %286 = sbr.rel (0) target = $region55
          $region54: #{unet_up3_forward.6} parent=50 // pred_region
            // Predicated region
            $region56: #{unet_up3_forward.6} parent=54 // pred_check
              _
            $region57: #{unet_up3_forward.6} parent=54 // pred_check_branch
              %288 = sbr.rel (0) target = $region59
            $region58: #{unet_up3_forward.6} parent=54 // pred_region
              loop: start=0, step=1, limit=1
              $region60: #{unet_up3_forward.6} parent=58 // loop_pre_header
                _
              $region61: #{unet_up3_forward.6} parent=58 // loop_header
                %s290 = sphi 0, %s294
                %p291 = scmp.ge.s32.totalorder %s290, 1
                %s295 = sphi %s284, %s284
                %s296 = sphi %s281, %s281
              $region62: #{unet_up3_forward.6} parent=58 // loop_header_branch
                %293 = sbr.rel (%p291) target = $region66
              $region63: #{unet_up3_forward.6} parent=58 // loop_body
                %v297 = vld [vmem:[%s295] sm:$0xff]
                %298 = vst [vmem:[%s296] sm:$0xff] %v297
                %v299 = vld [vmem:[%s295 + $0x8] sm:$0xff]
                %300 = vst [vmem:[%s296 + $0x8] sm:$0xff] %v299
                %v301 = vld [vmem:[%s295 + $0x10] sm:$0xff]
                %302 = vst [vmem:[%s296 + $0x10] sm:$0xff] %v301
                %v303 = vld [vmem:[%s295 + $0x18] sm:$0xff]
                %304 = vst [vmem:[%s296 + $0x18] sm:$0xff] %v303
                %v305 = vld [vmem:[%s295 + $0x40] sm:$0xff]
                %306 = vst [vmem:[%s296 + $0x20] sm:$0xff] %v305
                %v307 = vld [vmem:[%s295 + $0x48] sm:$0xff]
                %308 = vst [vmem:[%s296 + $0x28] sm:$0xff] %v307
                %v309 = vld [vmem:[%s295 + $0x50] sm:$0xff]
                %310 = vst [vmem:[%s296 + $0x30] sm:$0xff] %v309
                %v311 = vld [vmem:[%s295 + $0x58] sm:$0xff]
                %312 = vst [vmem:[%s296 + $0x38] sm:$0xff] %v311
                %v313 = vld [vmem:[%s295 + $0x80] sm:$0xff]
                %314 = vst [vmem:[%s296 + $0x40] sm:$0xff] %v313
                %v315 = vld [vmem:[%s295 + $0x88] sm:$0xff]
                %316 = vst [vmem:[%s296 + $0x48] sm:$0xff] %v315
                %v317 = vld [vmem:[%s295 + $0x90] sm:$0xff]
                %318 = vst [vmem:[%s296 + $0x50] sm:$0xff] %v317
                %v319 = vld [vmem:[%s295 + $0x98] sm:$0xff]
                %320 = vst [vmem:[%s296 + $0x58] sm:$0xff] %v319
                %v321 = vld [vmem:[%s295 + $0xc0] sm:$0xff]
                %322 = vst [vmem:[%s296 + $0x60] sm:$0xff] %v321
                %v323 = vld [vmem:[%s295 + $0xc8] sm:$0xff]
                %324 = vst [vmem:[%s296 + $0x68] sm:$0xff] %v323
                %v325 = vld [vmem:[%s295 + $0xd0] sm:$0xff]
                %326 = vst [vmem:[%s296 + $0x70] sm:$0xff] %v325
                %v327 = vld [vmem:[%s295 + $0xd8] sm:$0xff]
                %328 = vst [vmem:[%s296 + $0x78] sm:$0xff] %v327
                %v329 = vld [vmem:[%s295 + $0x100] sm:$0xff]
                %330 = vst [vmem:[%s296 + $0x80] sm:$0xff] %v329
                %v331 = vld [vmem:[%s295 + $0x108] sm:$0xff]
                %332 = vst [vmem:[%s296 + $0x88] sm:$0xff] %v331
                %v333 = vld [vmem:[%s295 + $0x110] sm:$0xff]
                %334 = vst [vmem:[%s296 + $0x90] sm:$0xff] %v333
                %v335 = vld [vmem:[%s295 + $0x118] sm:$0xff]
                %336 = vst [vmem:[%s296 + $0x98] sm:$0xff] %v335
              $region64: #{unet_up3_forward.6} parent=58 // loop_footer
                %s294 = sadd.s32 1, %s290
              $region65: #{unet_up3_forward.6} parent=58 // loop_footer_branch
                %289 = sbr.rel target = $region61
              $region66: #{unet_up3_forward.6} parent=58 // loop_exit
                _
            $region59: #{unet_up3_forward.6} parent=54 // pred_fallthru
              _
            // Predicated region
            $region67: #{unet_up3_forward.6} parent=54 // pred_check
              _
            $region68: #{unet_up3_forward.6} parent=54 // pred_check_branch
              %338 = sbr.rel target = $region70
            $region69: #{unet_up3_forward.6} parent=54 // pred_region
              _
            $region70: #{unet_up3_forward.6} parent=54 // pred_fallthru
              _
          $region55: #{unet_up3_forward.6} parent=50 // pred_fallthru
            _
          %339 = vnop
        $region51: #{unet_up3_forward.6} parent=23 // pred_fallthru
          _
      $region24: #{unet_up3_forward.6} parent=5 // pred_fallthru
        _
      %p340 = scmp.le.s32.totalorder 1, %s13
      %p341 = scmp.lt.s32.totalorder %s13, 3
      %p342 = pnand %p340, %p341
      %p343 = pneg %p342
      // Predicated region
      $region71: #{unet_up3_forward.6} parent=5 // pred_check
        _
      $region72: #{unet_up3_forward.6} parent=5 // pred_check_branch
        %345 = sbr.rel (%p342) target = $region74
      $region73: #{unet_up3_forward.6} parent=5 // pred_region
        %s346 = ssub.s32 %s13, 1
        %s347 = sand.u32 %s26, 1
        %s348 = sand.u32 %s26, 1
        %s349 = smul.addr %s348, 160
        %s350 = scalar_lea.vmem [#allocation2], %s349
        // Predicated region
        $region75: #{unet_up3_forward.6} parent=73 // pred_check
          %p351 = pneg %p39
        $region76: #{unet_up3_forward.6} parent=73 // pred_check_branch
          %353 = sbr.rel (%p351) target = $region78
        $region77: #{unet_up3_forward.6} parent=73 // pred_region
          _
        $region78: #{unet_up3_forward.6} parent=73 // pred_fallthru
          _
        %s354 = sand.u32 %s52, 1
        %s355 = sand.u32 %s52, 1
        %s356 = smul.addr %s355, 160
        %s357 = scalar_lea.vmem [#allocation3], %s356
        // Predicated region
        $region79: #{unet_up3_forward.6} parent=73 // pred_check
          %p358 = pneg %p65
        $region80: #{unet_up3_forward.6} parent=73 // pred_check_branch
          %360 = sbr.rel (%p358) target = $region82
        $region81: #{unet_up3_forward.6} parent=73 // pred_region
          _
        $region82: #{unet_up3_forward.6} parent=73 // pred_fallthru
          _
        %s361 = sand.u32 %s26, 1
        %s362 = sand.u32 %s26, 1
        %s363 = smul.addr %s362, 160
        %s364 = scalar_lea.vmem [#allocation2], %s363
        %p365 = pneg %p39
        %p366 = pneg %p36
        %s367 = sand.u32 %s52, 1
        %s368 = sand.u32 %s52, 1
        %s369 = smul.addr %s368, 160
        %s370 = scalar_lea.vmem [#allocation3], %s369
        %p371 = pneg %p65
        %p372 = pneg %p62
        %p373 = pneg %p86
        %p374 = pneg %p83
        %p375 = pneg %p107
        %p376 = pneg %p104
        %p377 = pneg %p133
        %p378 = pneg %p130
        %s379 = smul.u32 8, %s18
        %p380 = scmp.lt.s32.totalorder %s379, 15
        %s381 = scalar_select %p380, %s379, 15
        %s382 = smul.addr %s381, 2
        %s383 = scalar_lea.vmem %s4, %s382
        %p384 = pneg %p159
        %p385 = pneg %p156
        %p386 = scmp.lt.s32.totalorder %s18, 1
        %s387 = scalar_select %p386, %s18, 1
        %s388 = smul.addr %s387, 4
        %s389 = scalar_lea.vmem %s5, %s388
        %p390 = pneg %p185
        %p391 = pneg %p182
        %p392 = scmp.lt.s32.totalorder %s18, 1
        %s393 = scalar_select %p392, %s18, 1
        %s394 = smul.addr %s393, 4
        %s395 = scalar_lea.vmem %s6, %s394
        %s396 = smul.u32 8, %s18
        %s397 = smul.u32 8, %s18
        %s398 = smul.u32 8, %s18
        %p399 = scmp.lt.s32.totalorder %s398, 15
        %s400 = scalar_select %p399, %s398, 15
        %s401 = smul.addr %s400, 2
        %s402 = scalar_lea.vmem %s4, %s401
        %s403 = smul.u32 8, %s18
        %p404 = scmp.lt.s32.totalorder %s18, 1
        %s405 = scalar_select %p404, %s18, 1
        %s406 = smul.addr %s405, 4
        %s407 = scalar_lea.vmem %s5, %s406
        %p408 = scmp.lt.s32.totalorder %s18, 1
        %s409 = scalar_select %p408, %s18, 1
        %s410 = smul.addr %s409, 4
        %s411 = scalar_lea.vmem %s6, %s410
        %v413 = vld [vmem:[%s2] sm:$0x3]
        %v414 = vld [vmem:[%s350] sm:$0xff]
        %v415 = vld [vmem:[%s350 + $0x8] sm:$0xff]
        %v416 = vld [vmem:[%s350 + $0x10] sm:$0xff]
        %v417 = vld [vmem:[%s350 + $0x18] sm:$0xff]
        %v418 = vld [vmem:[%s350 + $0x20] sm:$0xff]
        %v419 = vld [vmem:[%s350 + $0x28] sm:$0xff]
        %v420 = vld [vmem:[%s350 + $0x30] sm:$0xff]
        %v421 = vld [vmem:[%s350 + $0x38] sm:$0xff]
        %v422 = vld [vmem:[%s350 + $0x40] sm:$0xff]
        %v423 = vld [vmem:[%s350 + $0x48] sm:$0xff]
        %v424 = vld [vmem:[%s350 + $0x50] sm:$0xff]
        %v425 = vld [vmem:[%s350 + $0x58] sm:$0xff]
        %v426 = vld [vmem:[%s350 + $0x60] sm:$0xff]
        %v427 = vld [vmem:[%s350 + $0x68] sm:$0xff]
        %v428 = vld [vmem:[%s350 + $0x70] sm:$0xff]
        %v429 = vld [vmem:[%s350 + $0x78] sm:$0xff]
        %v430 = vld [vmem:[%s350 + $0x80] sm:$0x33]
        %v431 = vld [vmem:[%s350 + $0x88] sm:$0x33]
        %v432 = vld [vmem:[%s350 + $0x90] sm:$0x33]
        %v433 = vld [vmem:[%s350 + $0x98] sm:$0x33]
        %v434 = vld [vmem:[%s3] sm:$0x3]
        %v435 = vld [vmem:[%s357] sm:$0xff]
        %v436 = vld [vmem:[%s357 + $0x8] sm:$0xff]
        %v437 = vld [vmem:[%s357 + $0x10] sm:$0xff]
        %v438 = vld [vmem:[%s357 + $0x18] sm:$0xff]
        %v439 = vld [vmem:[%s357 + $0x20] sm:$0xff]
        %v440 = vld [vmem:[%s357 + $0x28] sm:$0xff]
        %v441 = vld [vmem:[%s357 + $0x30] sm:$0xff]
        %v442 = vld [vmem:[%s357 + $0x38] sm:$0xff]
        %v443 = vld [vmem:[%s357 + $0x40] sm:$0xff]
        %v444 = vld [vmem:[%s357 + $0x48] sm:$0xff]
        %v445 = vld [vmem:[%s357 + $0x50] sm:$0xff]
        %v446 = vld [vmem:[%s357 + $0x58] sm:$0xff]
        %v447 = vld [vmem:[%s357 + $0x60] sm:$0xff]
        %v448 = vld [vmem:[%s357 + $0x68] sm:$0xff]
        %v449 = vld [vmem:[%s357 + $0x70] sm:$0xff]
        %v450 = vld [vmem:[%s357 + $0x78] sm:$0xff]
        %v451 = vld [vmem:[%s357 + $0x80] sm:$0x33]
        %v452 = vld [vmem:[%s357 + $0x88] sm:$0x33]
        %v453 = vld [vmem:[%s357 + $0x90] sm:$0x33]
        %v454 = vld [vmem:[%s357 + $0x98] sm:$0x33]
        %v475 = vunpack.c.l.b16 %v435
        %v476 = vunpack.c.h.b16 %v435
        %v477 = vunpack.c.l.b16 %v436
        %v478 = vunpack.c.h.b16 %v436
        %v479 = vunpack.c.l.b16 %v437
        %v480 = vunpack.c.h.b16 %v437
        %v481 = vunpack.c.l.b16 %v438
        %v482 = vunpack.c.h.b16 %v438
        %v483 = vunpack.c.l.b16 %v439
        %v484 = vunpack.c.h.b16 %v439
        %v485 = vunpack.c.l.b16 %v440
        %v486 = vunpack.c.h.b16 %v440
        %v487 = vunpack.c.l.b16 %v441
        %v488 = vunpack.c.h.b16 %v441
        %v489 = vunpack.c.l.b16 %v442
        %v490 = vunpack.c.h.b16 %v442
        %v491 = vunpack.c.l.b16 %v443
        %v492 = vunpack.c.h.b16 %v443
        %v493 = vunpack.c.l.b16 %v444
        %v494 = vunpack.c.h.b16 %v444
        %v495 = vunpack.c.l.b16 %v445
        %v496 = vunpack.c.h.b16 %v445
        %v497 = vunpack.c.l.b16 %v446
        %v498 = vunpack.c.h.b16 %v446
        %v499 = vunpack.c.l.b16 %v447
        %v500 = vunpack.c.h.b16 %v447
        %v501 = vunpack.c.l.b16 %v448
        %v502 = vunpack.c.h.b16 %v448
        %v503 = vunpack.c.l.b16 %v449
        %v504 = vunpack.c.h.b16 %v449
        %v505 = vunpack.c.l.b16 %v450
        %v506 = vunpack.c.h.b16 %v450
        %v507 = vunpack.c.l.b16 %v451
        %v508 = vunpack.c.h.b16 %v451
        %v509 = vunpack.c.l.b16 %v452
        %v510 = vunpack.c.h.b16 %v452
        %v511 = vunpack.c.l.b16 %v453
        %v512 = vunpack.c.h.b16 %v453
        %v513 = vunpack.c.l.b16 %v454
        %v514 = vunpack.c.h.b16 %v454
        %v515 = vpack.c.b16 %v483, %v475
        %v516 = vpack.c.b16 %v484, %v476
        %v517 = vpack.c.b16 %v485, %v477
        %v518 = vpack.c.b16 %v486, %v478
        %v519 = vpack.c.b16 %v487, %v479
        %v520 = vpack.c.b16 %v488, %v480
        %v521 = vpack.c.b16 %v489, %v481
        %v522 = vpack.c.b16 %v490, %v482
        %v523 = vpack.c.b16 %v499, %v491
        %v524 = vpack.c.b16 %v500, %v492
        %v525 = vpack.c.b16 %v501, %v493
        %v526 = vpack.c.b16 %v502, %v494
        %v527 = vpack.c.b16 %v503, %v495
        %v528 = vpack.c.b16 %v504, %v496
        %v529 = vpack.c.b16 %v505, %v497
        %v530 = vpack.c.b16 %v506, %v498
        %v531 = vpack.c.b16 %v507, %v507
        %v532 = vpack.c.b16 %v508, %v508
        %v533 = vpack.c.b16 %v509, %v509
        %v534 = vpack.c.b16 %v510, %v510
        %v535 = vpack.c.b16 %v511, %v511
        %v536 = vpack.c.b16 %v512, %v512
        %v537 = vpack.c.b16 %v513, %v513
        %v538 = vpack.c.b16 %v514, %v514
        %vm555 = vcmask 293888
        %v557 = vsel %vm555, %v434, 0
        %vm559 = vcmask 1041408
        %v561 = vsel %vm559, %v531, 0
        %v564 = vsel %vm559, %v532, 0
        %v567 = vsel %vm559, %v533, 0
        %v570 = vsel %vm559, %v534, 0
        %v573 = vsel %vm559, %v535, 0
        %v576 = vsel %vm559, %v536, 0
        %v579 = vsel %vm559, %v537, 0
        %v582 = vsel %vm559, %v538, 0
        %584 = vmatprep.subr.bf16.mxu0 %v516
        %585 = vmatpush1.bf16.msra.mxu0 %v515
        %586 = vmatprep.subr.bf16.mxu0 %v524
        %587 = vmatpush1.bf16.msra.mxu0 %v523
        %588 = vmatprep.subr.bf16.mxu0 %v564
        %589 = vmatpush1.bf16.msra.mxu0 %v561
        %590 = vmatprep.subr.bf16.mxu0 0
        %591 = vmatpush1.bf16.msra.mxu0 0
        %592 = vmatprep.subr.bf16.mxu0 0
        %593 = vmatpush1.bf16.msra.mxu0 0
        %594 = vmatprep.subr.bf16.mxu0 0
        %595 = vmatpush1.bf16.msra.mxu0 0
        %596 = vmatprep.subr.bf16.mxu0 0
        %597 = vmatpush1.bf16.msra.mxu0 0
        %598 = vmatprep.subr.bf16.mxu0 0
        %599 = vmatpush1.bf16.msra.mxu0 0
        %600 = vmatprep.subr.bf16.mxu0 0
        %601 = vmatpush1.bf16.msra.mxu0 0
        %602 = vmatprep.subr.bf16.mxu0 0
        %603 = vmatpush1.bf16.msra.mxu0 0
        %604 = vmatprep.subr.bf16.mxu0 0
        %605 = vmatpush1.bf16.msra.mxu0 0
        %606 = vmatprep.subr.bf16.mxu0 0
        %607 = vmatpush1.bf16.msra.mxu0 0
        %608 = vmatprep.subr.bf16.mxu0 0
        %609 = vmatpush1.bf16.msra.mxu0 0
        %610 = vmatprep.subr.bf16.mxu0 0
        %611 = vmatpush1.bf16.msra.mxu0 0
        %612 = vmatprep.subr.bf16.mxu0 0
        %613 = vmatpush1.bf16.msra.mxu0 0
        %614 = vmatprep.subr.bf16.mxu0 0
        %615 = vmatpush1.bf16.msra.mxu0 0
        %616 = vmatprep.mubr.bf16.mxu0 0
        %617 = vmatmul.mubr.bf16.gmra.mrb[0].mxu0 %v557
        %v618 = vpop.f32.mrb[0].mxu0
        %v619 = vadd.f32 0.0, %v618
        %v620 = vpop.f32.mrb[0].mxu0
        %v621 = vadd.f32 0.0, %v620
        %v622 = vpop.f32.mrb[0].mxu0
        %v623 = vpop.f32.mrb[0].mxu0
        %624 = vdwg.mxu0
        %625 = vmatprep.subr.bf16.mxu0 %v518
        %626 = vmatpush1.bf16.msra.mxu0 %v517
        %627 = vmatprep.subr.bf16.mxu0 %v526
        %628 = vmatpush1.bf16.msra.mxu0 %v525
        %629 = vmatprep.subr.bf16.mxu0 %v570
        %630 = vmatpush1.bf16.msra.mxu0 %v567
        %631 = vmatprep.subr.bf16.mxu0 0
        %632 = vmatpush1.bf16.msra.mxu0 0
        %633 = vmatprep.subr.bf16.mxu0 0
        %634 = vmatpush1.bf16.msra.mxu0 0
        %635 = vmatprep.subr.bf16.mxu0 0
        %636 = vmatpush1.bf16.msra.mxu0 0
        %637 = vmatprep.subr.bf16.mxu0 0
        %638 = vmatpush1.bf16.msra.mxu0 0
        %639 = vmatprep.subr.bf16.mxu0 0
        %640 = vmatpush1.bf16.msra.mxu0 0
        %641 = vmatprep.subr.bf16.mxu0 0
        %642 = vmatpush1.bf16.msra.mxu0 0
        %643 = vmatprep.subr.bf16.mxu0 0
        %644 = vmatpush1.bf16.msra.mxu0 0
        %645 = vmatprep.subr.bf16.mxu0 0
        %646 = vmatpush1.bf16.msra.mxu0 0
        %647 = vmatprep.subr.bf16.mxu0 0
        %648 = vmatpush1.bf16.msra.mxu0 0
        %649 = vmatprep.subr.bf16.mxu0 0
        %650 = vmatpush1.bf16.msra.mxu0 0
        %651 = vmatprep.subr.bf16.mxu0 0
        %652 = vmatpush1.bf16.msra.mxu0 0
        %653 = vmatprep.subr.bf16.mxu0 0
        %654 = vmatpush1.bf16.msra.mxu0 0
        %655 = vmatprep.subr.bf16.mxu0 0
        %656 = vmatpush1.bf16.msra.mxu0 0
        %657 = vmatprep.mubr.bf16.mxu0 0
        %658 = vmatmul.mubr.bf16.gmra.mrb[0].mxu0 %v557
        %v659 = vpop.f32.mrb[0].mxu0
        %v660 = vadd.f32 0.0, %v659
        %v661 = vpop.f32.mrb[0].mxu0
        %v662 = vadd.f32 0.0, %v661
        %v663 = vpop.f32.mrb[0].mxu0
        %v664 = vpop.f32.mrb[0].mxu0
        %665 = vdwg.mxu0
        %666 = vmatprep.subr.bf16.mxu0 %v520
        %667 = vmatpush1.bf16.msra.mxu0 %v519
        %668 = vmatprep.subr.bf16.mxu0 %v528
        %669 = vmatpush1.bf16.msra.mxu0 %v527
        %670 = vmatprep.subr.bf16.mxu0 %v576
        %671 = vmatpush1.bf16.msra.mxu0 %v573
        %672 = vmatprep.subr.bf16.mxu0 0
        %673 = vmatpush1.bf16.msra.mxu0 0
        %674 = vmatprep.subr.bf16.mxu0 0
        %675 = vmatpush1.bf16.msra.mxu0 0
        %676 = vmatprep.subr.bf16.mxu0 0
        %677 = vmatpush1.bf16.msra.mxu0 0
        %678 = vmatprep.subr.bf16.mxu0 0
        %679 = vmatpush1.bf16.msra.mxu0 0
        %680 = vmatprep.subr.bf16.mxu0 0
        %681 = vmatpush1.bf16.msra.mxu0 0
        %682 = vmatprep.subr.bf16.mxu0 0
        %683 = vmatpush1.bf16.msra.mxu0 0
        %684 = vmatprep.subr.bf16.mxu0 0
        %685 = vmatpush1.bf16.msra.mxu0 0
        %686 = vmatprep.subr.bf16.mxu0 0
        %687 = vmatpush1.bf16.msra.mxu0 0
        %688 = vmatprep.subr.bf16.mxu0 0
        %689 = vmatpush1.bf16.msra.mxu0 0
        %690 = vmatprep.subr.bf16.mxu0 0
        %691 = vmatpush1.bf16.msra.mxu0 0
        %692 = vmatprep.subr.bf16.mxu0 0
        %693 = vmatpush1.bf16.msra.mxu0 0
        %694 = vmatprep.subr.bf16.mxu0 0
        %695 = vmatpush1.bf16.msra.mxu0 0
        %696 = vmatprep.subr.bf16.mxu0 0
        %697 = vmatpush1.bf16.msra.mxu0 0
        %698 = vmatprep.mubr.bf16.mxu0 0
        %699 = vmatmul.mubr.bf16.gmra.mrb[0].mxu0 %v557
        %v700 = vpop.f32.mrb[0].mxu0
        %v701 = vadd.f32 0.0, %v700
        %v702 = vpop.f32.mrb[0].mxu0
        %v703 = vadd.f32 0.0, %v702
        %v704 = vpop.f32.mrb[0].mxu0
        %v705 = vpop.f32.mrb[0].mxu0
        %706 = vdwg.mxu0
        %707 = vmatprep.subr.bf16.mxu0 %v522
        %708 = vmatpush1.bf16.msra.mxu0 %v521
        %709 = vmatprep.subr.bf16.mxu0 %v530
        %710 = vmatpush1.bf16.msra.mxu0 %v529
        %711 = vmatprep.subr.bf16.mxu0 %v582
        %712 = vmatpush1.bf16.msra.mxu0 %v579
        %713 = vmatprep.subr.bf16.mxu0 0
        %714 = vmatpush1.bf16.msra.mxu0 0
        %715 = vmatprep.subr.bf16.mxu0 0
        %716 = vmatpush1.bf16.msra.mxu0 0
        %717 = vmatprep.subr.bf16.mxu0 0
        %718 = vmatpush1.bf16.msra.mxu0 0
        %719 = vmatprep.subr.bf16.mxu0 0
        %720 = vmatpush1.bf16.msra.mxu0 0
        %721 = vmatprep.subr.bf16.mxu0 0
        %722 = vmatpush1.bf16.msra.mxu0 0
        %723 = vmatprep.subr.bf16.mxu0 0
        %724 = vmatpush1.bf16.msra.mxu0 0
        %725 = vmatprep.subr.bf16.mxu0 0
        %726 = vmatpush1.bf16.msra.mxu0 0
        %727 = vmatprep.subr.bf16.mxu0 0
        %728 = vmatpush1.bf16.msra.mxu0 0
        %729 = vmatprep.subr.bf16.mxu0 0
        %730 = vmatpush1.bf16.msra.mxu0 0
        %731 = vmatprep.subr.bf16.mxu0 0
        %732 = vmatpush1.bf16.msra.mxu0 0
        %733 = vmatprep.subr.bf16.mxu0 0
        %734 = vmatpush1.bf16.msra.mxu0 0
        %735 = vmatprep.subr.bf16.mxu0 0
        %736 = vmatpush1.bf16.msra.mxu0 0
        %737 = vmatprep.subr.bf16.mxu0 0
        %738 = vmatpush1.bf16.msra.mxu0 0
        %739 = vmatprep.mubr.bf16.mxu0 0
        %740 = vmatmul.mubr.bf16.gmra.mrb[0].mxu0 %v557
        %v741 = vpop.f32.mrb[0].mxu0
        %v742 = vadd.f32 0.0, %v741
        %v743 = vpop.f32.mrb[0].mxu0
        %v744 = vadd.f32 0.0, %v743
        %v745 = vpop.f32.mrb[0].mxu0
        %v746 = vpop.f32.mrb[0].mxu0
        %747 = vdwg.mxu0
        %v768 = vunpack.c.l.b16 %v414
        %v769 = vunpack.c.h.b16 %v414
        %v770 = vunpack.c.l.b16 %v415
        %v771 = vunpack.c.h.b16 %v415
        %v772 = vunpack.c.l.b16 %v416
        %v773 = vunpack.c.h.b16 %v416
        %v774 = vunpack.c.l.b16 %v417
        %v775 = vunpack.c.h.b16 %v417
        %v776 = vunpack.c.l.b16 %v418
        %v777 = vunpack.c.h.b16 %v418
        %v778 = vunpack.c.l.b16 %v419
        %v779 = vunpack.c.h.b16 %v419
        %v780 = vunpack.c.l.b16 %v420
        %v781 = vunpack.c.h.b16 %v420
        %v782 = vunpack.c.l.b16 %v421
        %v783 = vunpack.c.h.b16 %v421
        %v784 = vunpack.c.l.b16 %v422
        %v785 = vunpack.c.h.b16 %v422
        %v786 = vunpack.c.l.b16 %v423
        %v787 = vunpack.c.h.b16 %v423
        %v788 = vunpack.c.l.b16 %v424
        %v789 = vunpack.c.h.b16 %v424
        %v790 = vunpack.c.l.b16 %v425
        %v791 = vunpack.c.h.b16 %v425
        %v792 = vunpack.c.l.b16 %v426
        %v793 = vunpack.c.h.b16 %v426
        %v794 = vunpack.c.l.b16 %v427
        %v795 = vunpack.c.h.b16 %v427
        %v796 = vunpack.c.l.b16 %v428
        %v797 = vunpack.c.h.b16 %v428
        %v798 = vunpack.c.l.b16 %v429
        %v799 = vunpack.c.h.b16 %v429
        %v800 = vunpack.c.l.b16 %v430
        %v801 = vunpack.c.h.b16 %v430
        %v802 = vunpack.c.l.b16 %v431
        %v803 = vunpack.c.h.b16 %v431
        %v804 = vunpack.c.l.b16 %v432
        %v805 = vunpack.c.h.b16 %v432
        %v806 = vunpack.c.l.b16 %v433
        %v807 = vunpack.c.h.b16 %v433
        %v808 = vpack.c.b16 %v776, %v768
        %v809 = vpack.c.b16 %v777, %v769
        %v810 = vpack.c.b16 %v778, %v770
        %v811 = vpack.c.b16 %v779, %v771
        %v812 = vpack.c.b16 %v780, %v772
        %v813 = vpack.c.b16 %v781, %v773
        %v814 = vpack.c.b16 %v782, %v774
        %v815 = vpack.c.b16 %v783, %v775
        %v816 = vpack.c.b16 %v792, %v784
        %v817 = vpack.c.b16 %v793, %v785
        %v818 = vpack.c.b16 %v794, %v786
        %v819 = vpack.c.b16 %v795, %v787
        %v820 = vpack.c.b16 %v796, %v788
        %v821 = vpack.c.b16 %v797, %v789
        %v822 = vpack.c.b16 %v798, %v790
        %v823 = vpack.c.b16 %v799, %v791
        %v824 = vpack.c.b16 %v800, %v800
        %v825 = vpack.c.b16 %v801, %v801
        %v826 = vpack.c.b16 %v802, %v802
        %v827 = vpack.c.b16 %v803, %v803
        %v828 = vpack.c.b16 %v804, %v804
        %v829 = vpack.c.b16 %v805, %v805
        %v830 = vpack.c.b16 %v806, %v806
        %v831 = vpack.c.b16 %v807, %v807
        %v849 = vsel %vm555, %v413, 0
        %v852 = vsel %vm559, %v824, 0
        %v855 = vsel %vm559, %v825, 0
        %v858 = vsel %vm559, %v826, 0
        %v861 = vsel %vm559, %v827, 0
        %v864 = vsel %vm559, %v828, 0
        %v867 = vsel %vm559, %v829, 0
        %v870 = vsel %vm559, %v830, 0
        %v873 = vsel %vm559, %v831, 0
        %875 = vmatprep.subr.bf16.mxu0 %v809
        %876 = vmatpush1.bf16.msra.mxu0 %v808
        %877 = vmatprep.subr.bf16.mxu0 %v817
        %878 = vmatpush1.bf16.msra.mxu0 %v816
        %879 = vmatprep.subr.bf16.mxu0 %v855
        %880 = vmatpush1.bf16.msra.mxu0 %v852
        %881 = vmatprep.subr.bf16.mxu0 0
        %882 = vmatpush1.bf16.msra.mxu0 0
        %883 = vmatprep.subr.bf16.mxu0 0
        %884 = vmatpush1.bf16.msra.mxu0 0
        %885 = vmatprep.subr.bf16.mxu0 0
        %886 = vmatpush1.bf16.msra.mxu0 0
        %887 = vmatprep.subr.bf16.mxu0 0
        %888 = vmatpush1.bf16.msra.mxu0 0
        %889 = vmatprep.subr.bf16.mxu0 0
        %890 = vmatpush1.bf16.msra.mxu0 0
        %891 = vmatprep.subr.bf16.mxu0 0
        %892 = vmatpush1.bf16.msra.mxu0 0
        %893 = vmatprep.subr.bf16.mxu0 0
        %894 = vmatpush1.bf16.msra.mxu0 0
        %895 = vmatprep.subr.bf16.mxu0 0
        %896 = vmatpush1.bf16.msra.mxu0 0
        %897 = vmatprep.subr.bf16.mxu0 0
        %898 = vmatpush1.bf16.msra.mxu0 0
        %899 = vmatprep.subr.bf16.mxu0 0
        %900 = vmatpush1.bf16.msra.mxu0 0
        %901 = vmatprep.subr.bf16.mxu0 0
        %902 = vmatpush1.bf16.msra.mxu0 0
        %903 = vmatprep.subr.bf16.mxu0 0
        %904 = vmatpush1.bf16.msra.mxu0 0
        %905 = vmatprep.subr.bf16.mxu0 0
        %906 = vmatpush1.bf16.msra.mxu0 0
        %907 = vmatprep.mubr.bf16.mxu0 0
        %908 = vmatmul.mubr.bf16.gmra.mrb[0].mxu0 %v849
        %v909 = vpop.f32.mrb[0].mxu0
        %v910 = vadd.f32 %v619, %v909
        %v911 = vpop.f32.mrb[0].mxu0
        %v912 = vadd.f32 %v621, %v911
        %v913 = vpop.f32.mrb[0].mxu0
        %v914 = vpop.f32.mrb[0].mxu0
        %915 = vdwg.mxu0
        %916 = vmatprep.subr.bf16.mxu0 %v811
        %917 = vmatpush1.bf16.msra.mxu0 %v810
        %918 = vmatprep.subr.bf16.mxu0 %v819
        %919 = vmatpush1.bf16.msra.mxu0 %v818
        %920 = vmatprep.subr.bf16.mxu0 %v861
        %921 = vmatpush1.bf16.msra.mxu0 %v858
        %922 = vmatprep.subr.bf16.mxu0 0
        %923 = vmatpush1.bf16.msra.mxu0 0
        %924 = vmatprep.subr.bf16.mxu0 0
        %925 = vmatpush1.bf16.msra.mxu0 0
        %926 = vmatprep.subr.bf16.mxu0 0
        %927 = vmatpush1.bf16.msra.mxu0 0
        %928 = vmatprep.subr.bf16.mxu0 0
        %929 = vmatpush1.bf16.msra.mxu0 0
        %930 = vmatprep.subr.bf16.mxu0 0
        %931 = vmatpush1.bf16.msra.mxu0 0
        %932 = vmatprep.subr.bf16.mxu0 0
        %933 = vmatpush1.bf16.msra.mxu0 0
        %934 = vmatprep.subr.bf16.mxu0 0
        %935 = vmatpush1.bf16.msra.mxu0 0
        %936 = vmatprep.subr.bf16.mxu0 0
        %937 = vmatpush1.bf16.msra.mxu0 0
        %938 = vmatprep.subr.bf16.mxu0 0
        %939 = vmatpush1.bf16.msra.mxu0 0
        %940 = vmatprep.subr.bf16.mxu0 0
        %941 = vmatpush1.bf16.msra.mxu0 0
        %942 = vmatprep.subr.bf16.mxu0 0
        %943 = vmatpush1.bf16.msra.mxu0 0
        %944 = vmatprep.subr.bf16.mxu0 0
        %945 = vmatpush1.bf16.msra.mxu0 0
        %946 = vmatprep.subr.bf16.mxu0 0
        %947 = vmatpush1.bf16.msra.mxu0 0
        %948 = vmatprep.mubr.bf16.mxu0 0
        %949 = vmatmul.mubr.bf16.gmra.mrb[0].mxu0 %v849
        %v950 = vpop.f32.mrb[0].mxu0
        %v951 = vadd.f32 %v660, %v950
        %v952 = vpop.f32.mrb[0].mxu0
        %v953 = vadd.f32 %v662, %v952
        %v954 = vpop.f32.mrb[0].mxu0
        %v955 = vpop.f32.mrb[0].mxu0
        %956 = vdwg.mxu0
        %957 = vmatprep.subr.bf16.mxu0 %v813
        %958 = vmatpush1.bf16.msra.mxu0 %v812
        %959 = vmatprep.subr.bf16.mxu0 %v821
        %960 = vmatpush1.bf16.msra.mxu0 %v820
        %961 = vmatprep.subr.bf16.mxu0 %v867
        %962 = vmatpush1.bf16.msra.mxu0 %v864
        %963 = vmatprep.subr.bf16.mxu0 0
        %964 = vmatpush1.bf16.msra.mxu0 0
        %965 = vmatprep.subr.bf16.mxu0 0
        %966 = vmatpush1.bf16.msra.mxu0 0
        %967 = vmatprep.subr.bf16.mxu0 0
        %968 = vmatpush1.bf16.msra.mxu0 0
        %969 = vmatprep.subr.bf16.mxu0 0
        %970 = vmatpush1.bf16.msra.mxu0 0
        %971 = vmatprep.subr.bf16.mxu0 0
        %972 = vmatpush1.bf16.msra.mxu0 0
        %973 = vmatprep.subr.bf16.mxu0 0
        %974 = vmatpush1.bf16.msra.mxu0 0
        %975 = vmatprep.subr.bf16.mxu0 0
        %976 = vmatpush1.bf16.msra.mxu0 0
        %977 = vmatprep.subr.bf16.mxu0 0
        %978 = vmatpush1.bf16.msra.mxu0 0
        %979 = vmatprep.subr.bf16.mxu0 0
        %980 = vmatpush1.bf16.msra.mxu0 0
        %981 = vmatprep.subr.bf16.mxu0 0
        %982 = vmatpush1.bf16.msra.mxu0 0
        %983 = vmatprep.subr.bf16.mxu0 0
        %984 = vmatpush1.bf16.msra.mxu0 0
        %985 = vmatprep.subr.bf16.mxu0 0
        %986 = vmatpush1.bf16.msra.mxu0 0
        %987 = vmatprep.subr.bf16.mxu0 0
        %988 = vmatpush1.bf16.msra.mxu0 0
        %989 = vmatprep.mubr.bf16.mxu0 0
        %990 = vmatmul.mubr.bf16.gmra.mrb[0].mxu0 %v849
        %v991 = vpop.f32.mrb[0].mxu0
        %v992 = vadd.f32 %v701, %v991
        %v993 = vpop.f32.mrb[0].mxu0
        %v994 = vadd.f32 %v703, %v993
        %v995 = vpop.f32.mrb[0].mxu0
        %v996 = vpop.f32.mrb[0].mxu0
        %997 = vdwg.mxu0
        %998 = vmatprep.subr.bf16.mxu0 %v815
        %999 = vmatpush1.bf16.msra.mxu0 %v814
        %1000 = vmatprep.subr.bf16.mxu0 %v823
        %1001 = vmatpush1.bf16.msra.mxu0 %v822
        %1002 = vmatprep.subr.bf16.mxu0 %v873
        %1003 = vmatpush1.bf16.msra.mxu0 %v870
        %1004 = vmatprep.subr.bf16.mxu0 0
        %1005 = vmatpush1.bf16.msra.mxu0 0
        %1006 = vmatprep.subr.bf16.mxu0 0
        %1007 = vmatpush1.bf16.msra.mxu0 0
        %1008 = vmatprep.subr.bf16.mxu0 0
        %1009 = vmatpush1.bf16.msra.mxu0 0
        %1010 = vmatprep.subr.bf16.mxu0 0
        %1011 = vmatpush1.bf16.msra.mxu0 0
        %1012 = vmatprep.subr.bf16.mxu0 0
        %1013 = vmatpush1.bf16.msra.mxu0 0
        %1014 = vmatprep.subr.bf16.mxu0 0
        %1015 = vmatpush1.bf16.msra.mxu0 0
        %1016 = vmatprep.subr.bf16.mxu0 0
        %1017 = vmatpush1.bf16.msra.mxu0 0
        %1018 = vmatprep.subr.bf16.mxu0 0
        %1019 = vmatpush1.bf16.msra.mxu0 0
        %1020 = vmatprep.subr.bf16.mxu0 0
        %1021 = vmatpush1.bf16.msra.mxu0 0
        %1022 = vmatprep.subr.bf16.mxu0 0
        %1023 = vmatpush1.bf16.msra.mxu0 0
        %1024 = vmatprep.subr.bf16.mxu0 0
        %1025 = vmatpush1.bf16.msra.mxu0 0
        %1026 = vmatprep.subr.bf16.mxu0 0
        %1027 = vmatpush1.bf16.msra.mxu0 0
        %1028 = vmatprep.subr.bf16.mxu0 0
        %1029 = vmatpush1.bf16.msra.mxu0 0
        %1030 = vmatprep.mubr.bf16.mxu0 0
        %1031 = vmatmul.mubr.bf16.gmra.mrb[0].mxu0 %v849
        %v1032 = vpop.f32.mrb[0].mxu0
        %v1033 = vadd.f32 %v742, %v1032
        %v1034 = vpop.f32.mrb[0].mxu0
        %v1035 = vadd.f32 %v744, %v1034
        %v1036 = vpop.f32.mrb[0].mxu0
        %v1037 = vpop.f32.mrb[0].mxu0
        %1038 = vdwg.mxu0
        %v1039 = vpack.c.bf16 %v910, %v910
        %v1040 = vpack.c.bf16 %v912, %v912
        %v1041 = vpack.c.bf16 %v951, %v951
        %v1042 = vpack.c.bf16 %v953, %v953
        %v1043 = vpack.c.bf16 %v992, %v992
        %v1044 = vpack.c.bf16 %v994, %v994
        %v1045 = vpack.c.bf16 %v1033, %v1033
        %v1046 = vpack.c.bf16 %v1035, %v1035
        %v1055 = vcombine.low %v1039, %v1040
        %v1056 = vcombine.low %v1041, %v1042
        %v1058 = vunpack.c.l.s4 1983009808
        %v1059 = vunpack.c.0.s8 %v1058
        %v1060 = vlaneseq
        %v1061 = vshrl.u32 %v1060, 7
        %v1062 = vsub.s32 %v1059, %v1061
        %v1063 = vrot.slane %v1055, %v1062
        %v1065 = vunpack.c.l.s4 1983009808
        %v1066 = vunpack.c.0.s8 %v1065
        %v1067 = vlaneseq
        %v1068 = vshrl.u32 %v1067, 7
        %v1069 = vsub.s32 %v1066, %v1068
        %v1070 = vrot.slane %v1056, %v1069
        %v1071 = vcombine.low %v1063, %v1070
        %v1072 = vcombine.low %v1043, %v1044
        %v1073 = vcombine.low %v1045, %v1046
        %v1075 = vunpack.c.l.s4 1983009808
        %v1076 = vunpack.c.0.s8 %v1075
        %v1077 = vlaneseq
        %v1078 = vshrl.u32 %v1077, 7
        %v1079 = vsub.s32 %v1076, %v1078
        %v1080 = vrot.slane %v1072, %v1079
        %v1082 = vunpack.c.l.s4 1983009808
        %v1083 = vunpack.c.0.s8 %v1082
        %v1084 = vlaneseq
        %v1085 = vshrl.u32 %v1084, 7
        %v1086 = vsub.s32 %v1083, %v1085
        %v1087 = vrot.slane %v1073, %v1086
        %v1088 = vcombine.low %v1080, %v1087
        %1091 = vst [vmem:[%s402] sm:$0xff] %v1071
        %1092 = vst [vmem:[%s402 + $0x8] sm:$0xff] %v1088
        %v1093 = vlaneseq
        %v1094 = vand.u32 %v1093, 127
        %vm1095 = vcmp.eq.s32.totalorder %v1094, 0
        %vm1096 = vcmask 1043456
        %v1097 = vsel %vm1096, %v910, 0.0
        %v1098 = vsel %vm1096, %v912, 0.0
        %v1099 = vadd.f32 %v1097, %v1098
        %v1100 = vsel %vm1096, %v951, 0.0
        %v1101 = vadd.f32 %v1099, %v1100
        %v1102 = vsel %vm1096, %v953, 0.0
        %v1103 = vadd.f32 %v1101, %v1102
        %v1104 = vsel %vm1096, %v992, 0.0
        %v1105 = vadd.f32 %v1103, %v1104
        %v1106 = vsel %vm1096, %v994, 0.0
        %v1107 = vadd.f32 %v1105, %v1106
        %v1108 = vsel %vm1096, %v1033, 0.0
        %v1109 = vadd.f32 %v1107, %v1108
        %v1110 = vsel %vm1096, %v1035, 0.0
        %v1111 = vadd.f32 %v1109, %v1110
        %1112 = vadd.xlane.f32.xlu0 %v1111
        %v1113 = vpop.xlane.xlu0 %1112
        %v1114 = vsel %vm1095, %v1113, 0.0
        %1115 = vst [vmem:[%s407] sm:$0xf] %v1114
        %v1116 = vmul.f32 %v910, %v910
        %v1117 = vmul.f32 %v912, %v912
        %v1118 = vmul.f32 %v951, %v951
        %v1119 = vmul.f32 %v953, %v953
        %v1120 = vmul.f32 %v992, %v992
        %v1121 = vmul.f32 %v994, %v994
        %v1122 = vmul.f32 %v1033, %v1033
        %v1123 = vmul.f32 %v1035, %v1035
        %v1124 = vsel %vm1096, %v1116, 0.0
        %v1125 = vsel %vm1096, %v1117, 0.0
        %v1126 = vadd.f32 %v1124, %v1125
        %v1127 = vsel %vm1096, %v1118, 0.0
        %v1128 = vadd.f32 %v1126, %v1127
        %v1129 = vsel %vm1096, %v1119, 0.0
        %v1130 = vadd.f32 %v1128, %v1129
        %v1131 = vsel %vm1096, %v1120, 0.0
        %v1132 = vadd.f32 %v1130, %v1131
        %v1133 = vsel %vm1096, %v1121, 0.0
        %v1134 = vadd.f32 %v1132, %v1133
        %v1135 = vsel %vm1096, %v1122, 0.0
        %v1136 = vadd.f32 %v1134, %v1135
        %v1137 = vsel %vm1096, %v1123, 0.0
        %v1138 = vadd.f32 %v1136, %v1137
        %1139 = vadd.xlane.f32.xlu0 %v1138
        %v1140 = vpop.xlane.xlu0 %1139
        %v1141 = vsel %vm1095, %v1140, 0.0
        %1142 = vst [vmem:[%s411] sm:$0xf] %v1141
        %s1143 = smul.u32 8, %s18
        %p1144 = scmp.lt.s32.totalorder %s1143, 15
        %s1145 = scalar_select %p1144, %s1143, 15
        %s1146 = smul.addr %s1145, 2
        %s1147 = scalar_lea.vmem %s4, %s1146
        %p1148 = scmp.lt.s32.totalorder %s18, 1
        %s1149 = scalar_select %p1148, %s18, 1
        %s1150 = smul.addr %s1149, 4
        %s1151 = scalar_lea.vmem %s5, %s1150
        %p1152 = scmp.lt.s32.totalorder %s18, 1
        %s1153 = scalar_select %p1152, %s18, 1
        %s1154 = smul.addr %s1153, 4
        %s1155 = scalar_lea.vmem %s6, %s1154
        // Predicated region
        $region83: #{unet_up3_forward.6} parent=73 // pred_check
          %p1156 = pneg %p130
        $region84: #{unet_up3_forward.6} parent=73 // pred_check_branch
          %1158 = sbr.rel (%p1156) target = $region86
        $region85: #{unet_up3_forward.6} parent=73 // pred_region
          %s1159 = smul.u32 8, %s18
        $region86: #{unet_up3_forward.6} parent=73 // pred_fallthru
          _
        // Predicated region
        $region87: #{unet_up3_forward.6} parent=73 // pred_check
          %p1160 = pneg %p156
        $region88: #{unet_up3_forward.6} parent=73 // pred_check_branch
          %1162 = sbr.rel (%p1160) target = $region90
        $region89: #{unet_up3_forward.6} parent=73 // pred_region
          _
        $region90: #{unet_up3_forward.6} parent=73 // pred_fallthru
          _
        // Predicated region
        $region91: #{unet_up3_forward.6} parent=73 // pred_check
          %p1163 = pneg %p182
        $region92: #{unet_up3_forward.6} parent=73 // pred_check_branch
          %1165 = sbr.rel (%p1163) target = $region94
        $region93: #{unet_up3_forward.6} parent=73 // pred_region
          _
        $region94: #{unet_up3_forward.6} parent=73 // pred_fallthru
          _
      $region74: #{unet_up3_forward.6} parent=5 // pred_fallthru
        _
      %p1166 = scmp.le.s32.totalorder 2, %s13
      // Predicated region
      $region95: #{unet_up3_forward.6} parent=5 // pred_check
        %p1167 = pneg %p1166
      $region96: #{unet_up3_forward.6} parent=5 // pred_check_branch
        %1169 = sbr.rel (%p1167) target = $region98
      $region97: #{unet_up3_forward.6} parent=5 // pred_region
        %s1170 = ssub.s32 %s13, 2
        // Predicated region
        $region99: #{unet_up3_forward.6} parent=97 // pred_check
          %p1171 = pneg %p136
        $region100: #{unet_up3_forward.6} parent=97 // pred_check_branch
          %1173 = sbr.rel (%p1171) target = $region102
        $region101: #{unet_up3_forward.6} parent=97 // pred_region
          %s1174 = smul.u32 8, %s19
          %p1175 = scmp.lt.s32.totalorder %s1174, 15
          %s1176 = scalar_select %p1175, %s1174, 15
          %s1177 = smul.addr %s1176, 2
          %s1178 = scalar_lea.vmem %s4, %s1177
        $region102: #{unet_up3_forward.6} parent=97 // pred_fallthru
          _
        // Predicated region
        $region103: #{unet_up3_forward.6} parent=97 // pred_check
          %p1179 = pneg %p162
        $region104: #{unet_up3_forward.6} parent=97 // pred_check_branch
          %1181 = sbr.rel (%p1179) target = $region106
        $region105: #{unet_up3_forward.6} parent=97 // pred_region
          %p1182 = scmp.lt.s32.totalorder %s19, 1
          %s1183 = scalar_select %p1182, %s19, 1
          %s1184 = smul.addr %s1183, 4
          %s1185 = scalar_lea.vmem %s5, %s1184
        $region106: #{unet_up3_forward.6} parent=97 // pred_fallthru
          _
        // Predicated region
        $region107: #{unet_up3_forward.6} parent=97 // pred_check
          %p1186 = pneg %p188
        $region108: #{unet_up3_forward.6} parent=97 // pred_check_branch
          %1188 = sbr.rel (%p1186) target = $region110
        $region109: #{unet_up3_forward.6} parent=97 // pred_region
          %p1189 = scmp.lt.s32.totalorder %s19, 1
          %s1190 = scalar_select %p1189, %s19, 1
          %s1191 = smul.addr %s1190, 4
          %s1192 = scalar_lea.vmem %s6, %s1191
        $region110: #{unet_up3_forward.6} parent=97 // pred_fallthru
          _
      $region98: #{unet_up3_forward.6} parent=5 // pred_fallthru
        _
    $region6: #{unet_up3_forward.6} parent=1 // loop_footer
      %s17 = sadd.s32 1, %s13
    $region7: #{unet_up3_forward.6} parent=1 // loop_footer_branch
      %12 = sbr.rel target = $region3
    $region8: #{unet_up3_forward.6} parent=1 // loop_exit
      _

// kernel: unet_up3_forward.7
$region0: #{unet_up3_forward.7}
  #allocation0 [shape = 'u32[]', space=smem, size = 0x4, offset = 0x4, fixed_abs, tag = 'smem constant byte address 0x4 - core index']
  #allocation1 [shape = 'u32[144,128]{1,0:T(1,128)}', space=vmem, size = 0x12000, scoped, tag = 'internal scratch']
  %s0 = inlined_call_operand.vmem [shape: bf16[4,2048], index: 0, kind: input, shape index: {}]
  %s1 = inlined_call_operand.vmem [shape: f32[4,1], index: 1, kind: input, shape index: {}]
  %s2 = inlined_call_operand.vmem [shape: f32[4,1], index: 2, kind: input, shape index: {}]
  %s3 = inlined_call_operand.vmem [shape: bf16[4,2048], index: 3, kind: output, shape index: {}]
  %s4 = sld [smem:[#allocation0]]
  $region45: #{unet_up3_forward.7} parent=0
    _
  %s6 = ssub.s32 1, %s4
  %s7 = scalar_select 0, %s6, %s4
  loop: start=0, step=1, limit=4
  $region2: #{unet_up3_forward.7} parent=0 // loop_pre_header
    _
  $region3: #{unet_up3_forward.7} parent=0 // loop_header
    %s9 = sphi 0, %s13
    %p10 = scmp.ge.s32.totalorder %s9, 4
    %s19 = sphi 0, %s21
    %s22 = sphi 0, %s19
    %s23 = sphi 0, %s22
    %s39 = sphi 0, %s23
    %s43 = sphi 0, %s43
    %s45 = sphi 0, %s43
    %s46 = sphi 0, %s45
    %s60 = sphi 0, %s46
    %s64 = sphi 0, %s64
    %s66 = sphi 0, %s64
    %s67 = sphi 0, %s66
    %s81 = sphi 0, %s67
    %s87 = sphi 0, %s89
    %s90 = sphi 0, %s87
    %s91 = sphi 0, %s90
    %s107 = sphi 0, %s91
  $region4: #{unet_up3_forward.7} parent=0 // loop_header_branch
    %12 = sbr.rel (%p10) target = $region8
  $region5: #{unet_up3_forward.7} parent=0 // loop_body
    %s14 = ssub.s32 %s9, 1
    %s15 = ssub.s32 %s9, 2
    %s16 = sadd.s32 %s9, 1
    %s17 = ssub.s32 %s9, %s16
    %p18 = scmp.eq.s32.totalorder %s17, 0
    %s20 = sadd.s32 %s19, 1
    %s21 = scalar_select %p18, %s19, %s20
    %p24 = pneg %p18
    %p25 = scmp.eq.s32.totalorder %s9, 1
    %p26 = por %p24, %p25
    %p27 = scmp.ne.s32.totalorder %s19, %s22
    %p28 = scmp.eq.s32.totalorder %s9, 0
    %p29 = por %p27, %p28
    %p30 = scmp.ne.s32.totalorder %s19, %s22
    %p31 = scmp.eq.s32.totalorder %s14, 1
    %p32 = por %p30, %p31
    %p33 = scmp.ne.s32.totalorder %s22, %s23
    %p34 = scmp.eq.s32.totalorder %s14, 0
    %p35 = por %p33, %p34
    %p36 = scmp.ne.s32.totalorder %s22, %s23
    %p37 = scmp.eq.s32.totalorder %s15, 1
    %p38 = por %p36, %p37
    %p40 = scmp.ne.s32.totalorder %s23, %s39
    %p41 = scmp.eq.s32.totalorder %s15, 0
    %p42 = por %p40, %p41
    %s44 = sadd.s32 %s43, 1
    %p47 = scmp.eq.s32.totalorder %s9, 1
    %p48 = scmp.ne.s32.totalorder %s43, %s45
    %p49 = scmp.eq.s32.totalorder %s9, 0
    %p50 = por %p48, %p49
    %p51 = scmp.ne.s32.totalorder %s43, %s45
    %p52 = scmp.eq.s32.totalorder %s14, 1
    %p53 = por %p51, %p52
    %p54 = scmp.ne.s32.totalorder %s45, %s46
    %p55 = scmp.eq.s32.totalorder %s14, 0
    %p56 = por %p54, %p55
    %p57 = scmp.ne.s32.totalorder %s45, %s46
    %p58 = scmp.eq.s32.totalorder %s15, 1
    %p59 = por %p57, %p58
    %p61 = scmp.ne.s32.totalorder %s46, %s60
    %p62 = scmp.eq.s32.totalorder %s15, 0
    %p63 = por %p61, %p62
    %s65 = sadd.s32 %s64, 1
    %p68 = scmp.eq.s32.totalorder %s9, 1
    %p69 = scmp.ne.s32.totalorder %s64, %s66
    %p70 = scmp.eq.s32.totalorder %s9, 0
    %p71 = por %p69, %p70
    %p72 = scmp.ne.s32.totalorder %s64, %s66
    %p73 = scmp.eq.s32.totalorder %s14, 1
    %p74 = por %p72, %p73
    %p75 = scmp.ne.s32.totalorder %s66, %s67
    %p76 = scmp.eq.s32.totalorder %s14, 0
    %p77 = por %p75, %p76
    %p78 = scmp.ne.s32.totalorder %s66, %s67
    %p79 = scmp.eq.s32.totalorder %s15, 1
    %p80 = por %p78, %p79
    %p82 = scmp.ne.s32.totalorder %s67, %s81
    %p83 = scmp.eq.s32.totalorder %s15, 0
    %p84 = por %p82, %p83
    %s85 = ssub.s32 %s9, %s16
    %p86 = scmp.eq.s32.totalorder %s85, 0
    %s88 = sadd.s32 %s87, 1
    %s89 = scalar_select %p86, %s87, %s88
    %p92 = pneg %p86
    %p93 = scmp.eq.s32.totalorder %s9, 1
    %p94 = por %p92, %p93
    %p95 = scmp.ne.s32.totalorder %s87, %s90
    %p96 = scmp.eq.s32.totalorder %s9, 0
    %p97 = por %p95, %p96
    %p98 = scmp.ne.s32.totalorder %s87, %s90
    %p99 = scmp.eq.s32.totalorder %s14, 1
    %p100 = por %p98, %p99
    %p101 = scmp.ne.s32.totalorder %s90, %s91
    %p102 = scmp.eq.s32.totalorder %s14, 0
    %p103 = por %p101, %p102
    %p104 = scmp.ne.s32.totalorder %s90, %s91
    %p105 = scmp.eq.s32.totalorder %s15, 1
    %p106 = por %p104, %p105
    %p108 = scmp.ne.s32.totalorder %s91, %s107
    %p109 = scmp.eq.s32.totalorder %s15, 0
    %p110 = por %p108, %p109
    %p111 = scmp.le.s32.totalorder 1, %s9
    %p112 = scmp.lt.s32.totalorder %s9, 3
    %p113 = pnand %p111, %p112
    %p114 = pneg %p113
    // Predicated region
    $region9: #{unet_up3_forward.7} parent=5 // pred_check
      _
    $region10: #{unet_up3_forward.7} parent=5 // pred_check_branch
      %116 = sbr.rel (%p113) target = $region12
    $region11: #{unet_up3_forward.7} parent=5 // pred_region
      %s117 = ssub.s32 %s9, 1
      // Predicated region
      $region13: #{unet_up3_forward.7} parent=11 // pred_check
        %p118 = pneg %p56
      $region14: #{unet_up3_forward.7} parent=11 // pred_check_branch
        %120 = sbr.rel (%p118) target = $region16
      $region15: #{unet_up3_forward.7} parent=11 // pred_region
        _
      $region16: #{unet_up3_forward.7} parent=11 // pred_fallthru
        _
      // Predicated region
      $region17: #{unet_up3_forward.7} parent=11 // pred_check
        %p121 = pneg %p77
      $region18: #{unet_up3_forward.7} parent=11 // pred_check_branch
        %123 = sbr.rel (%p121) target = $region20
      $region19: #{unet_up3_forward.7} parent=11 // pred_region
        _
      $region20: #{unet_up3_forward.7} parent=11 // pred_fallthru
        _
    $region12: #{unet_up3_forward.7} parent=5 // pred_fallthru
      _
    %p124 = scmp.lt.s32.totalorder %s9, 2
    // Predicated region
    $region21: #{unet_up3_forward.7} parent=5 // pred_check
      %p125 = pneg %p124
    $region22: #{unet_up3_forward.7} parent=5 // pred_check_branch
      %127 = sbr.rel (%p125) target = $region24
    $region23: #{unet_up3_forward.7} parent=5 // pred_region
      // Predicated region
      $region25: #{unet_up3_forward.7} parent=23 // pred_check
        %p128 = pneg %p29
      $region26: #{unet_up3_forward.7} parent=23 // pred_check_branch
        %130 = sbr.rel (%p128) target = $region28
      $region27: #{unet_up3_forward.7} parent=23 // pred_region
        %s131 = smul.u32 8, %s9
        %p132 = scmp.lt.s32.totalorder %s131, 15
        %s133 = scalar_select %p132, %s131, 15
        %s134 = smul.addr %s133, 2
        %s135 = scalar_lea.vmem %s0, %s134
        %s136 = smul.u32 8, %s9
      $region28: #{unet_up3_forward.7} parent=23 // pred_fallthru
        _
    $region24: #{unet_up3_forward.7} parent=5 // pred_fallthru
      _
    %p137 = scmp.le.s32.totalorder 1, %s9
    %p138 = scmp.lt.s32.totalorder %s9, 3
    %p139 = pnand %p137, %p138
    %p140 = pneg %p139
    // Predicated region
    $region29: #{unet_up3_forward.7} parent=5 // pred_check
      _
    $region30: #{unet_up3_forward.7} parent=5 // pred_check_branch
      %142 = sbr.rel (%p139) target = $region32
    $region31: #{unet_up3_forward.7} parent=5 // pred_region
      %s143 = ssub.s32 %s9, 1
      %s144 = smul.u32 8, %s14
      %p145 = scmp.lt.s32.totalorder %s144, 15
      %s146 = scalar_select %p145, %s144, 15
      %s147 = smul.addr %s146, 2
      %s148 = scalar_lea.vmem %s0, %s147
      %p149 = pneg %p35
      %p150 = pneg %p32
      %p151 = pneg %p56
      %p152 = pneg %p53
      %p153 = pneg %p77
      %p154 = pneg %p74
      %p155 = pneg %p103
      %p156 = pneg %p100
      %s157 = smul.u32 8, %s14
      %p158 = scmp.lt.s32.totalorder %s157, 15
      %s159 = scalar_select %p158, %s157, 15
      %s160 = smul.addr %s159, 2
      %s161 = scalar_lea.vmem %s3, %s160
      %s162 = smul.u32 8, %s14
      %p163 = scmp.lt.s32.totalorder %s162, 15
      %s164 = scalar_select %p163, %s162, 15
      %s165 = smul.addr %s164, 2
      %s166 = scalar_lea.vmem %s0, %s165
      %s167 = smul.u32 8, %s14
      %s168 = smul.u32 8, %s14
      %p169 = scmp.lt.s32.totalorder %s168, 15
      %s170 = scalar_select %p169, %s168, 15
      %s171 = smul.addr %s170, 2
      %s172 = scalar_lea.vmem %s3, %s171
      %s173 = smul.u32 8, %s14
      %v174 = vld [vmem:[%s166] sm:$0xff]
      %v175 = vld [vmem:[%s166 + $0x8] sm:$0xff]
      %v176 = vunpack.c.l.bf16 %v174
      %v177 = vunpack.c.h.bf16 %v174
      %v178 = vunpack.c.l.bf16 %v175
      %v179 = vunpack.c.h.bf16 %v175
      %v180 = vld [vmem:[%s1] sm:$0xf]
      %182 = vset.pattern.permute.xlu0 0
      %183 = vperm.xlu0 %182, %v180
      %v184 = vpop.permute.xlu0 %183
      %v186 = vunpack.c.l.s4 839922192
      %v187 = vunpack.c.0.s8 %v186
      %v188 = vlaneseq
      %v189 = vshrl.u32 %v188, 7
      %v190 = vsub.s32 %v187, %v189
      %v191 = vrot.slane %v184, %v190
      %v193 = vmul.f32 %v176, %v191
      %v194 = vmul.f32 %v177, %v191
      %v195 = vmul.f32 %v178, %v191
      %v196 = vmul.f32 %v179, %v191
      %v197 = vld [vmem:[%s2] sm:$0xf]
      %199 = vset.pattern.permute.xlu0 0
      %200 = vperm.xlu0 %199, %v197
      %v201 = vpop.permute.xlu0 %200
      %v203 = vunpack.c.l.s4 839922192
      %v204 = vunpack.c.0.s8 %v203
      %v205 = vlaneseq
      %v206 = vshrl.u32 %v205, 7
      %v207 = vsub.s32 %v204, %v206
      %v208 = vrot.slane %v201, %v207
      %v210 = vadd.f32 %v193, %v208
      %v211 = vadd.f32 %v194, %v208
      %v212 = vadd.f32 %v195, %v208
      %v213 = vadd.f32 %v196, %v208
      %v214 = vmax.f32 %v210, 0.0
      %v215 = vmax.f32 %v211, 0.0
      %v216 = vmax.f32 %v212, 0.0
      %v217 = vmax.f32 %v213, 0.0
      %v222 = vcombine.high %v214, %v214
      %v223 = vcombine.high %v215, %v215
      %v224 = vcombine.high %v216, %v216
      %v225 = vcombine.high %v217, %v217
      %v230 = vpack.c.bf16 %v214, %v214
      %v231 = vpack.c.bf16 %v222, %v222
      %v232 = vpack.c.bf16 %v215, %v215
      %v233 = vpack.c.bf16 %v223, %v223
      %v234 = vpack.c.bf16 %v216, %v216
      %v235 = vpack.c.bf16 %v224, %v224
      %v236 = vpack.c.bf16 %v217, %v217
      %v237 = vpack.c.bf16 %v225, %v225
      %v246 = vcombine.low %v230, %v231
      %v247 = vcombine.low %v232, %v233
      %v249 = vunpack.c.l.s4 1983009808
      %v250 = vunpack.c.0.s8 %v249
      %v251 = vlaneseq
      %v252 = vshrl.u32 %v251, 7
      %v253 = vsub.s32 %v250, %v252
      %v254 = vrot.slane %v246, %v253
      %v256 = vunpack.c.l.s4 1983009808
      %v257 = vunpack.c.0.s8 %v256
      %v258 = vlaneseq
      %v259 = vshrl.u32 %v258, 7
      %v260 = vsub.s32 %v257, %v259
      %v261 = vrot.slane %v247, %v260
      %v262 = vcombine.low %v254, %v261
      %v263 = vcombine.low %v234, %v235
      %v264 = vcombine.low %v236, %v237
      %v266 = vunpack.c.l.s4 1983009808
      %v267 = vunpack.c.0.s8 %v266
      %v268 = vlaneseq
      %v269 = vshrl.u32 %v268, 7
      %v270 = vsub.s32 %v267, %v269
      %v271 = vrot.slane %v263, %v270
      %v273 = vunpack.c.l.s4 1983009808
      %v274 = vunpack.c.0.s8 %v273
      %v275 = vlaneseq
      %v276 = vshrl.u32 %v275, 7
      %v277 = vsub.s32 %v274, %v276
      %v278 = vrot.slane %v264, %v277
      %v279 = vcombine.low %v271, %v278
      %282 = vst [vmem:[%s172] sm:$0xff] %v262
      %283 = vst [vmem:[%s172 + $0x8] sm:$0xff] %v279
      %s284 = smul.u32 8, %s14
      %p285 = scmp.lt.s32.totalorder %s284, 15
      %s286 = scalar_select %p285, %s284, 15
      %s287 = smul.addr %s286, 2
      %s288 = scalar_lea.vmem %s3, %s287
      // Predicated region
      $region33: #{unet_up3_forward.7} parent=31 // pred_check
        %p289 = pneg %p100
      $region34: #{unet_up3_forward.7} parent=31 // pred_check_branch
        %291 = sbr.rel (%p289) target = $region36
      $region35: #{unet_up3_forward.7} parent=31 // pred_region
        %s292 = smul.u32 8, %s14
      $region36: #{unet_up3_forward.7} parent=31 // pred_fallthru
        _
    $region32: #{unet_up3_forward.7} parent=5 // pred_fallthru
      _
    %p293 = scmp.le.s32.totalorder 2, %s9
    // Predicated region
    $region37: #{unet_up3_forward.7} parent=5 // pred_check
      %p294 = pneg %p293
    $region38: #{unet_up3_forward.7} parent=5 // pred_check_branch
      %296 = sbr.rel (%p294) target = $region40
    $region39: #{unet_up3_forward.7} parent=5 // pred_region
      %s297 = ssub.s32 %s9, 2
      // Predicated region
      $region41: #{unet_up3_forward.7} parent=39 // pred_check
        %p298 = pneg %p106
      $region42: #{unet_up3_forward.7} parent=39 // pred_check_branch
        %300 = sbr.rel (%p298) target = $region44
      $region43: #{unet_up3_forward.7} parent=39 // pred_region
        %s301 = smul.u32 8, %s15
        %p302 = scmp.lt.s32.totalorder %s301, 15
        %s303 = scalar_select %p302, %s301, 15
        %s304 = smul.addr %s303, 2
        %s305 = scalar_lea.vmem %s3, %s304
      $region44: #{unet_up3_forward.7} parent=39 // pred_fallthru
        _
    $region40: #{unet_up3_forward.7} parent=5 // pred_fallthru
      _
  $region6: #{unet_up3_forward.7} parent=0 // loop_footer
    %s13 = sadd.s32 1, %s9
  $region7: #{unet_up3_forward.7} parent=0 // loop_footer_branch
    %8 = sbr.rel target = $region3
  $region8: #{unet_up3_forward.7} parent=0 // loop_exit
    _

// kernel: unet_up3_forward.8
$region0: #{unet_up3_forward.8}
  #allocation0 [shape = 'u32[]', space=smem, size = 0x4, offset = 0x4, fixed_abs, tag = 'smem constant byte address 0x4 - core index']
  #allocation1 [shape = 'u32[144,128]{1,0:T(1,128)}', space=vmem, size = 0x12000, scoped, tag = 'internal scratch']
  %s0 = inlined_call_operand.vmem [shape: bf16[36,2048], index: 0, kind: input, shape index: {}]
  %s1 = inlined_call_operand.vmem [shape: bf16[4,36], index: 1, kind: input, shape index: {}]
  %s2 = inlined_call_operand.vmem [shape: bf16[4,2048], index: 2, kind: output, shape index: {0}]
  %s3 = inlined_call_operand.vmem [shape: f32[4,256], index: 3, kind: output, shape index: {1}]
  %s4 = inlined_call_operand.vmem [shape: f32[4,256], index: 4, kind: output, shape index: {2}]
  %5 = xla_tuple %s2, %s3, %s4
  %s6 = sld [smem:[#allocation0]]
  $region80: #{unet_up3_forward.8} parent=0
    _
  %s8 = ssub.s32 1, %s6
  %s9 = scalar_select 0, %s8, %s6
  $region1: #{unet_up3_forward.8} parent=0
    #allocation2 [shape = 'u8[163840]{0}', space=vmem, size = 0x28000, scoped, tag = 'input window, operand 0']
    loop: start=0, step=1, limit=4
    $region2: #{unet_up3_forward.8} parent=1 // loop_pre_header
      _
    $region3: #{unet_up3_forward.8} parent=1 // loop_header
      %s11 = sphi 0, %s15
      %p12 = scmp.ge.s32.totalorder %s11, 4
      %s21 = sphi 0, %s23
      %s24 = sphi 0, %s21
      %s25 = sphi 0, %s24
      %s41 = sphi 0, %s25
      %s45 = sphi 0, %s45
      %s47 = sphi 0, %s45
      %s48 = sphi 0, %s47
      %s62 = sphi 0, %s48
      %s68 = sphi 0, %s70
      %s71 = sphi 0, %s68
      %s72 = sphi 0, %s71
      %s88 = sphi 0, %s72
      %s94 = sphi 0, %s96
      %s97 = sphi 0, %s94
      %s98 = sphi 0, %s97
      %s114 = sphi 0, %s98
      %s120 = sphi 0, %s122
      %s123 = sphi 0, %s120
      %s124 = sphi 0, %s123
      %s140 = sphi 0, %s124
    $region4: #{unet_up3_forward.8} parent=1 // loop_header_branch
      %14 = sbr.rel (%p12) target = $region8
    $region5: #{unet_up3_forward.8} parent=1 // loop_body
      %s16 = ssub.s32 %s11, 1
      %s17 = ssub.s32 %s11, 2
      %s18 = sadd.s32 %s11, 1
      %s19 = ssub.s32 %s11, %s18
      %p20 = scmp.eq.s32.totalorder %s19, 0
      %s22 = sadd.s32 %s21, 1
      %s23 = scalar_select %p20, %s21, %s22
      %p26 = pneg %p20
      %p27 = scmp.eq.s32.totalorder %s11, 1
      %p28 = por %p26, %p27
      %p29 = scmp.ne.s32.totalorder %s21, %s24
      %p30 = scmp.eq.s32.totalorder %s11, 0
      %p31 = por %p29, %p30
      %p32 = scmp.ne.s32.totalorder %s21, %s24
      %p33 = scmp.eq.s32.totalorder %s16, 1
      %p34 = por %p32, %p33
      %p35 = scmp.ne.s32.totalorder %s24, %s25
      %p36 = scmp.eq.s32.totalorder %s16, 0
      %p37 = por %p35, %p36
      %p38 = scmp.ne.s32.totalorder %s24, %s25
      %p39 = scmp.eq.s32.totalorder %s17, 1
      %p40 = por %p38, %p39
      %p42 = scmp.ne.s32.totalorder %s25, %s41
      %p43 = scmp.eq.s32.totalorder %s17, 0
      %p44 = por %p42, %p43
      %s46 = sadd.s32 %s45, 1
      %p49 = scmp.eq.s32.totalorder %s11, 1
      %p50 = scmp.ne.s32.totalorder %s45, %s47
      %p51 = scmp.eq.s32.totalorder %s11, 0
      %p52 = por %p50, %p51
      %p53 = scmp.ne.s32.totalorder %s45, %s47
      %p54 = scmp.eq.s32.totalorder %s16, 1
      %p55 = por %p53, %p54
      %p56 = scmp.ne.s32.totalorder %s47, %s48
      %p57 = scmp.eq.s32.totalorder %s16, 0
      %p58 = por %p56, %p57
      %p59 = scmp.ne.s32.totalorder %s47, %s48
      %p60 = scmp.eq.s32.totalorder %s17, 1
      %p61 = por %p59, %p60
      %p63 = scmp.ne.s32.totalorder %s48, %s62
      %p64 = scmp.eq.s32.totalorder %s17, 0
      %p65 = por %p63, %p64
      %s66 = ssub.s32 %s11, %s18
      %p67 = scmp.eq.s32.totalorder %s66, 0
      %s69 = sadd.s32 %s68, 1
      %s70 = scalar_select %p67, %s68, %s69
      %p73 = pneg %p67
      %p74 = scmp.eq.s32.totalorder %s11, 1
      %p75 = por %p73, %p74
      %p76 = scmp.ne.s32.totalorder %s68, %s71
      %p77 = scmp.eq.s32.totalorder %s11, 0
      %p78 = por %p76, %p77
      %p79 = scmp.ne.s32.totalorder %s68, %s71
      %p80 = scmp.eq.s32.totalorder %s16, 1
      %p81 = por %p79, %p80
      %p82 = scmp.ne.s32.totalorder %s71, %s72
      %p83 = scmp.eq.s32.totalorder %s16, 0
      %p84 = por %p82, %p83
      %p85 = scmp.ne.s32.totalorder %s71, %s72
      %p86 = scmp.eq.s32.totalorder %s17, 1
      %p87 = por %p85, %p86
      %p89 = scmp.ne.s32.totalorder %s72, %s88
      %p90 = scmp.eq.s32.totalorder %s17, 0
      %p91 = por %p89, %p90
      %s92 = ssub.s32 %s11, %s18
      %p93 = scmp.eq.s32.totalorder %s92, 0
      %s95 = sadd.s32 %s94, 1
      %s96 = scalar_select %p93, %s94, %s95
      %p99 = pneg %p93
      %p100 = scmp.eq.s32.totalorder %s11, 1
      %p101 = por %p99, %p100
      %p102 = scmp.ne.s32.totalorder %s94, %s97
      %p103 = scmp.eq.s32.totalorder %s11, 0
      %p104 = por %p102, %p103
      %p105 = scmp.ne.s32.totalorder %s94, %s97
      %p106 = scmp.eq.s32.totalorder %s16, 1
      %p107 = por %p105, %p106
      %p108 = scmp.ne.s32.totalorder %s97, %s98
      %p109 = scmp.eq.s32.totalorder %s16, 0
      %p110 = por %p108, %p109
      %p111 = scmp.ne.s32.totalorder %s97, %s98
      %p112 = scmp.eq.s32.totalorder %s17, 1
      %p113 = por %p111, %p112
      %p115 = scmp.ne.s32.totalorder %s98, %s114
      %p116 = scmp.eq.s32.totalorder %s17, 0
      %p117 = por %p115, %p116
      %s118 = ssub.s32 %s11, %s18
      %p119 = scmp.eq.s32.totalorder %s118, 0
      %s121 = sadd.s32 %s120, 1
      %s122 = scalar_select %p119, %s120, %s121
      %p125 = pneg %p119
      %p126 = scmp.eq.s32.totalorder %s11, 1
      %p127 = por %p125, %p126
      %p128 = scmp.ne.s32.totalorder %s120, %s123
      %p129 = scmp.eq.s32.totalorder %s11, 0
      %p130 = por %p128, %p129
      %p131 = scmp.ne.s32.totalorder %s120, %s123
      %p132 = scmp.eq.s32.totalorder %s16, 1
      %p133 = por %p131, %p132
      %p134 = scmp.ne.s32.totalorder %s123, %s124
      %p135 = scmp.eq.s32.totalorder %s16, 0
      %p136 = por %p134, %p135
      %p137 = scmp.ne.s32.totalorder %s123, %s124
      %p138 = scmp.eq.s32.totalorder %s17, 1
      %p139 = por %p137, %p138
      %p141 = scmp.ne.s32.totalorder %s124, %s140
      %p142 = scmp.eq.s32.totalorder %s17, 0
      %p143 = por %p141, %p142
      %p144 = scmp.le.s32.totalorder 1, %s11
      %p145 = scmp.lt.s32.totalorder %s11, 3
      %p146 = pnand %p144, %p145
      %p147 = pneg %p146
      // Predicated region
      $region9: #{unet_up3_forward.8} parent=5 // pred_check
        _
      $region10: #{unet_up3_forward.8} parent=5 // pred_check_branch
        %149 = sbr.rel (%p146) target = $region12
      $region11: #{unet_up3_forward.8} parent=5 // pred_region
        %s150 = ssub.s32 %s11, 1
        // Predicated region
        $region13: #{unet_up3_forward.8} parent=11 // pred_check
          %p151 = pneg %p58
        $region14: #{unet_up3_forward.8} parent=11 // pred_check_branch
          %153 = sbr.rel (%p151) target = $region16
        $region15: #{unet_up3_forward.8} parent=11 // pred_region
          _
        $region16: #{unet_up3_forward.8} parent=11 // pred_fallthru
          _
      $region12: #{unet_up3_forward.8} parent=5 // pred_fallthru
        _
      %p154 = scmp.lt.s32.totalorder %s11, 2
      // Predicated region
      $region17: #{unet_up3_forward.8} parent=5 // pred_check
        %p155 = pneg %p154
      $region18: #{unet_up3_forward.8} parent=5 // pred_check_branch
        %157 = sbr.rel (%p155) target = $region20
      $region19: #{unet_up3_forward.8} parent=5 // pred_region
        // Predicated region
        $region21: #{unet_up3_forward.8} parent=19 // pred_check
          %p158 = pneg %p31
        $region22: #{unet_up3_forward.8} parent=19 // pred_check_branch
          %160 = sbr.rel (%p158) target = $region24
        $region23: #{unet_up3_forward.8} parent=19 // pred_region
          %s161 = sand.u32 %s21, 1
          %s162 = sand.u32 %s21, 1
          %s163 = smul.addr %s162, 160
          %s164 = scalar_lea.vmem [#allocation2], %s163
          %s165 = smul.u32 8, %s11
          %s166 = smul.addr %s165, 4
          %s167 = scalar_lea.vmem %s0, %s166
          // Predicated region
          $region25: #{unet_up3_forward.8} parent=23 // pred_check
            _
          $region26: #{unet_up3_forward.8} parent=23 // pred_check_branch
            %169 = sbr.rel (0) target = $region28
          $region27: #{unet_up3_forward.8} parent=23 // pred_region
            // Predicated region
            $region29: #{unet_up3_forward.8} parent=27 // pred_check
              _
            $region30: #{unet_up3_forward.8} parent=27 // pred_check_branch
              %171 = sbr.rel (0) target = $region32
            $region31: #{unet_up3_forward.8} parent=27 // pred_region
              loop: start=0, step=1, limit=1
              $region33: #{unet_up3_forward.8} parent=31 // loop_pre_header
                _
              $region34: #{unet_up3_forward.8} parent=31 // loop_header
                %s173 = sphi 0, %s177
                %p174 = scmp.ge.s32.totalorder %s173, 1
                %s178 = sphi %s167, %s167
                %s179 = sphi %s164, %s164
              $region35: #{unet_up3_forward.8} parent=31 // loop_header_branch
                %176 = sbr.rel (%p174) target = $region39
              $region36: #{unet_up3_forward.8} parent=31 // loop_body
                %v180 = vld [vmem:[%s178] sm:$0xff]
                %181 = vst [vmem:[%s179] sm:$0xff] %v180
                %v182 = vld [vmem:[%s178 + $0x8] sm:$0xff]
                %183 = vst [vmem:[%s179 + $0x8] sm:$0xff] %v182
                %v184 = vld [vmem:[%s178 + $0x10] sm:$0xff]
                %185 = vst [vmem:[%s179 + $0x10] sm:$0xff] %v184
                %v186 = vld [vmem:[%s178 + $0x18] sm:$0xff]
                %187 = vst [vmem:[%s179 + $0x18] sm:$0xff] %v186
                %v188 = vld [vmem:[%s178 + $0x40] sm:$0xff]
                %189 = vst [vmem:[%s179 + $0x20] sm:$0xff] %v188
                %v190 = vld [vmem:[%s178 + $0x48] sm:$0xff]
                %191 = vst [vmem:[%s179 + $0x28] sm:$0xff] %v190
                %v192 = vld [vmem:[%s178 + $0x50] sm:$0xff]
                %193 = vst [vmem:[%s179 + $0x30] sm:$0xff] %v192
                %v194 = vld [vmem:[%s178 + $0x58] sm:$0xff]
                %195 = vst [vmem:[%s179 + $0x38] sm:$0xff] %v194
                %v196 = vld [vmem:[%s178 + $0x80] sm:$0xff]
                %197 = vst [vmem:[%s179 + $0x40] sm:$0xff] %v196
                %v198 = vld [vmem:[%s178 + $0x88] sm:$0xff]
                %199 = vst [vmem:[%s179 + $0x48] sm:$0xff] %v198
                %v200 = vld [vmem:[%s178 + $0x90] sm:$0xff]
                %201 = vst [vmem:[%s179 + $0x50] sm:$0xff] %v200
                %v202 = vld [vmem:[%s178 + $0x98] sm:$0xff]
                %203 = vst [vmem:[%s179 + $0x58] sm:$0xff] %v202
                %v204 = vld [vmem:[%s178 + $0xc0] sm:$0xff]
                %205 = vst [vmem:[%s179 + $0x60] sm:$0xff] %v204
                %v206 = vld [vmem:[%s178 + $0xc8] sm:$0xff]
                %207 = vst [vmem:[%s179 + $0x68] sm:$0xff] %v206
                %v208 = vld [vmem:[%s178 + $0xd0] sm:$0xff]
                %209 = vst [vmem:[%s179 + $0x70] sm:$0xff] %v208
                %v210 = vld [vmem:[%s178 + $0xd8] sm:$0xff]
                %211 = vst [vmem:[%s179 + $0x78] sm:$0xff] %v210
                %v212 = vld [vmem:[%s178 + $0x100] sm:$0xff]
                %213 = vst [vmem:[%s179 + $0x80] sm:$0xff] %v212
                %v214 = vld [vmem:[%s178 + $0x108] sm:$0xff]
                %215 = vst [vmem:[%s179 + $0x88] sm:$0xff] %v214
                %v216 = vld [vmem:[%s178 + $0x110] sm:$0xff]
                %217 = vst [vmem:[%s179 + $0x90] sm:$0xff] %v216
                %v218 = vld [vmem:[%s178 + $0x118] sm:$0xff]
                %219 = vst [vmem:[%s179 + $0x98] sm:$0xff] %v218
              $region37: #{unet_up3_forward.8} parent=31 // loop_footer
                %s177 = sadd.s32 1, %s173
              $region38: #{unet_up3_forward.8} parent=31 // loop_footer_branch
                %172 = sbr.rel target = $region34
              $region39: #{unet_up3_forward.8} parent=31 // loop_exit
                _
            $region32: #{unet_up3_forward.8} parent=27 // pred_fallthru
              _
            // Predicated region
            $region40: #{unet_up3_forward.8} parent=27 // pred_check
              _
            $region41: #{unet_up3_forward.8} parent=27 // pred_check_branch
              %221 = sbr.rel target = $region43
            $region42: #{unet_up3_forward.8} parent=27 // pred_region
              _
            $region43: #{unet_up3_forward.8} parent=27 // pred_fallthru
              _
          $region28: #{unet_up3_forward.8} parent=23 // pred_fallthru
            _
          %222 = vnop
        $region24: #{unet_up3_forward.8} parent=19 // pred_fallthru
          _
      $region20: #{unet_up3_forward.8} parent=5 // pred_fallthru
        _
      %p223 = scmp.le.s32.totalorder 1, %s11
      %p224 = scmp.lt.s32.totalorder %s11, 3
      %p225 = pnand %p223, %p224
      %p226 = pneg %p225
      // Predicated region
      $region44: #{unet_up3_forward.8} parent=5 // pred_check
        _
      $region45: #{unet_up3_forward.8} parent=5 // pred_check_branch
        %228 = sbr.rel (%p225) target = $region47
      $region46: #{unet_up3_forward.8} parent=5 // pred_region
        %s229 = ssub.s32 %s11, 1
        %s230 = sand.u32 %s24, 1
        %s231 = sand.u32 %s24, 1
        %s232 = smul.addr %s231, 160
        %s233 = scalar_lea.vmem [#allocation2], %s232
        // Predicated region
        $region48: #{unet_up3_forward.8} parent=46 // pred_check
          %p234 = pneg %p37
        $region49: #{unet_up3_forward.8} parent=46 // pred_check_branch
          %236 = sbr.rel (%p234) target = $region51
        $region50: #{unet_up3_forward.8} parent=46 // pred_region
          _
        $region51: #{unet_up3_forward.8} parent=46 // pred_fallthru
          _
        %s237 = sand.u32 %s24, 1
        %s238 = sand.u32 %s24, 1
        %s239 = smul.addr %s238, 160
        %s240 = scalar_lea.vmem [#allocation2], %s239
        %p241 = pneg %p37
        %p242 = pneg %p34
        %p243 = pneg %p58
        %p244 = pneg %p55
        %p245 = pneg %p84
        %p246 = pneg %p81
        %s247 = smul.u32 8, %s16
        %p248 = scmp.lt.s32.totalorder %s247, 15
        %s249 = scalar_select %p248, %s247, 15
        %s250 = smul.addr %s249, 2
        %s251 = scalar_lea.vmem %s2, %s250
        %p252 = pneg %p110
        %p253 = pneg %p107
        %p254 = scmp.lt.s32.totalorder %s16, 1
        %s255 = scalar_select %p254, %s16, 1
        %s256 = smul.addr %s255, 4
        %s257 = scalar_lea.vmem %s3, %s256
        %p258 = pneg %p136
        %p259 = pneg %p133
        %p260 = scmp.lt.s32.totalorder %s16, 1
        %s261 = scalar_select %p260, %s16, 1
        %s262 = smul.addr %s261, 4
        %s263 = scalar_lea.vmem %s4, %s262
        %s264 = smul.u32 8, %s16
        %s265 = smul.u32 8, %s16
        %p266 = scmp.lt.s32.totalorder %s265, 15
        %s267 = scalar_select %p266, %s265, 15
        %s268 = smul.addr %s267, 2
        %s269 = scalar_lea.vmem %s2, %s268
        %s270 = smul.u32 8, %s16
        %p271 = scmp.lt.s32.totalorder %s16, 1
        %s272 = scalar_select %p271, %s16, 1
        %s273 = smul.addr %s272, 4
        %s274 = scalar_lea.vmem %s3, %s273
        %p275 = scmp.lt.s32.totalorder %s16, 1
        %s276 = scalar_select %p275, %s16, 1
        %s277 = smul.addr %s276, 4
        %s278 = scalar_lea.vmem %s4, %s277
        %v280 = vld [vmem:[%s1] sm:$0x3]
        %v281 = vld [vmem:[%s233] sm:$0xff]
        %v282 = vld [vmem:[%s233 + $0x8] sm:$0xff]
        %v283 = vld [vmem:[%s233 + $0x10] sm:$0xff]
        %v284 = vld [vmem:[%s233 + $0x18] sm:$0xff]
        %v285 = vld [vmem:[%s233 + $0x20] sm:$0xff]
        %v286 = vld [vmem:[%s233 + $0x28] sm:$0xff]
        %v287 = vld [vmem:[%s233 + $0x30] sm:$0xff]
        %v288 = vld [vmem:[%s233 + $0x38] sm:$0xff]
        %v289 = vld [vmem:[%s233 + $0x40] sm:$0xff]
        %v290 = vld [vmem:[%s233 + $0x48] sm:$0xff]
        %v291 = vld [vmem:[%s233 + $0x50] sm:$0xff]
        %v292 = vld [vmem:[%s233 + $0x58] sm:$0xff]
        %v293 = vld [vmem:[%s233 + $0x60] sm:$0xff]
        %v294 = vld [vmem:[%s233 + $0x68] sm:$0xff]
        %v295 = vld [vmem:[%s233 + $0x70] sm:$0xff]
        %v296 = vld [vmem:[%s233 + $0x78] sm:$0xff]
        %v297 = vld [vmem:[%s233 + $0x80] sm:$0x33]
        %v298 = vld [vmem:[%s233 + $0x88] sm:$0x33]
        %v299 = vld [vmem:[%s233 + $0x90] sm:$0x33]
        %v300 = vld [vmem:[%s233 + $0x98] sm:$0x33]
        %v321 = vunpack.c.l.b16 %v281
        %v322 = vunpack.c.h.b16 %v281
        %v323 = vunpack.c.l.b16 %v282
        %v324 = vunpack.c.h.b16 %v282
        %v325 = vunpack.c.l.b16 %v283
        %v326 = vunpack.c.h.b16 %v283
        %v327 = vunpack.c.l.b16 %v284
        %v328 = vunpack.c.h.b16 %v284
        %v329 = vunpack.c.l.b16 %v285
        %v330 = vunpack.c.h.b16 %v285
        %v331 = vunpack.c.l.b16 %v286
        %v332 = vunpack.c.h.b16 %v286
        %v333 = vunpack.c.l.b16 %v287
        %v334 = vunpack.c.h.b16 %v287
        %v335 = vunpack.c.l.b16 %v288
        %v336 = vunpack.c.h.b16 %v288
        %v337 = vunpack.c.l.b16 %v289
        %v338 = vunpack.c.h.b16 %v289
        %v339 = vunpack.c.l.b16 %v290
        %v340 = vunpack.c.h.b16 %v290
        %v341 = vunpack.c.l.b16 %v291
        %v342 = vunpack.c.h.b16 %v291
        %v343 = vunpack.c.l.b16 %v292
        %v344 = vunpack.c.h.b16 %v292
        %v345 = vunpack.c.l.b16 %v293
        %v346 = vunpack.c.h.b16 %v293
        %v347 = vunpack.c.l.b16 %v294
        %v348 = vunpack.c.h.b16 %v294
        %v349 = vunpack.c.l.b16 %v295
        %v350 = vunpack.c.h.b16 %v295
        %v351 = vunpack.c.l.b16 %v296
        %v352 = vunpack.c.h.b16 %v296
        %v353 = vunpack.c.l.b16 %v297
        %v354 = vunpack.c.h.b16 %v297
        %v355 = vunpack.c.l.b16 %v298
        %v356 = vunpack.c.h.b16 %v298
        %v357 = vunpack.c.l.b16 %v299
        %v358 = vunpack.c.h.b16 %v299
        %v359 = vunpack.c.l.b16 %v300
        %v360 = vunpack.c.h.b16 %v300
        %v361 = vpack.c.b16 %v329, %v321
        %v362 = vpack.c.b16 %v330, %v322
        %v363 = vpack.c.b16 %v331, %v323
        %v364 = vpack.c.b16 %v332, %v324
        %v365 = vpack.c.b16 %v333, %v325
        %v366 = vpack.c.b16 %v334, %v326
        %v367 = vpack.c.b16 %v335, %v327
        %v368 = vpack.c.b16 %v336, %v328
        %v369 = vpack.c.b16 %v345, %v337
        %v370 = vpack.c.b16 %v346, %v338
        %v371 = vpack.c.b16 %v347, %v339
        %v372 = vpack.c.b16 %v348, %v340
        %v373 = vpack.c.b16 %v349, %v341
        %v374 = vpack.c.b16 %v350, %v342
        %v375 = vpack.c.b16 %v351, %v343
        %v376 = vpack.c.b16 %v352, %v344
        %v377 = vpack.c.b16 %v353, %v353
        %v378 = vpack.c.b16 %v354, %v354
        %v379 = vpack.c.b16 %v355, %v355
        %v380 = vpack.c.b16 %v356, %v356
        %v381 = vpack.c.b16 %v357, %v357
        %v382 = vpack.c.b16 %v358, %v358
        %v383 = vpack.c.b16 %v359, %v359
        %v384 = vpack.c.b16 %v360, %v360
        %vm401 = vcmask 293888
        %v403 = vsel %vm401, %v280, 0
        %vm405 = vcmask 1041408
        %v407 = vsel %vm405, %v377, 0
        %v410 = vsel %vm405, %v378, 0
        %v413 = vsel %vm405, %v379, 0
        %v416 = vsel %vm405, %v380, 0
        %v419 = vsel %vm405, %v381, 0
        %v422 = vsel %vm405, %v382, 0
        %v425 = vsel %vm405, %v383, 0
        %v428 = vsel %vm405, %v384, 0
        %430 = vmatprep.subr.bf16.mxu0 %v362
        %431 = vmatpush1.bf16.msra.mxu0 %v361
        %432 = vmatprep.subr.bf16.mxu0 %v370
        %433 = vmatpush1.bf16.msra.mxu0 %v369
        %434 = vmatprep.subr.bf16.mxu0 %v410
        %435 = vmatpush1.bf16.msra.mxu0 %v407
        %436 = vmatprep.subr.bf16.mxu0 0
        %437 = vmatpush1.bf16.msra.mxu0 0
        %438 = vmatprep.subr.bf16.mxu0 0
        %439 = vmatpush1.bf16.msra.mxu0 0
        %440 = vmatprep.subr.bf16.mxu0 0
        %441 = vmatpush1.bf16.msra.mxu0 0
        %442 = vmatprep.subr.bf16.mxu0 0
        %443 = vmatpush1.bf16.msra.mxu0 0
        %444 = vmatprep.subr.bf16.mxu0 0
        %445 = vmatpush1.bf16.msra.mxu0 0
        %446 = vmatprep.subr.bf16.mxu0 0
        %447 = vmatpush1.bf16.msra.mxu0 0
        %448 = vmatprep.subr.bf16.mxu0 0
        %449 = vmatpush1.bf16.msra.mxu0 0
        %450 = vmatprep.subr.bf16.mxu0 0
        %451 = vmatpush1.bf16.msra.mxu0 0
        %452 = vmatprep.subr.bf16.mxu0 0
        %453 = vmatpush1.bf16.msra.mxu0 0
        %454 = vmatprep.subr.bf16.mxu0 0
        %455 = vmatpush1.bf16.msra.mxu0 0
        %456 = vmatprep.subr.bf16.mxu0 0
        %457 = vmatpush1.bf16.msra.mxu0 0
        %458 = vmatprep.subr.bf16.mxu0 0
        %459 = vmatpush1.bf16.msra.mxu0 0
        %460 = vmatprep.subr.bf16.mxu0 0
        %461 = vmatpush1.bf16.msra.mxu0 0
        %462 = vmatprep.mubr.bf16.mxu0 0
        %463 = vmatmul.mubr.bf16.gmra.mrb[0].mxu0 %v403
        %v464 = vpop.f32.mrb[0].mxu0
        %v465 = vadd.f32 0.0, %v464
        %v466 = vpop.f32.mrb[0].mxu0
        %v467 = vadd.f32 0.0, %v466
        %v468 = vpop.f32.mrb[0].mxu0
        %v469 = vpop.f32.mrb[0].mxu0
        %470 = vdwg.mxu0
        %471 = vmatprep.subr.bf16.mxu0 %v364
        %472 = vmatpush1.bf16.msra.mxu0 %v363
        %473 = vmatprep.subr.bf16.mxu0 %v372
        %474 = vmatpush1.bf16.msra.mxu0 %v371
        %475 = vmatprep.subr.bf16.mxu0 %v416
        %476 = vmatpush1.bf16.msra.mxu0 %v413
        %477 = vmatprep.subr.bf16.mxu0 0
        %478 = vmatpush1.bf16.msra.mxu0 0
        %479 = vmatprep.subr.bf16.mxu0 0
        %480 = vmatpush1.bf16.msra.mxu0 0
        %481 = vmatprep.subr.bf16.mxu0 0
        %482 = vmatpush1.bf16.msra.mxu0 0
        %483 = vmatprep.subr.bf16.mxu0 0
        %484 = vmatpush1.bf16.msra.mxu0 0
        %485 = vmatprep.subr.bf16.mxu0 0
        %486 = vmatpush1.bf16.msra.mxu0 0
        %487 = vmatprep.subr.bf16.mxu0 0
        %488 = vmatpush1.bf16.msra.mxu0 0
        %489 = vmatprep.subr.bf16.mxu0 0
        %490 = vmatpush1.bf16.msra.mxu0 0
        %491 = vmatprep.subr.bf16.mxu0 0
        %492 = vmatpush1.bf16.msra.mxu0 0
        %493 = vmatprep.subr.bf16.mxu0 0
        %494 = vmatpush1.bf16.msra.mxu0 0
        %495 = vmatprep.subr.bf16.mxu0 0
        %496 = vmatpush1.bf16.msra.mxu0 0
        %497 = vmatprep.subr.bf16.mxu0 0
        %498 = vmatpush1.bf16.msra.mxu0 0
        %499 = vmatprep.subr.bf16.mxu0 0
        %500 = vmatpush1.bf16.msra.mxu0 0
        %501 = vmatprep.subr.bf16.mxu0 0
        %502 = vmatpush1.bf16.msra.mxu0 0
        %503 = vmatprep.mubr.bf16.mxu0 0
        %504 = vmatmul.mubr.bf16.gmra.mrb[0].mxu0 %v403
        %v505 = vpop.f32.mrb[0].mxu0
        %v506 = vadd.f32 0.0, %v505
        %v507 = vpop.f32.mrb[0].mxu0
        %v508 = vadd.f32 0.0, %v507
        %v509 = vpop.f32.mrb[0].mxu0
        %v510 = vpop.f32.mrb[0].mxu0
        %511 = vdwg.mxu0
        %512 = vmatprep.subr.bf16.mxu0 %v366
        %513 = vmatpush1.bf16.msra.mxu0 %v365
        %514 = vmatprep.subr.bf16.mxu0 %v374
        %515 = vmatpush1.bf16.msra.mxu0 %v373
        %516 = vmatprep.subr.bf16.mxu0 %v422
        %517 = vmatpush1.bf16.msra.mxu0 %v419
        %518 = vmatprep.subr.bf16.mxu0 0
        %519 = vmatpush1.bf16.msra.mxu0 0
        %520 = vmatprep.subr.bf16.mxu0 0
        %521 = vmatpush1.bf16.msra.mxu0 0
        %522 = vmatprep.subr.bf16.mxu0 0
        %523 = vmatpush1.bf16.msra.mxu0 0
        %524 = vmatprep.subr.bf16.mxu0 0
        %525 = vmatpush1.bf16.msra.mxu0 0
        %526 = vmatprep.subr.bf16.mxu0 0
        %527 = vmatpush1.bf16.msra.mxu0 0
        %528 = vmatprep.subr.bf16.mxu0 0
        %529 = vmatpush1.bf16.msra.mxu0 0
        %530 = vmatprep.subr.bf16.mxu0 0
        %531 = vmatpush1.bf16.msra.mxu0 0
        %532 = vmatprep.subr.bf16.mxu0 0
        %533 = vmatpush1.bf16.msra.mxu0 0
        %534 = vmatprep.subr.bf16.mxu0 0
        %535 = vmatpush1.bf16.msra.mxu0 0
        %536 = vmatprep.subr.bf16.mxu0 0
        %537 = vmatpush1.bf16.msra.mxu0 0
        %538 = vmatprep.subr.bf16.mxu0 0
        %539 = vmatpush1.bf16.msra.mxu0 0
        %540 = vmatprep.subr.bf16.mxu0 0
        %541 = vmatpush1.bf16.msra.mxu0 0
        %542 = vmatprep.subr.bf16.mxu0 0
        %543 = vmatpush1.bf16.msra.mxu0 0
        %544 = vmatprep.mubr.bf16.mxu0 0
        %545 = vmatmul.mubr.bf16.gmra.mrb[0].mxu0 %v403
        %v546 = vpop.f32.mrb[0].mxu0
        %v547 = vadd.f32 0.0, %v546
        %v548 = vpop.f32.mrb[0].mxu0
        %v549 = vadd.f32 0.0, %v548
        %v550 = vpop.f32.mrb[0].mxu0
        %v551 = vpop.f32.mrb[0].mxu0
        %552 = vdwg.mxu0
        %553 = vmatprep.subr.bf16.mxu0 %v368
        %554 = vmatpush1.bf16.msra.mxu0 %v367
        %555 = vmatprep.subr.bf16.mxu0 %v376
        %556 = vmatpush1.bf16.msra.mxu0 %v375
        %557 = vmatprep.subr.bf16.mxu0 %v428
        %558 = vmatpush1.bf16.msra.mxu0 %v425
        %559 = vmatprep.subr.bf16.mxu0 0
        %560 = vmatpush1.bf16.msra.mxu0 0
        %561 = vmatprep.subr.bf16.mxu0 0
        %562 = vmatpush1.bf16.msra.mxu0 0
        %563 = vmatprep.subr.bf16.mxu0 0
        %564 = vmatpush1.bf16.msra.mxu0 0
        %565 = vmatprep.subr.bf16.mxu0 0
        %566 = vmatpush1.bf16.msra.mxu0 0
        %567 = vmatprep.subr.bf16.mxu0 0
        %568 = vmatpush1.bf16.msra.mxu0 0
        %569 = vmatprep.subr.bf16.mxu0 0
        %570 = vmatpush1.bf16.msra.mxu0 0
        %571 = vmatprep.subr.bf16.mxu0 0
        %572 = vmatpush1.bf16.msra.mxu0 0
        %573 = vmatprep.subr.bf16.mxu0 0
        %574 = vmatpush1.bf16.msra.mxu0 0
        %575 = vmatprep.subr.bf16.mxu0 0
        %576 = vmatpush1.bf16.msra.mxu0 0
        %577 = vmatprep.subr.bf16.mxu0 0
        %578 = vmatpush1.bf16.msra.mxu0 0
        %579 = vmatprep.subr.bf16.mxu0 0
        %580 = vmatpush1.bf16.msra.mxu0 0
        %581 = vmatprep.subr.bf16.mxu0 0
        %582 = vmatpush1.bf16.msra.mxu0 0
        %583 = vmatprep.subr.bf16.mxu0 0
        %584 = vmatpush1.bf16.msra.mxu0 0
        %585 = vmatprep.mubr.bf16.mxu0 0
        %586 = vmatmul.mubr.bf16.gmra.mrb[0].mxu0 %v403
        %v587 = vpop.f32.mrb[0].mxu0
        %v588 = vadd.f32 0.0, %v587
        %v589 = vpop.f32.mrb[0].mxu0
        %v590 = vadd.f32 0.0, %v589
        %v591 = vpop.f32.mrb[0].mxu0
        %v592 = vpop.f32.mrb[0].mxu0
        %593 = vdwg.mxu0
        %v594 = vpack.c.bf16 %v465, %v465
        %v595 = vpack.c.bf16 %v467, %v467
        %v596 = vpack.c.bf16 %v506, %v506
        %v597 = vpack.c.bf16 %v508, %v508
        %v598 = vpack.c.bf16 %v547, %v547
        %v599 = vpack.c.bf16 %v549, %v549
        %v600 = vpack.c.bf16 %v588, %v588
        %v601 = vpack.c.bf16 %v590, %v590
        %v610 = vcombine.low %v594, %v595
        %v611 = vcombine.low %v596, %v597
        %v613 = vunpack.c.l.s4 1983009808
        %v614 = vunpack.c.0.s8 %v613
        %v615 = vlaneseq
        %v616 = vshrl.u32 %v615, 7
        %v617 = vsub.s32 %v614, %v616
        %v618 = vrot.slane %v610, %v617
        %v620 = vunpack.c.l.s4 1983009808
        %v621 = vunpack.c.0.s8 %v620
        %v622 = vlaneseq
        %v623 = vshrl.u32 %v622, 7
        %v624 = vsub.s32 %v621, %v623
        %v625 = vrot.slane %v611, %v624
        %v626 = vcombine.low %v618, %v625
        %v627 = vcombine.low %v598, %v599
        %v628 = vcombine.low %v600, %v601
        %v630 = vunpack.c.l.s4 1983009808
        %v631 = vunpack.c.0.s8 %v630
        %v632 = vlaneseq
        %v633 = vshrl.u32 %v632, 7
        %v634 = vsub.s32 %v631, %v633
        %v635 = vrot.slane %v627, %v634
        %v637 = vunpack.c.l.s4 1983009808
        %v638 = vunpack.c.0.s8 %v637
        %v639 = vlaneseq
        %v640 = vshrl.u32 %v639, 7
        %v641 = vsub.s32 %v638, %v640
        %v642 = vrot.slane %v628, %v641
        %v643 = vcombine.low %v635, %v642
        %646 = vst [vmem:[%s269] sm:$0xff] %v626
        %647 = vst [vmem:[%s269 + $0x8] sm:$0xff] %v643
        %v648 = vlaneseq
        %v649 = vand.u32 %v648, 127
        %vm650 = vcmp.eq.s32.totalorder %v649, 0
        %vm651 = vcmask 1043456
        %v652 = vsel %vm651, %v465, 0.0
        %v653 = vsel %vm651, %v467, 0.0
        %v654 = vadd.f32 %v652, %v653
        %v655 = vsel %vm651, %v506, 0.0
        %v656 = vadd.f32 %v654, %v655
        %v657 = vsel %vm651, %v508, 0.0
        %v658 = vadd.f32 %v656, %v657
        %v659 = vsel %vm651, %v547, 0.0
        %v660 = vadd.f32 %v658, %v659
        %v661 = vsel %vm651, %v549, 0.0
        %v662 = vadd.f32 %v660, %v661
        %v663 = vsel %vm651, %v588, 0.0
        %v664 = vadd.f32 %v662, %v663
        %v665 = vsel %vm651, %v590, 0.0
        %v666 = vadd.f32 %v664, %v665
        %667 = vadd.xlane.f32.xlu0 %v666
        %v668 = vpop.xlane.xlu0 %667
        %v669 = vsel %vm650, %v668, 0.0
        %670 = vst [vmem:[%s274] sm:$0xf] %v669
        %v671 = vmul.f32 %v465, %v465
        %v672 = vmul.f32 %v467, %v467
        %v673 = vmul.f32 %v506, %v506
        %v674 = vmul.f32 %v508, %v508
        %v675 = vmul.f32 %v547, %v547
        %v676 = vmul.f32 %v549, %v549
        %v677 = vmul.f32 %v588, %v588
        %v678 = vmul.f32 %v590, %v590
        %v679 = vsel %vm651, %v671, 0.0
        %v680 = vsel %vm651, %v672, 0.0
        %v681 = vadd.f32 %v679, %v680
        %v682 = vsel %vm651, %v673, 0.0
        %v683 = vadd.f32 %v681, %v682
        %v684 = vsel %vm651, %v674, 0.0
        %v685 = vadd.f32 %v683, %v684
        %v686 = vsel %vm651, %v675, 0.0
        %v687 = vadd.f32 %v685, %v686
        %v688 = vsel %vm651, %v676, 0.0
        %v689 = vadd.f32 %v687, %v688
        %v690 = vsel %vm651, %v677, 0.0
        %v691 = vadd.f32 %v689, %v690
        %v692 = vsel %vm651, %v678, 0.0
        %v693 = vadd.f32 %v691, %v692
        %694 = vadd.xlane.f32.xlu0 %v693
        %v695 = vpop.xlane.xlu0 %694
        %v696 = vsel %vm650, %v695, 0.0
        %697 = vst [vmem:[%s278] sm:$0xf] %v696
        %s698 = smul.u32 8, %s16
        %p699 = scmp.lt.s32.totalorder %s698, 15
        %s700 = scalar_select %p699, %s698, 15
        %s701 = smul.addr %s700, 2
        %s702 = scalar_lea.vmem %s2, %s701
        %p703 = scmp.lt.s32.totalorder %s16, 1
        %s704 = scalar_select %p703, %s16, 1
        %s705 = smul.addr %s704, 4
        %s706 = scalar_lea.vmem %s3, %s705
        %p707 = scmp.lt.s32.totalorder %s16, 1
        %s708 = scalar_select %p707, %s16, 1
        %s709 = smul.addr %s708, 4
        %s710 = scalar_lea.vmem %s4, %s709
        // Predicated region
        $region52: #{unet_up3_forward.8} parent=46 // pred_check
          %p711 = pneg %p81
        $region53: #{unet_up3_forward.8} parent=46 // pred_check_branch
          %713 = sbr.rel (%p711) target = $region55
        $region54: #{unet_up3_forward.8} parent=46 // pred_region
          %s714 = smul.u32 8, %s16
        $region55: #{unet_up3_forward.8} parent=46 // pred_fallthru
          _
        // Predicated region
        $region56: #{unet_up3_forward.8} parent=46 // pred_check
          %p715 = pneg %p107
        $region57: #{unet_up3_forward.8} parent=46 // pred_check_branch
          %717 = sbr.rel (%p715) target = $region59
        $region58: #{unet_up3_forward.8} parent=46 // pred_region
          _
        $region59: #{unet_up3_forward.8} parent=46 // pred_fallthru
          _
        // Predicated region
        $region60: #{unet_up3_forward.8} parent=46 // pred_check
          %p718 = pneg %p133
        $region61: #{unet_up3_forward.8} parent=46 // pred_check_branch
          %720 = sbr.rel (%p718) target = $region63
        $region62: #{unet_up3_forward.8} parent=46 // pred_region
          _
        $region63: #{unet_up3_forward.8} parent=46 // pred_fallthru
          _
      $region47: #{unet_up3_forward.8} parent=5 // pred_fallthru
        _
      %p721 = scmp.le.s32.totalorder 2, %s11
      // Predicated region
      $region64: #{unet_up3_forward.8} parent=5 // pred_check
        %p722 = pneg %p721
      $region65: #{unet_up3_forward.8} parent=5 // pred_check_branch
        %724 = sbr.rel (%p722) target = $region67
      $region66: #{unet_up3_forward.8} parent=5 // pred_region
        %s725 = ssub.s32 %s11, 2
        // Predicated region
        $region68: #{unet_up3_forward.8} parent=66 // pred_check
          %p726 = pneg %p87
        $region69: #{unet_up3_forward.8} parent=66 // pred_check_branch
          %728 = sbr.rel (%p726) target = $region71
        $region70: #{unet_up3_forward.8} parent=66 // pred_region
          %s729 = smul.u32 8, %s17
          %p730 = scmp.lt.s32.totalorder %s729, 15
          %s731 = scalar_select %p730, %s729, 15
          %s732 = smul.addr %s731, 2
          %s733 = scalar_lea.vmem %s2, %s732
        $region71: #{unet_up3_forward.8} parent=66 // pred_fallthru
          _
        // Predicated region
        $region72: #{unet_up3_forward.8} parent=66 // pred_check
          %p734 = pneg %p113
        $region73: #{unet_up3_forward.8} parent=66 // pred_check_branch
          %736 = sbr.rel (%p734) target = $region75
        $region74: #{unet_up3_forward.8} parent=66 // pred_region
          %p737 = scmp.lt.s32.totalorder %s17, 1
          %s738 = scalar_select %p737, %s17, 1
          %s739 = smul.addr %s738, 4
          %s740 = scalar_lea.vmem %s3, %s739
        $region75: #{unet_up3_forward.8} parent=66 // pred_fallthru
          _
        // Predicated region
        $region76: #{unet_up3_forward.8} parent=66 // pred_check
          %p741 = pneg %p139
        $region77: #{unet_up3_forward.8} parent=66 // pred_check_branch
          %743 = sbr.rel (%p741) target = $region79
        $region78: #{unet_up3_forward.8} parent=66 // pred_region
          %p744 = scmp.lt.s32.totalorder %s17, 1
          %s745 = scalar_select %p744, %s17, 1
          %s746 = smul.addr %s745, 4
          %s747 = scalar_lea.vmem %s4, %s746
        $region79: #{unet_up3_forward.8} parent=66 // pred_fallthru
          _
      $region67: #{unet_up3_forward.8} parent=5 // pred_fallthru
        _
    $region6: #{unet_up3_forward.8} parent=1 // loop_footer
      %s15 = sadd.s32 1, %s11
    $region7: #{unet_up3_forward.8} parent=1 // loop_footer_branch
      %10 = sbr.rel target = $region3
    $region8: #{unet_up3_forward.8} parent=1 // loop_exit
      _

// kernel: unet_up3_forward.9
$region0: #{unet_up3_forward.9}
  #allocation0 [shape = 'u32[]', space=smem, size = 0x4, offset = 0x4, fixed_abs, tag = 'smem constant byte address 0x4 - core index']
  #allocation1 [shape = 'u32[144,128]{1,0:T(1,128)}', space=vmem, size = 0x12000, scoped, tag = 'internal scratch']
  %s0 = inlined_call_operand.vmem [shape: bf16[4,2048], index: 0, kind: input, shape index: {}]
  %s1 = inlined_call_operand.vmem [shape: f32[4,1], index: 1, kind: input, shape index: {}]
  %s2 = inlined_call_operand.vmem [shape: f32[4,1], index: 2, kind: input, shape index: {}]
  %s3 = inlined_call_operand.vmem [shape: f32[2,4,1024], index: 3, kind: output, shape index: {}]
  %s4 = sld [smem:[#allocation0]]
  $region45: #{unet_up3_forward.9} parent=0
    _
  %s6 = ssub.s32 1, %s4
  %s7 = scalar_select 0, %s6, %s4
  loop: start=0, step=1, limit=4
  $region2: #{unet_up3_forward.9} parent=0 // loop_pre_header
    _
  $region3: #{unet_up3_forward.9} parent=0 // loop_header
    %s9 = sphi 0, %s13
    %p10 = scmp.ge.s32.totalorder %s9, 4
    %s16 = sphi 0, %s28
    %s17 = sphi 0, %s24
    %s18 = sphi 0, %s16
    %s19 = sphi 0, %s17
    %s20 = sphi 0, %s18
    %s21 = sphi 0, %s19
    %s33 = sphi 0, %s35
    %s36 = sphi 0, %s33
    %s37 = sphi 0, %s36
    %s53 = sphi 0, %s37
    %s57 = sphi 0, %s57
    %s59 = sphi 0, %s57
    %s60 = sphi 0, %s59
    %s74 = sphi 0, %s60
    %s78 = sphi 0, %s78
    %s80 = sphi 0, %s78
    %s81 = sphi 0, %s80
    %s95 = sphi 0, %s81
    %s103 = sphi 0, %s105
    %s106 = sphi 0, %s103
    %s107 = sphi 0, %s106
    %s123 = sphi 0, %s107
  $region4: #{unet_up3_forward.9} parent=0 // loop_header_branch
    %12 = sbr.rel (%p10) target = $region8
  $region5: #{unet_up3_forward.9} parent=0 // loop_body
    %s14 = ssub.s32 %s9, 1
    %s15 = ssub.s32 %s9, 2
    %s22 = sadd.s32 1, %s17
    %p23 = scmp.ge.s32.totalorder %s22, 1
    %s24 = scalar_select %p23, 0, %s22
    %s25 = sadd.s32 1, %s16
    %s26 = scalar_select %p23, %s25, %s16
    %p27 = scmp.ge.s32.totalorder %s26, 2
    %s28 = scalar_select %p27, 0, %s26
    %s29 = sadd.s32 %s16, %s17
    %s30 = sadd.s32 %s28, %s24
    %s31 = ssub.s32 %s29, %s30
    %p32 = scmp.eq.s32.totalorder %s31, 0
    %s34 = sadd.s32 %s33, 1
    %s35 = scalar_select %p32, %s33, %s34
    %p38 = pneg %p32
    %p39 = scmp.eq.s32.totalorder %s9, 1
    %p40 = por %p38, %p39
    %p41 = scmp.ne.s32.totalorder %s33, %s36
    %p42 = scmp.eq.s32.totalorder %s9, 0
    %p43 = por %p41, %p42
    %p44 = scmp.ne.s32.totalorder %s33, %s36
    %p45 = scmp.eq.s32.totalorder %s14, 1
    %p46 = por %p44, %p45
    %p47 = scmp.ne.s32.totalorder %s36, %s37
    %p48 = scmp.eq.s32.totalorder %s14, 0
    %p49 = por %p47, %p48
    %p50 = scmp.ne.s32.totalorder %s36, %s37
    %p51 = scmp.eq.s32.totalorder %s15, 1
    %p52 = por %p50, %p51
    %p54 = scmp.ne.s32.totalorder %s37, %s53
    %p55 = scmp.eq.s32.totalorder %s15, 0
    %p56 = por %p54, %p55
    %s58 = sadd.s32 %s57, 1
    %p61 = scmp.eq.s32.totalorder %s9, 1
    %p62 = scmp.ne.s32.totalorder %s57, %s59
    %p63 = scmp.eq.s32.totalorder %s9, 0
    %p64 = por %p62, %p63
    %p65 = scmp.ne.s32.totalorder %s57, %s59
    %p66 = scmp.eq.s32.totalorder %s14, 1
    %p67 = por %p65, %p66
    %p68 = scmp.ne.s32.totalorder %s59, %s60
    %p69 = scmp.eq.s32.totalorder %s14, 0
    %p70 = por %p68, %p69
    %p71 = scmp.ne.s32.totalorder %s59, %s60
    %p72 = scmp.eq.s32.totalorder %s15, 1
    %p73 = por %p71, %p72
    %p75 = scmp.ne.s32.totalorder %s60, %s74
    %p76 = scmp.eq.s32.totalorder %s15, 0
    %p77 = por %p75, %p76
    %s79 = sadd.s32 %s78, 1
    %p82 = scmp.eq.s32.totalorder %s9, 1
    %p83 = scmp.ne.s32.totalorder %s78, %s80
    %p84 = scmp.eq.s32.totalorder %s9, 0
    %p85 = por %p83, %p84
    %p86 = scmp.ne.s32.totalorder %s78, %s80
    %p87 = scmp.eq.s32.totalorder %s14, 1
    %p88 = por %p86, %p87
    %p89 = scmp.ne.s32.totalorder %s80, %s81
    %p90 = scmp.eq.s32.totalorder %s14, 0
    %p91 = por %p89, %p90
    %p92 = scmp.ne.s32.totalorder %s80, %s81
    %p93 = scmp.eq.s32.totalorder %s15, 1
    %p94 = por %p92, %p93
    %p96 = scmp.ne.s32.totalorder %s81, %s95
    %p97 = scmp.eq.s32.totalorder %s15, 0
    %p98 = por %p96, %p97
    %s99 = ssub.s32 %s16, %s28
    %s100 = ssub.s32 %s17, %s24
    %s101 = sor.u32 %s99, %s100
    %p102 = scmp.eq.s32.totalorder %s101, 0
    %s104 = sadd.s32 %s103, 1
    %s105 = scalar_select %p102, %s103, %s104
    %p108 = pneg %p102
    %p109 = scmp.eq.s32.totalorder %s9, 1
    %p110 = por %p108, %p109
    %p111 = scmp.ne.s32.totalorder %s103, %s106
    %p112 = scmp.eq.s32.totalorder %s9, 0
    %p113 = por %p111, %p112
    %p114 = scmp.ne.s32.totalorder %s103, %s106
    %p115 = scmp.eq.s32.totalorder %s14, 1
    %p116 = por %p114, %p115
    %p117 = scmp.ne.s32.totalorder %s106, %s107
    %p118 = scmp.eq.s32.totalorder %s14, 0
    %p119 = por %p117, %p118
    %p120 = scmp.ne.s32.totalorder %s106, %s107
    %p121 = scmp.eq.s32.totalorder %s15, 1
    %p122 = por %p120, %p121
    %p124 = scmp.ne.s32.totalorder %s107, %s123
    %p125 = scmp.eq.s32.totalorder %s15, 0
    %p126 = por %p124, %p125
    %p127 = scmp.le.s32.totalorder 1, %s9
    %p128 = scmp.lt.s32.totalorder %s9, 3
    %p129 = pnand %p127, %p128
    %p130 = pneg %p129
    // Predicated region
    $region9: #{unet_up3_forward.9} parent=5 // pred_check
      _
    $region10: #{unet_up3_forward.9} parent=5 // pred_check_branch
      %132 = sbr.rel (%p129) target = $region12
    $region11: #{unet_up3_forward.9} parent=5 // pred_region
      %s133 = ssub.s32 %s9, 1
      // Predicated region
      $region13: #{unet_up3_forward.9} parent=11 // pred_check
        %p134 = pneg %p70
      $region14: #{unet_up3_forward.9} parent=11 // pred_check_branch
        %136 = sbr.rel (%p134) target = $region16
      $region15: #{unet_up3_forward.9} parent=11 // pred_region
        _
      $region16: #{unet_up3_forward.9} parent=11 // pred_fallthru
        _
      // Predicated region
      $region17: #{unet_up3_forward.9} parent=11 // pred_check
        %p137 = pneg %p91
      $region18: #{unet_up3_forward.9} parent=11 // pred_check_branch
        %139 = sbr.rel (%p137) target = $region20
      $region19: #{unet_up3_forward.9} parent=11 // pred_region
        _
      $region20: #{unet_up3_forward.9} parent=11 // pred_fallthru
        _
    $region12: #{unet_up3_forward.9} parent=5 // pred_fallthru
      _
    %p140 = scmp.lt.s32.totalorder %s9, 2
    // Predicated region
    $region21: #{unet_up3_forward.9} parent=5 // pred_check
      %p141 = pneg %p140
    $region22: #{unet_up3_forward.9} parent=5 // pred_check_branch
      %143 = sbr.rel (%p141) target = $region24
    $region23: #{unet_up3_forward.9} parent=5 // pred_region
      // Predicated region
      $region25: #{unet_up3_forward.9} parent=23 // pred_check
        %p144 = pneg %p43
      $region26: #{unet_up3_forward.9} parent=23 // pred_check_branch
        %146 = sbr.rel (%p144) target = $region28
      $region27: #{unet_up3_forward.9} parent=23 // pred_region
        %s147 = sadd.s32 %s16, %s17
        %s148 = smul.u32 8, %s147
        %p149 = scmp.lt.s32.totalorder %s148, 15
        %s150 = scalar_select %p149, %s148, 15
        %s151 = smul.addr %s150, 2
        %s152 = scalar_lea.vmem %s0, %s151
        %s153 = sadd.s32 %s16, %s17
        %s154 = smul.u32 8, %s153
      $region28: #{unet_up3_forward.9} parent=23 // pred_fallthru
        _
    $region24: #{unet_up3_forward.9} parent=5 // pred_fallthru
      _
    %p155 = scmp.le.s32.totalorder 1, %s9
    %p156 = scmp.lt.s32.totalorder %s9, 3
    %p157 = pnand %p155, %p156
    %p158 = pneg %p157
    // Predicated region
    $region29: #{unet_up3_forward.9} parent=5 // pred_check
      _
    $region30: #{unet_up3_forward.9} parent=5 // pred_check_branch
      %160 = sbr.rel (%p157) target = $region32
    $region31: #{unet_up3_forward.9} parent=5 // pred_region
      %s161 = ssub.s32 %s9, 1
      %s162 = sadd.s32 %s18, %s19
      %s163 = smul.u32 8, %s162
      %p164 = scmp.lt.s32.totalorder %s163, 15
      %s165 = scalar_select %p164, %s163, 15
      %s166 = smul.addr %s165, 2
      %s167 = scalar_lea.vmem %s0, %s166
      %p168 = pneg %p49
      %p169 = pneg %p46
      %p170 = pneg %p70
      %p171 = pneg %p67
      %p172 = pneg %p91
      %p173 = pneg %p88
      %p174 = pneg %p119
      %p175 = pneg %p116
      %s176 = smul.u32 8, %s19
      %p177 = scmp.lt.s32.totalorder %s18, 1
      %s178 = scalar_select %p177, %s18, 1
      %p179 = scmp.lt.s32.totalorder %s176, 7
      %s180 = scalar_select %p179, %s176, 7
      %s181 = smul.addr %s178, 8
      %s182 = sadd.s32 %s180, %s181
      %s183 = smul.addr %s182, 4
      %s184 = scalar_lea.vmem %s3, %s183
      %s185 = sadd.s32 %s18, %s19
      %s186 = smul.u32 8, %s185
      %p187 = scmp.lt.s32.totalorder %s186, 15
      %s188 = scalar_select %p187, %s186, 15
      %s189 = smul.addr %s188, 2
      %s190 = scalar_lea.vmem %s0, %s189
      %s191 = sadd.s32 %s18, %s19
      %s192 = smul.u32 8, %s191
      %s193 = smul.u32 8, %s19
      %p194 = scmp.lt.s32.totalorder %s18, 1
      %s195 = scalar_select %p194, %s18, 1
      %p196 = scmp.lt.s32.totalorder %s193, 7
      %s197 = scalar_select %p196, %s193, 7
      %s198 = smul.addr %s195, 8
      %s199 = sadd.s32 %s197, %s198
      %s200 = smul.addr %s199, 4
      %s201 = scalar_lea.vmem %s3, %s200
      %s202 = smul.u32 8, %s19
      %v203 = vld [vmem:[%s190] sm:$0xff]
      %v204 = vld [vmem:[%s190 + $0x8] sm:$0xff]
      %v205 = vunpack.c.l.bf16 %v203
      %v206 = vunpack.c.h.bf16 %v203
      %v207 = vunpack.c.l.bf16 %v204
      %v208 = vunpack.c.h.bf16 %v204
      %v209 = vld [vmem:[%s1] sm:$0xf]
      %211 = vset.pattern.permute.xlu0 0
      %212 = vperm.xlu0 %211, %v209
      %v213 = vpop.permute.xlu0 %212
      %v215 = vunpack.c.l.s4 839922192
      %v216 = vunpack.c.0.s8 %v215
      %v217 = vlaneseq
      %v218 = vshrl.u32 %v217, 7
      %v219 = vsub.s32 %v216, %v218
      %v220 = vrot.slane %v213, %v219
      %v222 = vmul.f32 %v205, %v220
      %v223 = vmul.f32 %v206, %v220
      %v224 = vmul.f32 %v207, %v220
      %v225 = vmul.f32 %v208, %v220
      %v226 = vld [vmem:[%s2] sm:$0xf]
      %228 = vset.pattern.permute.xlu0 0
      %229 = vperm.xlu0 %228, %v226
      %v230 = vpop.permute.xlu0 %229
      %v232 = vunpack.c.l.s4 839922192
      %v233 = vunpack.c.0.s8 %v232
      %v234 = vlaneseq
      %v235 = vshrl.u32 %v234, 7
      %v236 = vsub.s32 %v233, %v235
      %v237 = vrot.slane %v230, %v236
      %v239 = vadd.f32 %v222, %v237
      %v240 = vadd.f32 %v223, %v237
      %v241 = vadd.f32 %v224, %v237
      %v242 = vadd.f32 %v225, %v237
      %v243 = vmax.f32 %v239, 0.0
      %v244 = vmax.f32 %v240, 0.0
      %v245 = vmax.f32 %v241, 0.0
      %v246 = vmax.f32 %v242, 0.0
      %247 = vst [vmem:[%s201] sm:$0xff] %v243
      %248 = vst [vmem:[%s201 + $0x8] sm:$0xff] %v244
      %249 = vst [vmem:[%s201 + $0x10] sm:$0xff] %v245
      %250 = vst [vmem:[%s201 + $0x18] sm:$0xff] %v246
      %s251 = smul.u32 8, %s19
      %p252 = scmp.lt.s32.totalorder %s18, 1
      %s253 = scalar_select %p252, %s18, 1
      %p254 = scmp.lt.s32.totalorder %s251, 7
      %s255 = scalar_select %p254, %s251, 7
      %s256 = smul.addr %s253, 8
      %s257 = sadd.s32 %s255, %s256
      %s258 = smul.addr %s257, 4
      %s259 = scalar_lea.vmem %s3, %s258
      // Predicated region
      $region33: #{unet_up3_forward.9} parent=31 // pred_check
        %p260 = pneg %p116
      $region34: #{unet_up3_forward.9} parent=31 // pred_check_branch
        %262 = sbr.rel (%p260) target = $region36
      $region35: #{unet_up3_forward.9} parent=31 // pred_region
        %s263 = smul.u32 8, %s19
      $region36: #{unet_up3_forward.9} parent=31 // pred_fallthru
        _
    $region32: #{unet_up3_forward.9} parent=5 // pred_fallthru
      _
    %p264 = scmp.le.s32.totalorder 2, %s9
    // Predicated region
    $region37: #{unet_up3_forward.9} parent=5 // pred_check
      %p265 = pneg %p264
    $region38: #{unet_up3_forward.9} parent=5 // pred_check_branch
      %267 = sbr.rel (%p265) target = $region40
    $region39: #{unet_up3_forward.9} parent=5 // pred_region
      %s268 = ssub.s32 %s9, 2
      // Predicated region
      $region41: #{unet_up3_forward.9} parent=39 // pred_check
        %p269 = pneg %p122
      $region42: #{unet_up3_forward.9} parent=39 // pred_check_branch
        %271 = sbr.rel (%p269) target = $region44
      $region43: #{unet_up3_forward.9} parent=39 // pred_region
        %s272 = smul.u32 8, %s21
        %p273 = scmp.lt.s32.totalorder %s20, 1
        %s274 = scalar_select %p273, %s20, 1
        %p275 = scmp.lt.s32.totalorder %s272, 7
        %s276 = scalar_select %p275, %s272, 7
        %s277 = smul.addr %s274, 8
        %s278 = sadd.s32 %s276, %s277
        %s279 = smul.addr %s278, 4
        %s280 = scalar_lea.vmem %s3, %s279
      $region44: #{unet_up3_forward.9} parent=39 // pred_fallthru
        _
    $region40: #{unet_up3_forward.9} parent=5 // pred_fallthru
      _
  $region6: #{unet_up3_forward.9} parent=0 // loop_footer
    %s13 = sadd.s32 1, %s9
  $region7: #{unet_up3_forward.9} parent=0 // loop_footer_branch
    %8 = sbr.rel target = $region3
  $region8: #{unet_up3_forward.9} parent=0 // loop_exit
    _

</llo_original>
